<compile_context>
chip_gen: v6e
topology: v6e:2x2x1
jax: 0.10.0
libtpu: 0.0.40
codegen_flags: <defaults>
</compile_context>

<pallas_src>
import jax
import jax.numpy as jnp
from jax.experimental import pallas as pl
from jax.experimental.pallas import tpu as pltpu


CPAD = 128   # lane-dense channel padding (feedback: biggest single lever)


class Config:
    # Small shapes consistent with the module (original: 128 / 256 / 250 / 2).
    max_seq_len = 16
    embed_size = 32
    kernel_num = 32
    output_size = 2
    dropout_p = 0.5


# v_all row indices (per-channel vectors, each zero-padded to 128 lanes)
V_REGION_B = 0
V_TOP = 1        # rows 1..6  : scale1, shift1, b1, scale2, shift2, b2
V_RES = 7        # rows 7..12 : scale1, shift1, b1, scale2, shift2, b2
V_ROWS = 16      # padded to a sublane multiple

# w_all leading indices (each entry is a (3, 128, 128) conv weight)
W_REGION = 0
W_TOP1, W_TOP2 = 1, 2
W_RES1, W_RES2 = 3, 4


def _pool_len(L):
    # ConstantPad1d((0,1),0) + MaxPool1d(kernel_size=3, stride=2)
    return (L - 2) // 2 + 1


def _final_len(L0):
    L = L0
    while L > 2:
        L = _pool_len(L)
    return L


# ------------------------------- fused kernel -------------------------------

def dpcnn_fused_kernel(x_ref, w_ref, v_ref, o_ref, buf):
    """Whole DPCNN forward for one batch element (everything stays in VMEM).

    x_ref: (Lin, 128)  embedded tokens, channels zero-padded to 128.
    w_ref: (5, 3, 128, 128) conv weights [region, top1, top2, res1, res2].
    v_ref: (16, 128)   per-channel vectors (biases / folded-BN scale & shift).
    o_ref: (L_final, 128) output.
    buf  : (Lin, 128)  VMEM scratch: zero-padded activation buffer.
    """
    C = CPAD
    Lin = x_ref.shape[0]
    L0 = Lin - 2
    zero_row = jnp.zeros((1, C), jnp.float32)

    def conv3(L, wi):
        # Conv1d(k=3, padding=1): three shifted MXU matmuls over buf rows
        # [0, L+2); rows 0 and L+1 hold the zero padding.
        acc = jnp.dot(buf[0:L, :], w_ref[wi, 0], preferred_element_type=jnp.float32)
        acc = acc + jnp.dot(buf[1:L + 1, :], w_ref[wi, 1],
                            preferred_element_type=jnp.float32)
        acc = acc + jnp.dot(buf[2:L + 2, :], w_ref[wi, 2],
                            preferred_element_type=jnp.float32)
        return acc

    def double_conv(g, L, vbase, wi1, wi2):
        # BN->ReLU->Conv(k3,p1)->BN->ReLU->Conv(k3,p1) on an (L, C) value.
        # Only the two pad rows are (re)zeroed; interior rows are overwritten.
        buf[L + 1:L + 2, :] = zero_row
        buf[1:L + 1, :] = jnp.maximum(
            g * v_ref[vbase:vbase + 1, :] + v_ref[vbase + 1:vbase + 2, :], 0.0)
        y1 = conv3(L, wi1) + v_ref[vbase + 2:vbase + 3, :]
        buf[1:L + 1, :] = jnp.maximum(
            y1 * v_ref[vbase + 3:vbase + 4, :] + v_ref[vbase + 4:vbase + 5, :], 0.0)
        return conv3(L, wi2) + v_ref[vbase + 5:vbase + 6, :]

    # Left pad row stays zero for every stage.
    buf[0:1, :] = zero_row

    # region_embedding: Conv1d(E->K, k=3, no padding) + ReLU (+ Dropout=identity).
    h = jnp.dot(x_ref[0:L0, :], w_ref[W_REGION, 0], preferred_element_type=jnp.float32)
    h = h + jnp.dot(x_ref[1:L0 + 1, :], w_ref[W_REGION, 1],
                    preferred_element_type=jnp.float32)
    h = h + jnp.dot(x_ref[2:L0 + 2, :], w_ref[W_REGION, 2],
                    preferred_element_type=jnp.float32)
    h = jnp.maximum(h + v_ref[V_REGION_B:V_REGION_B + 1, :], 0.0)
    # TODO(synk): nn.Dropout(p) is stochastic in train mode; modeled as identity.

    # Top-level equal_width_conv (no residual add in DPCNN.forward).
    h = double_conv(h, L0, V_TOP, W_TOP1, W_TOP2)

    # Static resnet pyramid: `while x.size(2) > 2: x = resnet_block(x)`
    # (the module reuses one shared ResnetBlock -> shared "res" params).
    L = L0
    while L > 2:
        Lout = _pool_len(L)
        # ConstantPad1d((0,1),0) + MaxPool1d(k=3,s=2), vectorized via stride-2
        # sublane reads; buf row L+1 supplies the right zero-pad element.
        buf[1:L + 1, :] = h
        buf[L + 1:L + 2, :] = zero_row
        pooled = jnp.maximum(
            jnp.maximum(buf[pl.ds(1, Lout, stride=2)],
                        buf[pl.ds(2, Lout, stride=2)]),
            buf[pl.ds(3, Lout, stride=2)])
        h = pooled + double_conv(pooled, Lout, V_RES, W_RES1, W_RES2)
        L = Lout

    o_ref[...] = h


# ------------------------------- wrapper -------------------------------------

def dpcnn_pallas_call(x_pad, w_all, v_all):
    B, Lin, C = x_pad.shape
    L_final = _final_len(Lin - 2)
    return pl.pallas_call(
        dpcnn_fused_kernel,
        out_shape=jax.ShapeDtypeStruct((B, L_final, C), jnp.float32),
        grid=(B,),
        in_specs=[
            pl.BlockSpec((None, Lin, C), lambda b: (b, 0, 0)),
            pl.BlockSpec(w_all.shape, lambda b: (0, 0, 0, 0)),
            pl.BlockSpec(v_all.shape, lambda b: (0, 0)),
        ],
        out_specs=pl.BlockSpec((None, L_final, C), lambda b: (b, 0, 0)),
        scratch_shapes=[pltpu.VMEM((Lin, C), jnp.float32)],
        compiler_params=pltpu.CompilerParams(dimension_semantics=("parallel",)),
    )(x_pad, w_all, v_all)


def _pack_kernel_params(params):
    """Zero-pad channels to 128 lanes and stack weights into two operands."""
    def pad_w(w):   # (3, Cin, Cout) -> (3, CPAD, CPAD)
        return jnp.pad(w, ((0, 0), (0, CPAD - w.shape[1]), (0, CPAD - w.shape[2])))

    def pad_v(v):   # (1, K) -> (CPAD,)
        return jnp.pad(v[0], (0, CPAD - v.shape[-1]))

    top, res = params["top"], params["res"]
    w_all = jnp.stack([pad_w(params["region_w"]),
                       pad_w(top["w1"]), pad_w(top["w2"]),
                       pad_w(res["w1"]), pad_w(res["w2"])])
    rows = [pad_v(params["region_b"]),
            pad_v(top["scale1"]), pad_v(top["shift1"]), pad_v(top["b1"]),
            pad_v(top["scale2"]), pad_v(top["shift2"]), pad_v(top["b2"]),
            pad_v(res["scale1"]), pad_v(res["shift1"]), pad_v(res["b1"]),
            pad_v(res["scale2"]), pad_v(res["shift2"]), pad_v(res["b2"])]
    while len(rows) < V_ROWS:
        rows.append(jnp.zeros((CPAD,), jnp.float32))
    v_all = jnp.stack(rows)
    return w_all, v_all


# ----------------------------- params / forward ------------------------------

def make_conv_block_params(key, K):
    ks = jax.random.split(key, 6)
    eps = 1e-5
    gamma1 = jax.random.uniform(ks[0], (1, K), jnp.float32, 0.8, 1.2)
    beta1 = 0.1 * jax.random.normal(ks[1], (1, K), jnp.float32)
    gamma2 = jax.random.uniform(ks[2], (1, K), jnp.float32, 0.8, 1.2)
    beta2 = 0.1 * jax.random.normal(ks[3], (1, K), jnp.float32)
    # BatchNorm1d folded with init running stats (mean=0, var=1): inference mode.
    scale1 = gamma1 / jnp.sqrt(1.0 + eps)
    scale2 = gamma2 / jnp.sqrt(1.0 + eps)
    std = 1.0 / jnp.sqrt(3.0 * K)
    # Conv1d weights stored as (kW, C_in, C_out) (PyTorch stores (C_out, C_in, kW)).
    w1 = std * jax.random.normal(ks[4], (3, K, K), jnp.float32)
    w2 = std * jax.random.normal(ks[5], (3, K, K), jnp.float32)
    b1 = jnp.zeros((1, K), jnp.float32)
    b2 = jnp.zeros((1, K), jnp.float32)
    return dict(scale1=scale1, shift1=beta1, w1=w1, b1=b1,
                scale2=scale2, shift2=beta2, w2=w2, b2=b2)


def init_params(key, vocab_size, cfg):
    E, K = cfg.embed_size, cfg.kernel_num
    ks = jax.random.split(key, 6)
    emb = 0.1 * jax.random.normal(ks[0], (vocab_size, E), jnp.float32)
    region_w = (1.0 / jnp.sqrt(3.0 * E)) * jax.random.normal(ks[1], (3, E, K),
                                                             jnp.float32)
    region_b = 0.01 * jax.random.normal(ks[2], (1, K), jnp.float32)
    top = make_conv_block_params(ks[3], K)
    res = make_conv_block_params(ks[4], K)
    # self.fc exists in __init__ but is never used in forward(); kept for fidelity.
    fc_w = (1.0 / jnp.sqrt(K)) * jax.random.normal(ks[5], (K, cfg.output_size),
                                                   jnp.float32)
    fc_b = jnp.zeros((cfg.output_size,), jnp.float32)
    return dict(embedding=emb, region_w=region_w, region_b=region_b,
                top=top, res=res, fc_w=fc_w, fc_b=fc_b)


def dpcnn_forward(tokens, params):
    emb = params["embedding"]                         # (V, E)
    E = emb.shape[1]
    K = params["region_b"].shape[-1]
    # Embedding gather (glue): (B, L) int32 -> (B, L, E); pad channels to 128.
    x = emb[tokens]
    x = jnp.pad(x, ((0, 0), (0, 0), (0, CPAD - E)))   # (B, L, 128)
    w_all, v_all = _pack_kernel_params(params)
    out = dpcnn_pallas_call(x, w_all, v_all)          # (B, L_final, 128)
    out = out[:, :, :K]                               # drop lane padding
    # Match PyTorch: tensor is (B, K, L_final) then .squeeze().
    return jnp.squeeze(jnp.transpose(out, (0, 2, 1)))


if __name__ == "__main__":
    cfg = Config()
    vocab_size = 100
    B = 2
    key = jax.random.PRNGKey(0)
    pkey, tkey = jax.random.split(key)
    params = init_params(pkey, vocab_size, cfg)
    tokens = jax.random.randint(tkey, (B, cfg.max_seq_len), 0, vocab_size,
                                dtype=jnp.int32)
    fwd = jax.jit(dpcnn_forward)
    out = jax.block_until_ready(fwd(tokens, params))
    assert out.shape == (B, cfg.kernel_num), out.shape
    assert out.dtype == jnp.float32
    print("KERNEL_OK")
</pallas_src>

<mosaic_0001>
module attributes {stable_mosaic.version = 11 : i64} {
  func.func @dpcnn_fused_kernel(%arg0: i32, %arg1: memref<1x16x128xf32, #tpu.memory_space<vmem>>, %arg2: memref<5x3x128x128xf32, #tpu.memory_space<vmem>>, %arg3: memref<16x128xf32, #tpu.memory_space<vmem>>, %arg4: memref<1x1x128xf32, #tpu.memory_space<vmem>>, %arg5: memref<16x128xf32, #tpu.memory_space<vmem>>) attributes {dimension_semantics = [#tpu.dimension_semantics<parallel>], iteration_bounds = array<i64: 2>, scalar_prefetch = 0 : i64, scratch_operands = 1 : i64, tpu.core_type = #tpu.core_type<tc>, window_params = [{transform_indices = @transform_0, window_bounds = array<i64: 1, 16, 128>}, {pipeline_mode = #tpu.pipeline_mode<synchronous>, transform_indices = @transform_1, window_bounds = array<i64: 5, 3, 128, 128>}, {pipeline_mode = #tpu.pipeline_mode<synchronous>, transform_indices = @transform_2, window_bounds = array<i64: 16, 128>}, {transform_indices = @transform_3, window_bounds = array<i64: 1, 1, 128>}]} {
    %cst = arith.constant 0.000000e+00 : f32
    %0 = vector.broadcast %cst : f32 to vector<1x128xf32>
    %c0 = arith.constant 0 : index
    %c0_0 = arith.constant 0 : index
    %1 = vector.load %arg5[%c0, %c0_0] : memref<16x128xf32, #tpu.memory_space<vmem>>, vector<1x128xf32>
    tpu.vector_store %arg5[%c0, %c0_0], %0 {strides = array<i32>} : memref<16x128xf32, #tpu.memory_space<vmem>>, vector<1x128xf32>,
    %c0_1 = arith.constant 0 : index
    %c0_2 = arith.constant 0 : index
    %c0_3 = arith.constant 0 : index
    %2 = vector.load %arg1[%c0_1, %c0_2, %c0_3] : memref<1x16x128xf32, #tpu.memory_space<vmem>>, vector<1x14x128xf32>
    %3 = vector.shape_cast %2 : vector<1x14x128xf32> to vector<14x128xf32>
    %c0_4 = arith.constant 0 : index
    %c0_5 = arith.constant 0 : index
    %c0_6 = arith.constant 0 : index
    %c0_7 = arith.constant 0 : index
    %4 = vector.load %arg2[%c0_4, %c0_5, %c0_6, %c0_7] : memref<5x3x128x128xf32, #tpu.memory_space<vmem>>, vector<1x1x128x128xf32>
    %5 = vector.shape_cast %4 : vector<1x1x128x128xf32> to vector<128x128xf32>
    %cst_8 = arith.constant dense<0.000000e+00> : vector<14x128xf32>
    %6 = tpu.matmul %3, %5, %cst_8 {dimension_numbers = #tpu.dot_dimension_numbers<[1], [0], [0], [1], [0, 0, 1, 1], [], []>} : vector<14x128xf32>, vector<128x128xf32>, vector<14x128xf32> -> vector<14x128xf32>
    %c0_9 = arith.constant 0 : index
    %c1 = arith.constant 1 : index
    %c0_10 = arith.constant 0 : index
    %7 = vector.load %arg1[%c0_9, %c1, %c0_10] : memref<1x16x128xf32, #tpu.memory_space<vmem>>, vector<1x14x128xf32>
    %8 = vector.shape_cast %7 : vector<1x14x128xf32> to vector<14x128xf32>
    %c0_11 = arith.constant 0 : index
    %c1_12 = arith.constant 1 : index
    %c0_13 = arith.constant 0 : index
    %c0_14 = arith.constant 0 : index
    %9 = vector.load %arg2[%c0_11, %c1_12, %c0_13, %c0_14] : memref<5x3x128x128xf32, #tpu.memory_space<vmem>>, vector<1x1x128x128xf32>
    %10 = vector.shape_cast %9 : vector<1x1x128x128xf32> to vector<128x128xf32>
    %cst_15 = arith.constant dense<0.000000e+00> : vector<14x128xf32>
    %11 = tpu.matmul %8, %10, %cst_15 {dimension_numbers = #tpu.dot_dimension_numbers<[1], [0], [0], [1], [0, 0, 1, 1], [], []>} : vector<14x128xf32>, vector<128x128xf32>, vector<14x128xf32> -> vector<14x128xf32>
    %12 = arith.addf %6, %11 : vector<14x128xf32>
    %c0_16 = arith.constant 0 : index
    %c2 = arith.constant 2 : index
    %c0_17 = arith.constant 0 : index
    %13 = vector.load %arg1[%c0_16, %c2, %c0_17] : memref<1x16x128xf32, #tpu.memory_space<vmem>>, vector<1x14x128xf32>
    %14 = vector.shape_cast %13 : vector<1x14x128xf32> to vector<14x128xf32>
    %c0_18 = arith.constant 0 : index
    %c2_19 = arith.constant 2 : index
    %c0_20 = arith.constant 0 : index
    %c0_21 = arith.constant 0 : index
    %15 = vector.load %arg2[%c0_18, %c2_19, %c0_20, %c0_21] : memref<5x3x128x128xf32, #tpu.memory_space<vmem>>, vector<1x1x128x128xf32>
    %16 = vector.shape_cast %15 : vector<1x1x128x128xf32> to vector<128x128xf32>
    %cst_22 = arith.constant dense<0.000000e+00> : vector<14x128xf32>
    %17 = tpu.matmul %14, %16, %cst_22 {dimension_numbers = #tpu.dot_dimension_numbers<[1], [0], [0], [1], [0, 0, 1, 1], [], []>} : vector<14x128xf32>, vector<128x128xf32>, vector<14x128xf32> -> vector<14x128xf32>
    %18 = arith.addf %12, %17 : vector<14x128xf32>
    %c0_23 = arith.constant 0 : index
    %c0_24 = arith.constant 0 : index
    %19 = vector.load %arg3[%c0_23, %c0_24] : memref<16x128xf32, #tpu.memory_space<vmem>>, vector<1x128xf32>
    %20 = vector.broadcast %19 : vector<1x128xf32> to vector<14x128xf32>
    %21 = arith.addf %18, %20 : vector<14x128xf32>
    %cst_25 = arith.constant 0.000000e+00 : f32
    %22 = vector.broadcast %cst_25 : f32 to vector<14x128xf32>
    %23 = arith.maximumf %21, %22 : vector<14x128xf32>
    %c15 = arith.constant 15 : index
    %c0_26 = arith.constant 0 : index
    %24 = vector.load %arg5[%c15, %c0_26] : memref<16x128xf32, #tpu.memory_space<vmem>>, vector<1x128xf32>
    tpu.vector_store %arg5[%c15, %c0_26], %0 {strides = array<i32>} : memref<16x128xf32, #tpu.memory_space<vmem>>, vector<1x128xf32>,
    %c1_27 = arith.constant 1 : index
    %c0_28 = arith.constant 0 : index
    %25 = vector.load %arg3[%c1_27, %c0_28] : memref<16x128xf32, #tpu.memory_space<vmem>>, vector<1x128xf32>
    %26 = vector.broadcast %25 : vector<1x128xf32> to vector<14x128xf32>
    %27 = arith.mulf %23, %26 : vector<14x128xf32>
    %c2_29 = arith.constant 2 : index
    %c0_30 = arith.constant 0 : index
    %28 = vector.load %arg3[%c2_29, %c0_30] : memref<16x128xf32, #tpu.memory_space<vmem>>, vector<1x128xf32>
    %29 = vector.broadcast %28 : vector<1x128xf32> to vector<14x128xf32>
    %30 = arith.addf %27, %29 : vector<14x128xf32>
    %cst_31 = arith.constant 0.000000e+00 : f32
    %31 = vector.broadcast %cst_31 : f32 to vector<14x128xf32>
    %32 = arith.maximumf %30, %31 : vector<14x128xf32>
    %c1_32 = arith.constant 1 : index
    %c0_33 = arith.constant 0 : index
    %33 = vector.load %arg5[%c1_32, %c0_33] : memref<16x128xf32, #tpu.memory_space<vmem>>, vector<14x128xf32>
    tpu.vector_store %arg5[%c1_32, %c0_33], %32 {strides = array<i32>} : memref<16x128xf32, #tpu.memory_space<vmem>>, vector<14x128xf32>,
    %c0_34 = arith.constant 0 : index
    %c0_35 = arith.constant 0 : index
    %34 = vector.load %arg5[%c0_34, %c0_35] : memref<16x128xf32, #tpu.memory_space<vmem>>, vector<14x128xf32>
    %c1_36 = arith.constant 1 : index
    %c0_37 = arith.constant 0 : index
    %c0_38 = arith.constant 0 : index
    %c0_39 = arith.constant 0 : index
    %35 = vector.load %arg2[%c1_36, %c0_37, %c0_38, %c0_39] : memref<5x3x128x128xf32, #tpu.memory_space<vmem>>, vector<1x1x128x128xf32>
    %36 = vector.shape_cast %35 : vector<1x1x128x128xf32> to vector<128x128xf32>
    %cst_40 = arith.constant dense<0.000000e+00> : vector<14x128xf32>
    %37 = tpu.matmul %34, %36, %cst_40 {dimension_numbers = #tpu.dot_dimension_numbers<[1], [0], [0], [1], [0, 0, 1, 1], [], []>} : vector<14x128xf32>, vector<128x128xf32>, vector<14x128xf32> -> vector<14x128xf32>
    %c1_41 = arith.constant 1 : index
    %c0_42 = arith.constant 0 : index
    %38 = vector.load %arg5[%c1_41, %c0_42] : memref<16x128xf32, #tpu.memory_space<vmem>>, vector<14x128xf32>
    %c1_43 = arith.constant 1 : index
    %c1_44 = arith.constant 1 : index
    %c0_45 = arith.constant 0 : index
    %c0_46 = arith.constant 0 : index
    %39 = vector.load %arg2[%c1_43, %c1_44, %c0_45, %c0_46] : memref<5x3x128x128xf32, #tpu.memory_space<vmem>>, vector<1x1x128x128xf32>
    %40 = vector.shape_cast %39 : vector<1x1x128x128xf32> to vector<128x128xf32>
    %cst_47 = arith.constant dense<0.000000e+00> : vector<14x128xf32>
    %41 = tpu.matmul %38, %40, %cst_47 {dimension_numbers = #tpu.dot_dimension_numbers<[1], [0], [0], [1], [0, 0, 1, 1], [], []>} : vector<14x128xf32>, vector<128x128xf32>, vector<14x128xf32> -> vector<14x128xf32>
    %42 = arith.addf %37, %41 : vector<14x128xf32>
    %c2_48 = arith.constant 2 : index
    %c0_49 = arith.constant 0 : index
    %43 = vector.load %arg5[%c2_48, %c0_49] : memref<16x128xf32, #tpu.memory_space<vmem>>, vector<14x128xf32>
    %c1_50 = arith.constant 1 : index
    %c2_51 = arith.constant 2 : index
    %c0_52 = arith.constant 0 : index
    %c0_53 = arith.constant 0 : index
    %44 = vector.load %arg2[%c1_50, %c2_51, %c0_52, %c0_53] : memref<5x3x128x128xf32, #tpu.memory_space<vmem>>, vector<1x1x128x128xf32>
    %45 = vector.shape_cast %44 : vector<1x1x128x128xf32> to vector<128x128xf32>
    %cst_54 = arith.constant dense<0.000000e+00> : vector<14x128xf32>
    %46 = tpu.matmul %43, %45, %cst_54 {dimension_numbers = #tpu.dot_dimension_numbers<[1], [0], [0], [1], [0, 0, 1, 1], [], []>} : vector<14x128xf32>, vector<128x128xf32>, vector<14x128xf32> -> vector<14x128xf32>
    %47 = arith.addf %42, %46 : vector<14x128xf32>
    %c3 = arith.constant 3 : index
    %c0_55 = arith.constant 0 : index
    %48 = vector.load %arg3[%c3, %c0_55] : memref<16x128xf32, #tpu.memory_space<vmem>>, vector<1x128xf32>
    %49 = vector.broadcast %48 : vector<1x128xf32> to vector<14x128xf32>
    %50 = arith.addf %47, %49 : vector<14x128xf32>
    %c4 = arith.constant 4 : index
    %c0_56 = arith.constant 0 : index
    %51 = vector.load %arg3[%c4, %c0_56] : memref<16x128xf32, #tpu.memory_space<vmem>>, vector<1x128xf32>
    %52 = vector.broadcast %51 : vector<1x128xf32> to vector<14x128xf32>
    %53 = arith.mulf %50, %52 : vector<14x128xf32>
    %c5 = arith.constant 5 : index
    %c0_57 = arith.constant 0 : index
    %54 = vector.load %arg3[%c5, %c0_57] : memref<16x128xf32, #tpu.memory_space<vmem>>, vector<1x128xf32>
    %55 = vector.broadcast %54 : vector<1x128xf32> to vector<14x128xf32>
    %56 = arith.addf %53, %55 : vector<14x128xf32>
    %cst_58 = arith.constant 0.000000e+00 : f32
    %57 = vector.broadcast %cst_58 : f32 to vector<14x128xf32>
    %58 = arith.maximumf %56, %57 : vector<14x128xf32>
    %c1_59 = arith.constant 1 : index
    %c0_60 = arith.constant 0 : index
    %59 = vector.load %arg5[%c1_59, %c0_60] : memref<16x128xf32, #tpu.memory_space<vmem>>, vector<14x128xf32>
    tpu.vector_store %arg5[%c1_59, %c0_60], %58 {strides = array<i32>} : memref<16x128xf32, #tpu.memory_space<vmem>>, vector<14x128xf32>,
    %c0_61 = arith.constant 0 : index
    %c0_62 = arith.constant 0 : index
    %60 = vector.load %arg5[%c0_61, %c0_62] : memref<16x128xf32, #tpu.memory_space<vmem>>, vector<14x128xf32>
    %c2_63 = arith.constant 2 : index
    %c0_64 = arith.constant 0 : index
    %c0_65 = arith.constant 0 : index
    %c0_66 = arith.constant 0 : index
    %61 = vector.load %arg2[%c2_63, %c0_64, %c0_65, %c0_66] : memref<5x3x128x128xf32, #tpu.memory_space<vmem>>, vector<1x1x128x128xf32>
    %62 = vector.shape_cast %61 : vector<1x1x128x128xf32> to vector<128x128xf32>
    %cst_67 = arith.constant dense<0.000000e+00> : vector<14x128xf32>
    %63 = tpu.matmul %60, %62, %cst_67 {dimension_numbers = #tpu.dot_dimension_numbers<[1], [0], [0], [1], [0, 0, 1, 1], [], []>} : vector<14x128xf32>, vector<128x128xf32>, vector<14x128xf32> -> vector<14x128xf32>
    %c1_68 = arith.constant 1 : index
    %c0_69 = arith.constant 0 : index
    %64 = vector.load %arg5[%c1_68, %c0_69] : memref<16x128xf32, #tpu.memory_space<vmem>>, vector<14x128xf32>
    %c2_70 = arith.constant 2 : index
    %c1_71 = arith.constant 1 : index
    %c0_72 = arith.constant 0 : index
    %c0_73 = arith.constant 0 : index
    %65 = vector.load %arg2[%c2_70, %c1_71, %c0_72, %c0_73] : memref<5x3x128x128xf32, #tpu.memory_space<vmem>>, vector<1x1x128x128xf32>
    %66 = vector.shape_cast %65 : vector<1x1x128x128xf32> to vector<128x128xf32>
    %cst_74 = arith.constant dense<0.000000e+00> : vector<14x128xf32>
    %67 = tpu.matmul %64, %66, %cst_74 {dimension_numbers = #tpu.dot_dimension_numbers<[1], [0], [0], [1], [0, 0, 1, 1], [], []>} : vector<14x128xf32>, vector<128x128xf32>, vector<14x128xf32> -> vector<14x128xf32>
    %68 = arith.addf %63, %67 : vector<14x128xf32>
    %c2_75 = arith.constant 2 : index
    %c0_76 = arith.constant 0 : index
    %69 = vector.load %arg5[%c2_75, %c0_76] : memref<16x128xf32, #tpu.memory_space<vmem>>, vector<14x128xf32>
    %c2_77 = arith.constant 2 : index
    %c2_78 = arith.constant 2 : index
    %c0_79 = arith.constant 0 : index
    %c0_80 = arith.constant 0 : index
    %70 = vector.load %arg2[%c2_77, %c2_78, %c0_79, %c0_80] : memref<5x3x128x128xf32, #tpu.memory_space<vmem>>, vector<1x1x128x128xf32>
    %71 = vector.shape_cast %70 : vector<1x1x128x128xf32> to vector<128x128xf32>
    %cst_81 = arith.constant dense<0.000000e+00> : vector<14x128xf32>
    %72 = tpu.matmul %69, %71, %cst_81 {dimension_numbers = #tpu.dot_dimension_numbers<[1], [0], [0], [1], [0, 0, 1, 1], [], []>} : vector<14x128xf32>, vector<128x128xf32>, vector<14x128xf32> -> vector<14x128xf32>
    %73 = arith.addf %68, %72 : vector<14x128xf32>
    %c6 = arith.constant 6 : index
    %c0_82 = arith.constant 0 : index
    %74 = vector.load %arg3[%c6, %c0_82] : memref<16x128xf32, #tpu.memory_space<vmem>>, vector<1x128xf32>
    %75 = vector.broadcast %74 : vector<1x128xf32> to vector<14x128xf32>
    %76 = arith.addf %73, %75 : vector<14x128xf32>
    %c1_83 = arith.constant 1 : index
    %c0_84 = arith.constant 0 : index
    %77 = vector.load %arg5[%c1_83, %c0_84] : memref<16x128xf32, #tpu.memory_space<vmem>>, vector<14x128xf32>
    tpu.vector_store %arg5[%c1_83, %c0_84], %76 {strides = array<i32>} : memref<16x128xf32, #tpu.memory_space<vmem>>, vector<14x128xf32>,
    %c15_85 = arith.constant 15 : index
    %c0_86 = arith.constant 0 : index
    %78 = vector.load %arg5[%c15_85, %c0_86] : memref<16x128xf32, #tpu.memory_space<vmem>>, vector<1x128xf32>
    tpu.vector_store %arg5[%c15_85, %c0_86], %0 {strides = array<i32>} : memref<16x128xf32, #tpu.memory_space<vmem>>, vector<1x128xf32>,
    %c1_87 = arith.constant 1 : index
    %c0_88 = arith.constant 0 : index
    %79 = tpu.strided_load %arg5[%c1_87, %c0_88] {strides = array<i32: 2, 1>} : memref<16x128xf32, #tpu.memory_space<vmem>>, vector<7x128xf32>
    %c2_89 = arith.constant 2 : index
    %c0_90 = arith.constant 0 : index
    %80 = tpu.strided_load %arg5[%c2_89, %c0_90] {strides = array<i32: 2, 1>} : memref<16x128xf32, #tpu.memory_space<vmem>>, vector<7x128xf32>
    %81 = arith.maximumf %79, %80 : vector<7x128xf32>
    %c3_91 = arith.constant 3 : index
    %c0_92 = arith.constant 0 : index
    %82 = tpu.strided_load %arg5[%c3_91, %c0_92] {strides = array<i32: 2, 1>} : memref<16x128xf32, #tpu.memory_space<vmem>>, vector<7x128xf32>
    %83 = arith.maximumf %81, %82 : vector<7x128xf32>
    %c8 = arith.constant 8 : index
    %c0_93 = arith.constant 0 : index
    %84 = vector.load %arg5[%c8, %c0_93] : memref<16x128xf32, #tpu.memory_space<vmem>>, vector<1x128xf32>
    tpu.vector_store %arg5[%c8, %c0_93], %0 {strides = array<i32>} : memref<16x128xf32, #tpu.memory_space<vmem>>, vector<1x128xf32>,
    %c7 = arith.constant 7 : index
    %c0_94 = arith.constant 0 : index
    %85 = vector.load %arg3[%c7, %c0_94] : memref<16x128xf32, #tpu.memory_space<vmem>>, vector<1x128xf32>
    %86 = vector.broadcast %85 : vector<1x128xf32> to vector<7x128xf32>
    %87 = arith.mulf %83, %86 : vector<7x128xf32>
    %c8_95 = arith.constant 8 : index
    %c0_96 = arith.constant 0 : index
    %88 = vector.load %arg3[%c8_95, %c0_96] : memref<16x128xf32, #tpu.memory_space<vmem>>, vector<1x128xf32>
    %89 = vector.broadcast %88 : vector<1x128xf32> to vector<7x128xf32>
    %90 = arith.addf %87, %89 : vector<7x128xf32>
    %cst_97 = arith.constant 0.000000e+00 : f32
    %91 = vector.broadcast %cst_97 : f32 to vector<7x128xf32>
    %92 = arith.maximumf %90, %91 : vector<7x128xf32>
    %c1_98 = arith.constant 1 : index
    %c0_99 = arith.constant 0 : index
    %93 = vector.load %arg5[%c1_98, %c0_99] : memref<16x128xf32, #tpu.memory_space<vmem>>, vector<7x128xf32>
    tpu.vector_store %arg5[%c1_98, %c0_99], %92 {strides = array<i32>} : memref<16x128xf32, #tpu.memory_space<vmem>>, vector<7x128xf32>,
    %c0_100 = arith.constant 0 : index
    %c0_101 = arith.constant 0 : index
    %94 = vector.load %arg5[%c0_100, %c0_101] : memref<16x128xf32, #tpu.memory_space<vmem>>, vector<7x128xf32>
    %c3_102 = arith.constant 3 : index
    %c0_103 = arith.constant 0 : index
    %c0_104 = arith.constant 0 : index
    %c0_105 = arith.constant 0 : index
    %95 = vector.load %arg2[%c3_102, %c0_103, %c0_104, %c0_105] : memref<5x3x128x128xf32, #tpu.memory_space<vmem>>, vector<1x1x128x128xf32>
    %96 = vector.shape_cast %95 : vector<1x1x128x128xf32> to vector<128x128xf32>
    %cst_106 = arith.constant dense<0.000000e+00> : vector<7x128xf32>
    %97 = tpu.matmul %94, %96, %cst_106 {dimension_numbers = #tpu.dot_dimension_numbers<[1], [0], [0], [1], [0, 0, 1, 1], [], []>} : vector<7x128xf32>, vector<128x128xf32>, vector<7x128xf32> -> vector<7x128xf32>
    %c1_107 = arith.constant 1 : index
    %c0_108 = arith.constant 0 : index
    %98 = vector.load %arg5[%c1_107, %c0_108] : memref<16x128xf32, #tpu.memory_space<vmem>>, vector<7x128xf32>
    %c3_109 = arith.constant 3 : index
    %c1_110 = arith.constant 1 : index
    %c0_111 = arith.constant 0 : index
    %c0_112 = arith.constant 0 : index
    %99 = vector.load %arg2[%c3_109, %c1_110, %c0_111, %c0_112] : memref<5x3x128x128xf32, #tpu.memory_space<vmem>>, vector<1x1x128x128xf32>
    %100 = vector.shape_cast %99 : vector<1x1x128x128xf32> to vector<128x128xf32>
    %cst_113 = arith.constant dense<0.000000e+00> : vector<7x128xf32>
    %101 = tpu.matmul %98, %100, %cst_113 {dimension_numbers = #tpu.dot_dimension_numbers<[1], [0], [0], [1], [0, 0, 1, 1], [], []>} : vector<7x128xf32>, vector<128x128xf32>, vector<7x128xf32> -> vector<7x128xf32>
    %102 = arith.addf %97, %101 : vector<7x128xf32>
    %c2_114 = arith.constant 2 : index
    %c0_115 = arith.constant 0 : index
    %103 = vector.load %arg5[%c2_114, %c0_115] : memref<16x128xf32, #tpu.memory_space<vmem>>, vector<7x128xf32>
    %c3_116 = arith.constant 3 : index
    %c2_117 = arith.constant 2 : index
    %c0_118 = arith.constant 0 : index
    %c0_119 = arith.constant 0 : index
    %104 = vector.load %arg2[%c3_116, %c2_117, %c0_118, %c0_119] : memref<5x3x128x128xf32, #tpu.memory_space<vmem>>, vector<1x1x128x128xf32>
    %105 = vector.shape_cast %104 : vector<1x1x128x128xf32> to vector<128x128xf32>
    %cst_120 = arith.constant dense<0.000000e+00> : vector<7x128xf32>
    %106 = tpu.matmul %103, %105, %cst_120 {dimension_numbers = #tpu.dot_dimension_numbers<[1], [0], [0], [1], [0, 0, 1, 1], [], []>} : vector<7x128xf32>, vector<128x128xf32>, vector<7x128xf32> -> vector<7x128xf32>
    %107 = arith.addf %102, %106 : vector<7x128xf32>
    %c9 = arith.constant 9 : index
    %c0_121 = arith.constant 0 : index
    %108 = vector.load %arg3[%c9, %c0_121] : memref<16x128xf32, #tpu.memory_space<vmem>>, vector<1x128xf32>
    %109 = vector.broadcast %108 : vector<1x128xf32> to vector<7x128xf32>
    %110 = arith.addf %107, %109 : vector<7x128xf32>
    %c10 = arith.constant 10 : index
    %c0_122 = arith.constant 0 : index
    %111 = vector.load %arg3[%c10, %c0_122] : memref<16x128xf32, #tpu.memory_space<vmem>>, vector<1x128xf32>
    %112 = vector.broadcast %111 : vector<1x128xf32> to vector<7x128xf32>
    %113 = arith.mulf %110, %112 : vector<7x128xf32>
    %c11 = arith.constant 11 : index
    %c0_123 = arith.constant 0 : index
    %114 = vector.load %arg3[%c11, %c0_123] : memref<16x128xf32, #tpu.memory_space<vmem>>, vector<1x128xf32>
    %115 = vector.broadcast %114 : vector<1x128xf32> to vector<7x128xf32>
    %116 = arith.addf %113, %115 : vector<7x128xf32>
    %cst_124 = arith.constant 0.000000e+00 : f32
    %117 = vector.broadcast %cst_124 : f32 to vector<7x128xf32>
    %118 = arith.maximumf %116, %117 : vector<7x128xf32>
    %c1_125 = arith.constant 1 : index
    %c0_126 = arith.constant 0 : index
    %119 = vector.load %arg5[%c1_125, %c0_126] : memref<16x128xf32, #tpu.memory_space<vmem>>, vector<7x128xf32>
    tpu.vector_store %arg5[%c1_125, %c0_126], %118 {strides = array<i32>} : memref<16x128xf32, #tpu.memory_space<vmem>>, vector<7x128xf32>,
    %c0_127 = arith.constant 0 : index
    %c0_128 = arith.constant 0 : index
    %120 = vector.load %arg5[%c0_127, %c0_128] : memref<16x128xf32, #tpu.memory_space<vmem>>, vector<7x128xf32>
    %c4_129 = arith.constant 4 : index
    %c0_130 = arith.constant 0 : index
    %c0_131 = arith.constant 0 : index
    %c0_132 = arith.constant 0 : index
    %121 = vector.load %arg2[%c4_129, %c0_130, %c0_131, %c0_132] : memref<5x3x128x128xf32, #tpu.memory_space<vmem>>, vector<1x1x128x128xf32>
    %122 = vector.shape_cast %121 : vector<1x1x128x128xf32> to vector<128x128xf32>
    %cst_133 = arith.constant dense<0.000000e+00> : vector<7x128xf32>
    %123 = tpu.matmul %120, %122, %cst_133 {dimension_numbers = #tpu.dot_dimension_numbers<[1], [0], [0], [1], [0, 0, 1, 1], [], []>} : vector<7x128xf32>, vector<128x128xf32>, vector<7x128xf32> -> vector<7x128xf32>
    %c1_134 = arith.constant 1 : index
    %c0_135 = arith.constant 0 : index
    %124 = vector.load %arg5[%c1_134, %c0_135] : memref<16x128xf32, #tpu.memory_space<vmem>>, vector<7x128xf32>
    %c4_136 = arith.constant 4 : index
    %c1_137 = arith.constant 1 : index
    %c0_138 = arith.constant 0 : index
    %c0_139 = arith.constant 0 : index
    %125 = vector.load %arg2[%c4_136, %c1_137, %c0_138, %c0_139] : memref<5x3x128x128xf32, #tpu.memory_space<vmem>>, vector<1x1x128x128xf32>
    %126 = vector.shape_cast %125 : vector<1x1x128x128xf32> to vector<128x128xf32>
    %cst_140 = arith.constant dense<0.000000e+00> : vector<7x128xf32>
    %127 = tpu.matmul %124, %126, %cst_140 {dimension_numbers = #tpu.dot_dimension_numbers<[1], [0], [0], [1], [0, 0, 1, 1], [], []>} : vector<7x128xf32>, vector<128x128xf32>, vector<7x128xf32> -> vector<7x128xf32>
    %128 = arith.addf %123, %127 : vector<7x128xf32>
    %c2_141 = arith.constant 2 : index
    %c0_142 = arith.constant 0 : index
    %129 = vector.load %arg5[%c2_141, %c0_142] : memref<16x128xf32, #tpu.memory_space<vmem>>, vector<7x128xf32>
    %c4_143 = arith.constant 4 : index
    %c2_144 = arith.constant 2 : index
    %c0_145 = arith.constant 0 : index
    %c0_146 = arith.constant 0 : index
    %130 = vector.load %arg2[%c4_143, %c2_144, %c0_145, %c0_146] : memref<5x3x128x128xf32, #tpu.memory_space<vmem>>, vector<1x1x128x128xf32>
    %131 = vector.shape_cast %130 : vector<1x1x128x128xf32> to vector<128x128xf32>
    %cst_147 = arith.constant dense<0.000000e+00> : vector<7x128xf32>
    %132 = tpu.matmul %129, %131, %cst_147 {dimension_numbers = #tpu.dot_dimension_numbers<[1], [0], [0], [1], [0, 0, 1, 1], [], []>} : vector<7x128xf32>, vector<128x128xf32>, vector<7x128xf32> -> vector<7x128xf32>
    %133 = arith.addf %128, %132 : vector<7x128xf32>
    %c12 = arith.constant 12 : index
    %c0_148 = arith.constant 0 : index
    %134 = vector.load %arg3[%c12, %c0_148] : memref<16x128xf32, #tpu.memory_space<vmem>>, vector<1x128xf32>
    %135 = vector.broadcast %134 : vector<1x128xf32> to vector<7x128xf32>
    %136 = arith.addf %133, %135 : vector<7x128xf32>
    %137 = arith.addf %83, %136 : vector<7x128xf32>
    %c1_149 = arith.constant 1 : index
    %c0_150 = arith.constant 0 : index
    %138 = vector.load %arg5[%c1_149, %c0_150] : memref<16x128xf32, #tpu.memory_space<vmem>>, vector<7x128xf32>
    tpu.vector_store %arg5[%c1_149, %c0_150], %137 {strides = array<i32>} : memref<16x128xf32, #tpu.memory_space<vmem>>, vector<7x128xf32>,
    %c8_151 = arith.constant 8 : index
    %c0_152 = arith.constant 0 : index
    %139 = vector.load %arg5[%c8_151, %c0_152] : memref<16x128xf32, #tpu.memory_space<vmem>>, vector<1x128xf32>
    tpu.vector_store %arg5[%c8_151, %c0_152], %0 {strides = array<i32>} : memref<16x128xf32, #tpu.memory_space<vmem>>, vector<1x128xf32>,
    %c1_153 = arith.constant 1 : index
    %c0_154 = arith.constant 0 : index
    %140 = tpu.strided_load %arg5[%c1_153, %c0_154] {strides = array<i32: 2, 1>} : memref<16x128xf32, #tpu.memory_space<vmem>>, vector<3x128xf32>
    %c2_155 = arith.constant 2 : index
    %c0_156 = arith.constant 0 : index
    %141 = tpu.strided_load %arg5[%c2_155, %c0_156] {strides = array<i32: 2, 1>} : memref<16x128xf32, #tpu.memory_space<vmem>>, vector<3x128xf32>
    %142 = arith.maximumf %140, %141 : vector<3x128xf32>
    %c3_157 = arith.constant 3 : index
    %c0_158 = arith.constant 0 : index
    %143 = tpu.strided_load %arg5[%c3_157, %c0_158] {strides = array<i32: 2, 1>} : memref<16x128xf32, #tpu.memory_space<vmem>>, vector<3x128xf32>
    %144 = arith.maximumf %142, %143 : vector<3x128xf32>
    %c4_159 = arith.constant 4 : index
    %c0_160 = arith.constant 0 : index
    %145 = vector.load %arg5[%c4_159, %c0_160] : memref<16x128xf32, #tpu.memory_space<vmem>>, vector<1x128xf32>
    tpu.vector_store %arg5[%c4_159, %c0_160], %0 {strides = array<i32>} : memref<16x128xf32, #tpu.memory_space<vmem>>, vector<1x128xf32>,
    %c7_161 = arith.constant 7 : index
    %c0_162 = arith.constant 0 : index
    %146 = vector.load %arg3[%c7_161, %c0_162] : memref<16x128xf32, #tpu.memory_space<vmem>>, vector<1x128xf32>
    %147 = vector.broadcast %146 : vector<1x128xf32> to vector<3x128xf32>
    %148 = arith.mulf %144, %147 : vector<3x128xf32>
    %c8_163 = arith.constant 8 : index
    %c0_164 = arith.constant 0 : index
    %149 = vector.load %arg3[%c8_163, %c0_164] : memref<16x128xf32, #tpu.memory_space<vmem>>, vector<1x128xf32>
    %150 = vector.broadcast %149 : vector<1x128xf32> to vector<3x128xf32>
    %151 = arith.addf %148, %150 : vector<3x128xf32>
    %cst_165 = arith.constant 0.000000e+00 : f32
    %152 = vector.broadcast %cst_165 : f32 to vector<3x128xf32>
    %153 = arith.maximumf %151, %152 : vector<3x128xf32>
    %c1_166 = arith.constant 1 : index
    %c0_167 = arith.constant 0 : index
    %154 = vector.load %arg5[%c1_166, %c0_167] : memref<16x128xf32, #tpu.memory_space<vmem>>, vector<3x128xf32>
    tpu.vector_store %arg5[%c1_166, %c0_167], %153 {strides = array<i32>} : memref<16x128xf32, #tpu.memory_space<vmem>>, vector<3x128xf32>,
    %c0_168 = arith.constant 0 : index
    %c0_169 = arith.constant 0 : index
    %155 = vector.load %arg5[%c0_168, %c0_169] : memref<16x128xf32, #tpu.memory_space<vmem>>, vector<3x128xf32>
    %c3_170 = arith.constant 3 : index
    %c0_171 = arith.constant 0 : index
    %c0_172 = arith.constant 0 : index
    %c0_173 = arith.constant 0 : index
    %156 = vector.load %arg2[%c3_170, %c0_171, %c0_172, %c0_173] : memref<5x3x128x128xf32, #tpu.memory_space<vmem>>, vector<1x1x128x128xf32>
    %157 = vector.shape_cast %156 : vector<1x1x128x128xf32> to vector<128x128xf32>
    %cst_174 = arith.constant dense<0.000000e+00> : vector<3x128xf32>
    %158 = tpu.matmul %155, %157, %cst_174 {dimension_numbers = #tpu.dot_dimension_numbers<[1], [0], [0], [1], [0, 0, 1, 1], [], []>} : vector<3x128xf32>, vector<128x128xf32>, vector<3x128xf32> -> vector<3x128xf32>
    %c1_175 = arith.constant 1 : index
    %c0_176 = arith.constant 0 : index
    %159 = vector.load %arg5[%c1_175, %c0_176] : memref<16x128xf32, #tpu.memory_space<vmem>>, vector<3x128xf32>
    %c3_177 = arith.constant 3 : index
    %c1_178 = arith.constant 1 : index
    %c0_179 = arith.constant 0 : index
    %c0_180 = arith.constant 0 : index
    %160 = vector.load %arg2[%c3_177, %c1_178, %c0_179, %c0_180] : memref<5x3x128x128xf32, #tpu.memory_space<vmem>>, vector<1x1x128x128xf32>
    %161 = vector.shape_cast %160 : vector<1x1x128x128xf32> to vector<128x128xf32>
    %cst_181 = arith.constant dense<0.000000e+00> : vector<3x128xf32>
    %162 = tpu.matmul %159, %161, %cst_181 {dimension_numbers = #tpu.dot_dimension_numbers<[1], [0], [0], [1], [0, 0, 1, 1], [], []>} : vector<3x128xf32>, vector<128x128xf32>, vector<3x128xf32> -> vector<3x128xf32>
    %163 = arith.addf %158, %162 : vector<3x128xf32>
    %c2_182 = arith.constant 2 : index
    %c0_183 = arith.constant 0 : index
    %164 = vector.load %arg5[%c2_182, %c0_183] : memref<16x128xf32, #tpu.memory_space<vmem>>, vector<3x128xf32>
    %c3_184 = arith.constant 3 : index
    %c2_185 = arith.constant 2 : index
    %c0_186 = arith.constant 0 : index
    %c0_187 = arith.constant 0 : index
    %165 = vector.load %arg2[%c3_184, %c2_185, %c0_186, %c0_187] : memref<5x3x128x128xf32, #tpu.memory_space<vmem>>, vector<1x1x128x128xf32>
    %166 = vector.shape_cast %165 : vector<1x1x128x128xf32> to vector<128x128xf32>
    %cst_188 = arith.constant dense<0.000000e+00> : vector<3x128xf32>
    %167 = tpu.matmul %164, %166, %cst_188 {dimension_numbers = #tpu.dot_dimension_numbers<[1], [0], [0], [1], [0, 0, 1, 1], [], []>} : vector<3x128xf32>, vector<128x128xf32>, vector<3x128xf32> -> vector<3x128xf32>
    %168 = arith.addf %163, %167 : vector<3x128xf32>
    %c9_189 = arith.constant 9 : index
    %c0_190 = arith.constant 0 : index
    %169 = vector.load %arg3[%c9_189, %c0_190] : memref<16x128xf32, #tpu.memory_space<vmem>>, vector<1x128xf32>
    %170 = vector.broadcast %169 : vector<1x128xf32> to vector<3x128xf32>
    %171 = arith.addf %168, %170 : vector<3x128xf32>
    %c10_191 = arith.constant 10 : index
    %c0_192 = arith.constant 0 : index
    %172 = vector.load %arg3[%c10_191, %c0_192] : memref<16x128xf32, #tpu.memory_space<vmem>>, vector<1x128xf32>
    %173 = vector.broadcast %172 : vector<1x128xf32> to vector<3x128xf32>
    %174 = arith.mulf %171, %173 : vector<3x128xf32>
    %c11_193 = arith.constant 11 : index
    %c0_194 = arith.constant 0 : index
    %175 = vector.load %arg3[%c11_193, %c0_194] : memref<16x128xf32, #tpu.memory_space<vmem>>, vector<1x128xf32>
    %176 = vector.broadcast %175 : vector<1x128xf32> to vector<3x128xf32>
    %177 = arith.addf %174, %176 : vector<3x128xf32>
    %cst_195 = arith.constant 0.000000e+00 : f32
    %178 = vector.broadcast %cst_195 : f32 to vector<3x128xf32>
    %179 = arith.maximumf %177, %178 : vector<3x128xf32>
    %c1_196 = arith.constant 1 : index
    %c0_197 = arith.constant 0 : index
    %180 = vector.load %arg5[%c1_196, %c0_197] : memref<16x128xf32, #tpu.memory_space<vmem>>, vector<3x128xf32>
    tpu.vector_store %arg5[%c1_196, %c0_197], %179 {strides = array<i32>} : memref<16x128xf32, #tpu.memory_space<vmem>>, vector<3x128xf32>,
    %c0_198 = arith.constant 0 : index
    %c0_199 = arith.constant 0 : index
    %181 = vector.load %arg5[%c0_198, %c0_199] : memref<16x128xf32, #tpu.memory_space<vmem>>, vector<3x128xf32>
    %c4_200 = arith.constant 4 : index
    %c0_201 = arith.constant 0 : index
    %c0_202 = arith.constant 0 : index
    %c0_203 = arith.constant 0 : index
    %182 = vector.load %arg2[%c4_200, %c0_201, %c0_202, %c0_203] : memref<5x3x128x128xf32, #tpu.memory_space<vmem>>, vector<1x1x128x128xf32>
    %183 = vector.shape_cast %182 : vector<1x1x128x128xf32> to vector<128x128xf32>
    %cst_204 = arith.constant dense<0.000000e+00> : vector<3x128xf32>
    %184 = tpu.matmul %181, %183, %cst_204 {dimension_numbers = #tpu.dot_dimension_numbers<[1], [0], [0], [1], [0, 0, 1, 1], [], []>} : vector<3x128xf32>, vector<128x128xf32>, vector<3x128xf32> -> vector<3x128xf32>
    %c1_205 = arith.constant 1 : index
    %c0_206 = arith.constant 0 : index
    %185 = vector.load %arg5[%c1_205, %c0_206] : memref<16x128xf32, #tpu.memory_space<vmem>>, vector<3x128xf32>
    %c4_207 = arith.constant 4 : index
    %c1_208 = arith.constant 1 : index
    %c0_209 = arith.constant 0 : index
    %c0_210 = arith.constant 0 : index
    %186 = vector.load %arg2[%c4_207, %c1_208, %c0_209, %c0_210] : memref<5x3x128x128xf32, #tpu.memory_space<vmem>>, vector<1x1x128x128xf32>
    %187 = vector.shape_cast %186 : vector<1x1x128x128xf32> to vector<128x128xf32>
    %cst_211 = arith.constant dense<0.000000e+00> : vector<3x128xf32>
    %188 = tpu.matmul %185, %187, %cst_211 {dimension_numbers = #tpu.dot_dimension_numbers<[1], [0], [0], [1], [0, 0, 1, 1], [], []>} : vector<3x128xf32>, vector<128x128xf32>, vector<3x128xf32> -> vector<3x128xf32>
    %189 = arith.addf %184, %188 : vector<3x128xf32>
    %c2_212 = arith.constant 2 : index
    %c0_213 = arith.constant 0 : index
    %190 = vector.load %arg5[%c2_212, %c0_213] : memref<16x128xf32, #tpu.memory_space<vmem>>, vector<3x128xf32>
    %c4_214 = arith.constant 4 : index
    %c2_215 = arith.constant 2 : index
    %c0_216 = arith.constant 0 : index
    %c0_217 = arith.constant 0 : index
    %191 = vector.load %arg2[%c4_214, %c2_215, %c0_216, %c0_217] : memref<5x3x128x128xf32, #tpu.memory_space<vmem>>, vector<1x1x128x128xf32>
    %192 = vector.shape_cast %191 : vector<1x1x128x128xf32> to vector<128x128xf32>
    %cst_218 = arith.constant dense<0.000000e+00> : vector<3x128xf32>
    %193 = tpu.matmul %190, %192, %cst_218 {dimension_numbers = #tpu.dot_dimension_numbers<[1], [0], [0], [1], [0, 0, 1, 1], [], []>} : vector<3x128xf32>, vector<128x128xf32>, vector<3x128xf32> -> vector<3x128xf32>
    %194 = arith.addf %189, %193 : vector<3x128xf32>
    %c12_219 = arith.constant 12 : index
    %c0_220 = arith.constant 0 : index
    %195 = vector.load %arg3[%c12_219, %c0_220] : memref<16x128xf32, #tpu.memory_space<vmem>>, vector<1x128xf32>
    %196 = vector.broadcast %195 : vector<1x128xf32> to vector<3x128xf32>
    %197 = arith.addf %194, %196 : vector<3x128xf32>
    %198 = arith.addf %144, %197 : vector<3x128xf32>
    %c1_221 = arith.constant 1 : index
    %c0_222 = arith.constant 0 : index
    %199 = vector.load %arg5[%c1_221, %c0_222] : memref<16x128xf32, #tpu.memory_space<vmem>>, vector<3x128xf32>
    tpu.vector_store %arg5[%c1_221, %c0_222], %198 {strides = array<i32>} : memref<16x128xf32, #tpu.memory_space<vmem>>, vector<3x128xf32>,
    %c4_223 = arith.constant 4 : index
    %c0_224 = arith.constant 0 : index
    %200 = vector.load %arg5[%c4_223, %c0_224] : memref<16x128xf32, #tpu.memory_space<vmem>>, vector<1x128xf32>
    tpu.vector_store %arg5[%c4_223, %c0_224], %0 {strides = array<i32>} : memref<16x128xf32, #tpu.memory_space<vmem>>, vector<1x128xf32>,
    %c1_225 = arith.constant 1 : index
    %c0_226 = arith.constant 0 : index
    %201 = tpu.strided_load %arg5[%c1_225, %c0_226] {strides = array<i32: 2, 1>} : memref<16x128xf32, #tpu.memory_space<vmem>>, vector<1x128xf32>
    %c2_227 = arith.constant 2 : index
    %c0_228 = arith.constant 0 : index
    %202 = tpu.strided_load %arg5[%c2_227, %c0_228] {strides = array<i32: 2, 1>} : memref<16x128xf32, #tpu.memory_space<vmem>>, vector<1x128xf32>
    %203 = arith.maximumf %201, %202 : vector<1x128xf32>
    %c3_229 = arith.constant 3 : index
    %c0_230 = arith.constant 0 : index
    %204 = tpu.strided_load %arg5[%c3_229, %c0_230] {strides = array<i32: 2, 1>} : memref<16x128xf32, #tpu.memory_space<vmem>>, vector<1x128xf32>
    %205 = arith.maximumf %203, %204 : vector<1x128xf32>
    %c2_231 = arith.constant 2 : index
    %c0_232 = arith.constant 0 : index
    %206 = vector.load %arg5[%c2_231, %c0_232] : memref<16x128xf32, #tpu.memory_space<vmem>>, vector<1x128xf32>
    tpu.vector_store %arg5[%c2_231, %c0_232], %0 {strides = array<i32>} : memref<16x128xf32, #tpu.memory_space<vmem>>, vector<1x128xf32>,
    %c7_233 = arith.constant 7 : index
    %c0_234 = arith.constant 0 : index
    %207 = vector.load %arg3[%c7_233, %c0_234] : memref<16x128xf32, #tpu.memory_space<vmem>>, vector<1x128xf32>
    %208 = arith.mulf %205, %207 : vector<1x128xf32>
    %c8_235 = arith.constant 8 : index
    %c0_236 = arith.constant 0 : index
    %209 = vector.load %arg3[%c8_235, %c0_236] : memref<16x128xf32, #tpu.memory_space<vmem>>, vector<1x128xf32>
    %210 = arith.addf %208, %209 : vector<1x128xf32>
    %cst_237 = arith.constant 0.000000e+00 : f32
    %211 = vector.broadcast %cst_237 : f32 to vector<1x128xf32>
    %212 = arith.maximumf %210, %211 : vector<1x128xf32>
    %c1_238 = arith.constant 1 : index
    %c0_239 = arith.constant 0 : index
    %213 = vector.load %arg5[%c1_238, %c0_239] : memref<16x128xf32, #tpu.memory_space<vmem>>, vector<1x128xf32>
    tpu.vector_store %arg5[%c1_238, %c0_239], %212 {strides = array<i32>} : memref<16x128xf32, #tpu.memory_space<vmem>>, vector<1x128xf32>,
    %c0_240 = arith.constant 0 : index
    %c0_241 = arith.constant 0 : index
    %214 = vector.load %arg5[%c0_240, %c0_241] : memref<16x128xf32, #tpu.memory_space<vmem>>, vector<1x128xf32>
    %c3_242 = arith.constant 3 : index
    %c0_243 = arith.constant 0 : index
    %c0_244 = arith.constant 0 : index
    %c0_245 = arith.constant 0 : index
    %215 = vector.load %arg2[%c3_242, %c0_243, %c0_244, %c0_245] : memref<5x3x128x128xf32, #tpu.memory_space<vmem>>, vector<1x1x128x128xf32>
    %216 = vector.shape_cast %215 : vector<1x1x128x128xf32> to vector<128x128xf32>
    %cst_246 = arith.constant dense<0.000000e+00> : vector<1x128xf32>
    %217 = tpu.matmul %214, %216, %cst_246 {dimension_numbers = #tpu.dot_dimension_numbers<[1], [0], [0], [1], [0, 0, 1, 1], [], []>} : vector<1x128xf32>, vector<128x128xf32>, vector<1x128xf32> -> vector<1x128xf32>
    %c1_247 = arith.constant 1 : index
    %c0_248 = arith.constant 0 : index
    %218 = vector.load %arg5[%c1_247, %c0_248] : memref<16x128xf32, #tpu.memory_space<vmem>>, vector<1x128xf32>
    %c3_249 = arith.constant 3 : index
    %c1_250 = arith.constant 1 : index
    %c0_251 = arith.constant 0 : index
    %c0_252 = arith.constant 0 : index
    %219 = vector.load %arg2[%c3_249, %c1_250, %c0_251, %c0_252] : memref<5x3x128x128xf32, #tpu.memory_space<vmem>>, vector<1x1x128x128xf32>
    %220 = vector.shape_cast %219 : vector<1x1x128x128xf32> to vector<128x128xf32>
    %cst_253 = arith.constant dense<0.000000e+00> : vector<1x128xf32>
    %221 = tpu.matmul %218, %220, %cst_253 {dimension_numbers = #tpu.dot_dimension_numbers<[1], [0], [0], [1], [0, 0, 1, 1], [], []>} : vector<1x128xf32>, vector<128x128xf32>, vector<1x128xf32> -> vector<1x128xf32>
    %222 = arith.addf %217, %221 : vector<1x128xf32>
    %c2_254 = arith.constant 2 : index
    %c0_255 = arith.constant 0 : index
    %223 = vector.load %arg5[%c2_254, %c0_255] : memref<16x128xf32, #tpu.memory_space<vmem>>, vector<1x128xf32>
    %c3_256 = arith.constant 3 : index
    %c2_257 = arith.constant 2 : index
    %c0_258 = arith.constant 0 : index
    %c0_259 = arith.constant 0 : index
    %224 = vector.load %arg2[%c3_256, %c2_257, %c0_258, %c0_259] : memref<5x3x128x128xf32, #tpu.memory_space<vmem>>, vector<1x1x128x128xf32>
    %225 = vector.shape_cast %224 : vector<1x1x128x128xf32> to vector<128x128xf32>
    %cst_260 = arith.constant dense<0.000000e+00> : vector<1x128xf32>
    %226 = tpu.matmul %223, %225, %cst_260 {dimension_numbers = #tpu.dot_dimension_numbers<[1], [0], [0], [1], [0, 0, 1, 1], [], []>} : vector<1x128xf32>, vector<128x128xf32>, vector<1x128xf32> -> vector<1x128xf32>
    %227 = arith.addf %222, %226 : vector<1x128xf32>
    %c9_261 = arith.constant 9 : index
    %c0_262 = arith.constant 0 : index
    %228 = vector.load %arg3[%c9_261, %c0_262] : memref<16x128xf32, #tpu.memory_space<vmem>>, vector<1x128xf32>
    %229 = arith.addf %227, %228 : vector<1x128xf32>
    %c10_263 = arith.constant 10 : index
    %c0_264 = arith.constant 0 : index
    %230 = vector.load %arg3[%c10_263, %c0_264] : memref<16x128xf32, #tpu.memory_space<vmem>>, vector<1x128xf32>
    %231 = arith.mulf %229, %230 : vector<1x128xf32>
    %c11_265 = arith.constant 11 : index
    %c0_266 = arith.constant 0 : index
    %232 = vector.load %arg3[%c11_265, %c0_266] : memref<16x128xf32, #tpu.memory_space<vmem>>, vector<1x128xf32>
    %233 = arith.addf %231, %232 : vector<1x128xf32>
    %cst_267 = arith.constant 0.000000e+00 : f32
    %234 = vector.broadcast %cst_267 : f32 to vector<1x128xf32>
    %235 = arith.maximumf %233, %234 : vector<1x128xf32>
    %c1_268 = arith.constant 1 : index
    %c0_269 = arith.constant 0 : index
    %236 = vector.load %arg5[%c1_268, %c0_269] : memref<16x128xf32, #tpu.memory_space<vmem>>, vector<1x128xf32>
    tpu.vector_store %arg5[%c1_268, %c0_269], %235 {strides = array<i32>} : memref<16x128xf32, #tpu.memory_space<vmem>>, vector<1x128xf32>,
    %c0_270 = arith.constant 0 : index
    %c0_271 = arith.constant 0 : index
    %237 = vector.load %arg5[%c0_270, %c0_271] : memref<16x128xf32, #tpu.memory_space<vmem>>, vector<1x128xf32>
    %c4_272 = arith.constant 4 : index
    %c0_273 = arith.constant 0 : index
    %c0_274 = arith.constant 0 : index
    %c0_275 = arith.constant 0 : index
    %238 = vector.load %arg2[%c4_272, %c0_273, %c0_274, %c0_275] : memref<5x3x128x128xf32, #tpu.memory_space<vmem>>, vector<1x1x128x128xf32>
    %239 = vector.shape_cast %238 : vector<1x1x128x128xf32> to vector<128x128xf32>
    %cst_276 = arith.constant dense<0.000000e+00> : vector<1x128xf32>
    %240 = tpu.matmul %237, %239, %cst_276 {dimension_numbers = #tpu.dot_dimension_numbers<[1], [0], [0], [1], [0, 0, 1, 1], [], []>} : vector<1x128xf32>, vector<128x128xf32>, vector<1x128xf32> -> vector<1x128xf32>
    %c1_277 = arith.constant 1 : index
    %c0_278 = arith.constant 0 : index
    %241 = vector.load %arg5[%c1_277, %c0_278] : memref<16x128xf32, #tpu.memory_space<vmem>>, vector<1x128xf32>
    %c4_279 = arith.constant 4 : index
    %c1_280 = arith.constant 1 : index
    %c0_281 = arith.constant 0 : index
    %c0_282 = arith.constant 0 : index
    %242 = vector.load %arg2[%c4_279, %c1_280, %c0_281, %c0_282] : memref<5x3x128x128xf32, #tpu.memory_space<vmem>>, vector<1x1x128x128xf32>
    %243 = vector.shape_cast %242 : vector<1x1x128x128xf32> to vector<128x128xf32>
    %cst_283 = arith.constant dense<0.000000e+00> : vector<1x128xf32>
    %244 = tpu.matmul %241, %243, %cst_283 {dimension_numbers = #tpu.dot_dimension_numbers<[1], [0], [0], [1], [0, 0, 1, 1], [], []>} : vector<1x128xf32>, vector<128x128xf32>, vector<1x128xf32> -> vector<1x128xf32>
    %245 = arith.addf %240, %244 : vector<1x128xf32>
    %c2_284 = arith.constant 2 : index
    %c0_285 = arith.constant 0 : index
    %246 = vector.load %arg5[%c2_284, %c0_285] : memref<16x128xf32, #tpu.memory_space<vmem>>, vector<1x128xf32>
    %c4_286 = arith.constant 4 : index
    %c2_287 = arith.constant 2 : index
    %c0_288 = arith.constant 0 : index
    %c0_289 = arith.constant 0 : index
    %247 = vector.load %arg2[%c4_286, %c2_287, %c0_288, %c0_289] : memref<5x3x128x128xf32, #tpu.memory_space<vmem>>, vector<1x1x128x128xf32>
    %248 = vector.shape_cast %247 : vector<1x1x128x128xf32> to vector<128x128xf32>
    %cst_290 = arith.constant dense<0.000000e+00> : vector<1x128xf32>
    %249 = tpu.matmul %246, %248, %cst_290 {dimension_numbers = #tpu.dot_dimension_numbers<[1], [0], [0], [1], [0, 0, 1, 1], [], []>} : vector<1x128xf32>, vector<128x128xf32>, vector<1x128xf32> -> vector<1x128xf32>
    %250 = arith.addf %245, %249 : vector<1x128xf32>
    %c12_291 = arith.constant 12 : index
    %c0_292 = arith.constant 0 : index
    %251 = vector.load %arg3[%c12_291, %c0_292] : memref<16x128xf32, #tpu.memory_space<vmem>>, vector<1x128xf32>
    %252 = arith.addf %250, %251 : vector<1x128xf32>
    %253 = arith.addf %205, %252 : vector<1x128xf32>
    %c0_293 = arith.constant 0 : index
    %c0_294 = arith.constant 0 : index
    %c0_295 = arith.constant 0 : index
    %254 = vector.load %arg4[%c0_293, %c0_294, %c0_295] : memref<1x1x128xf32, #tpu.memory_space<vmem>>, vector<1x1x128xf32>
    %255 = vector.shape_cast %254 : vector<1x1x128xf32> to vector<1x128xf32>
    %256 = vector.shape_cast %253 : vector<1x128xf32> to vector<1x1x128xf32>
    tpu.vector_store %arg4[%c0_293, %c0_294, %c0_295], %256 {strides = array<i32>} : memref<1x1x128xf32, #tpu.memory_space<vmem>>, vector<1x1x128xf32>,
    return
  }
  func.func @transform_0(%arg0: i32) -> (i32, i32, i32) {
    %c0_i32 = arith.constant 0 : i32
    %c0_i32_0 = arith.constant 0 : i32
    %c0_i32_1 = arith.constant 0 : i32
    return %arg0, %c0_i32, %c0_i32_0 : i32, i32, i32
  }
  func.func @transform_1(%arg0: i32) -> (i32, i32, i32, i32) {
    %c0_i32 = arith.constant 0 : i32
    %c0_i32_0 = arith.constant 0 : i32
    %c0_i32_1 = arith.constant 0 : i32
    %c0_i32_2 = arith.constant 0 : i32
    %c0_i32_3 = arith.constant 0 : i32
    return %c0_i32, %c0_i32_0, %c0_i32_1, %c0_i32_2 : i32, i32, i32, i32
  }
  func.func @transform_2(%arg0: i32) -> (i32, i32) {
    %c0_i32 = arith.constant 0 : i32
    %c0_i32_0 = arith.constant 0 : i32
    %c0_i32_1 = arith.constant 0 : i32
    return %c0_i32, %c0_i32_0 : i32, i32
  }
  func.func @transform_3(%arg0: i32) -> (i32, i32, i32) {
    %c0_i32 = arith.constant 0 : i32
    %c0_i32_0 = arith.constant 0 : i32
    %c0_i32_1 = arith.constant 0 : i32
    return %arg0, %c0_i32, %c0_i32_0 : i32, i32, i32
  }
}

</mosaic_0001>

<llo_original>
// kernel: dpcnn_forward.1
$region0: #{dpcnn_forward.1}
  #allocation0 [shape = 'u32[]', space=smem, size = 0x4, offset = 0x4, fixed_abs, tag = 'smem constant byte address 0x4 - core index']
  #allocation1 [shape = 'u32[144,128]{1,0:T(1,128)}', space=vmem, size = 0x12000, scoped, tag = 'internal scratch']
  #allocation2 [shape = 'f32[16,128]{1,0:T(8,128)}', space=vmem, size = 0x2000, scoped, tag = 'scratch operand']
  %s0 = inlined_call_operand.vmem [shape: f32[2,16,128], index: 0, kind: input, shape index: {}]
  %s1 = inlined_call_operand.vmem [shape: f32[5,3,128,128], index: 1, kind: input, shape index: {}]
  %s2 = inlined_call_operand.vmem [shape: f32[16,128], index: 2, kind: input, shape index: {}]
  %s3 = inlined_call_operand.hbm [shape: f32[2,1,128], index: 3, kind: output, shape index: {}]
  %s4 = sld [smem:[#allocation0]]
  $region45: #{dpcnn_forward.1} parent=0
    _
  %s6 = ssub.s32 1, %s4
  %s7 = scalar_select 0, %s6, %s4
  $region1: #{dpcnn_forward.1} parent=0
    #allocation3 [shape = 'u8[1024]{0}', space=vmem, size = 0x400, scoped, tag = 'output window, operand 0']
    #allocation4 [shape = 's32[2]{0}', space=sflag, size = 0x8, scoped, tag = 'scoped memory for dpcnn_forward.1']
    %8 = vsyncpa [#allocation4], 0
    %s9 = scalar_lea.sflag [#allocation4], 1
    %10 = vsyncpa %s9, 0
    loop: start=0, step=1, limit=4
    $region2: #{dpcnn_forward.1} parent=1 // loop_pre_header
      _
    $region3: #{dpcnn_forward.1} parent=1 // loop_header
      %s12 = sphi 0, %s16
      %p13 = scmp.ge.s32.totalorder %s12, 4
      %s22 = sphi 0, %s24
      %s25 = sphi 0, %s22
      %s26 = sphi 0, %s25
      %s42 = sphi 0, %s26
      %s46 = sphi 0, %s46
      %s48 = sphi 0, %s46
      %s49 = sphi 0, %s48
      %s63 = sphi 0, %s49
      %s67 = sphi 0, %s67
      %s69 = sphi 0, %s67
      %s70 = sphi 0, %s69
      %s84 = sphi 0, %s70
      %s90 = sphi 0, %s92
      %s93 = sphi 0, %s90
      %s94 = sphi 0, %s93
      %s110 = sphi 0, %s94
    $region4: #{dpcnn_forward.1} parent=1 // loop_header_branch
      %15 = sbr.rel (%p13) target = $region8
    $region5: #{dpcnn_forward.1} parent=1 // loop_body
      %s17 = ssub.s32 %s12, 1
      %s18 = ssub.s32 %s12, 2
      %s19 = sadd.s32 %s12, 1
      %s20 = ssub.s32 %s12, %s19
      %p21 = scmp.eq.s32.totalorder %s20, 0
      %s23 = sadd.s32 %s22, 1
      %s24 = scalar_select %p21, %s22, %s23
      %p27 = pneg %p21
      %p28 = scmp.eq.s32.totalorder %s12, 1
      %p29 = por %p27, %p28
      %p30 = scmp.ne.s32.totalorder %s22, %s25
      %p31 = scmp.eq.s32.totalorder %s12, 0
      %p32 = por %p30, %p31
      %p33 = scmp.ne.s32.totalorder %s22, %s25
      %p34 = scmp.eq.s32.totalorder %s17, 1
      %p35 = por %p33, %p34
      %p36 = scmp.ne.s32.totalorder %s25, %s26
      %p37 = scmp.eq.s32.totalorder %s17, 0
      %p38 = por %p36, %p37
      %p39 = scmp.ne.s32.totalorder %s25, %s26
      %p40 = scmp.eq.s32.totalorder %s18, 1
      %p41 = por %p39, %p40
      %p43 = scmp.ne.s32.totalorder %s26, %s42
      %p44 = scmp.eq.s32.totalorder %s18, 0
      %p45 = por %p43, %p44
      %s47 = sadd.s32 %s46, 1
      %p50 = scmp.eq.s32.totalorder %s12, 1
      %p51 = scmp.ne.s32.totalorder %s46, %s48
      %p52 = scmp.eq.s32.totalorder %s12, 0
      %p53 = por %p51, %p52
      %p54 = scmp.ne.s32.totalorder %s46, %s48
      %p55 = scmp.eq.s32.totalorder %s17, 1
      %p56 = por %p54, %p55
      %p57 = scmp.ne.s32.totalorder %s48, %s49
      %p58 = scmp.eq.s32.totalorder %s17, 0
      %p59 = por %p57, %p58
      %p60 = scmp.ne.s32.totalorder %s48, %s49
      %p61 = scmp.eq.s32.totalorder %s18, 1
      %p62 = por %p60, %p61
      %p64 = scmp.ne.s32.totalorder %s49, %s63
      %p65 = scmp.eq.s32.totalorder %s18, 0
      %p66 = por %p64, %p65
      %s68 = sadd.s32 %s67, 1
      %p71 = scmp.eq.s32.totalorder %s12, 1
      %p72 = scmp.ne.s32.totalorder %s67, %s69
      %p73 = scmp.eq.s32.totalorder %s12, 0
      %p74 = por %p72, %p73
      %p75 = scmp.ne.s32.totalorder %s67, %s69
      %p76 = scmp.eq.s32.totalorder %s17, 1
      %p77 = por %p75, %p76
      %p78 = scmp.ne.s32.totalorder %s69, %s70
      %p79 = scmp.eq.s32.totalorder %s17, 0
      %p80 = por %p78, %p79
      %p81 = scmp.ne.s32.totalorder %s69, %s70
      %p82 = scmp.eq.s32.totalorder %s18, 1
      %p83 = por %p81, %p82
      %p85 = scmp.ne.s32.totalorder %s70, %s84
      %p86 = scmp.eq.s32.totalorder %s18, 0
      %p87 = por %p85, %p86
      %s88 = ssub.s32 %s12, %s19
      %p89 = scmp.eq.s32.totalorder %s88, 0
      %s91 = sadd.s32 %s90, 1
      %s92 = scalar_select %p89, %s90, %s91
      %p95 = pneg %p89
      %p96 = scmp.eq.s32.totalorder %s12, 1
      %p97 = por %p95, %p96
      %p98 = scmp.ne.s32.totalorder %s90, %s93
      %p99 = scmp.eq.s32.totalorder %s12, 0
      %p100 = por %p98, %p99
      %p101 = scmp.ne.s32.totalorder %s90, %s93
      %p102 = scmp.eq.s32.totalorder %s17, 1
      %p103 = por %p101, %p102
      %p104 = scmp.ne.s32.totalorder %s93, %s94
      %p105 = scmp.eq.s32.totalorder %s17, 0
      %p106 = por %p104, %p105
      %p107 = scmp.ne.s32.totalorder %s93, %s94
      %p108 = scmp.eq.s32.totalorder %s18, 1
      %p109 = por %p107, %p108
      %p111 = scmp.ne.s32.totalorder %s94, %s110
      %p112 = scmp.eq.s32.totalorder %s18, 0
      %p113 = por %p111, %p112
      %p114 = scmp.le.s32.totalorder 1, %s12
      %p115 = scmp.lt.s32.totalorder %s12, 3
      %p116 = pnand %p114, %p115
      %p117 = pneg %p116
      // Predicated region
      $region9: #{dpcnn_forward.1} parent=5 // pred_check
        _
      $region10: #{dpcnn_forward.1} parent=5 // pred_check_branch
        %119 = sbr.rel (%p116) target = $region12
      $region11: #{dpcnn_forward.1} parent=5 // pred_region
        %s120 = ssub.s32 %s12, 1
        // Predicated region
        $region13: #{dpcnn_forward.1} parent=11 // pred_check
          %p121 = pneg %p59
        $region14: #{dpcnn_forward.1} parent=11 // pred_check_branch
          %123 = sbr.rel (%p121) target = $region16
        $region15: #{dpcnn_forward.1} parent=11 // pred_region
          _
        $region16: #{dpcnn_forward.1} parent=11 // pred_fallthru
          _
        // Predicated region
        $region17: #{dpcnn_forward.1} parent=11 // pred_check
          %p124 = pneg %p80
        $region18: #{dpcnn_forward.1} parent=11 // pred_check_branch
          %126 = sbr.rel (%p124) target = $region20
        $region19: #{dpcnn_forward.1} parent=11 // pred_region
          _
        $region20: #{dpcnn_forward.1} parent=11 // pred_fallthru
          _
      $region12: #{dpcnn_forward.1} parent=5 // pred_fallthru
        _
      %p127 = scmp.lt.s32.totalorder %s12, 2
      // Predicated region
      $region21: #{dpcnn_forward.1} parent=5 // pred_check
        %p128 = pneg %p127
      $region22: #{dpcnn_forward.1} parent=5 // pred_check_branch
        %130 = sbr.rel (%p128) target = $region24
      $region23: #{dpcnn_forward.1} parent=5 // pred_region
        // Predicated region
        $region25: #{dpcnn_forward.1} parent=23 // pred_check
          %p131 = pneg %p32
        $region26: #{dpcnn_forward.1} parent=23 // pred_check_branch
          %133 = sbr.rel (%p131) target = $region28
        $region27: #{dpcnn_forward.1} parent=23 // pred_region
          %p134 = scmp.lt.s32.totalorder %s12, 1
          %s135 = scalar_select %p134, %s12, 1
          %s136 = smul.addr %s135, 2
          %s137 = smul.addr %s136, 8
          %s138 = scalar_lea.vmem %s0, %s137
        $region28: #{dpcnn_forward.1} parent=23 // pred_fallthru
          _
      $region24: #{dpcnn_forward.1} parent=5 // pred_fallthru
        _
      %p139 = scmp.le.s32.totalorder 1, %s12
      %p140 = scmp.lt.s32.totalorder %s12, 3
      %p141 = pnand %p139, %p140
      %p142 = pneg %p141
      // Predicated region
      $region29: #{dpcnn_forward.1} parent=5 // pred_check
        _
      $region30: #{dpcnn_forward.1} parent=5 // pred_check_branch
        %144 = sbr.rel (%p141) target = $region32
      $region31: #{dpcnn_forward.1} parent=5 // pred_region
        %s145 = ssub.s32 %s12, 1
        %p146 = scmp.lt.s32.totalorder %s17, 1
        %s147 = scalar_select %p146, %s17, 1
        %s148 = smul.addr %s147, 2
        %s149 = smul.addr %s148, 8
        %s150 = scalar_lea.vmem %s0, %s149
        %p151 = pneg %p38
        %p152 = pneg %p35
        %p153 = pneg %p59
        %p154 = pneg %p56
        %p155 = pneg %p80
        %p156 = pneg %p77
        %p157 = pneg %p106
        %p158 = pneg %p103
        %s159 = sand.u32 %s93, 1
        %s160 = scalar_lea.sflag [#allocation4], %s159
        %s161 = sand.u32 %s93, 1
        %s162 = scalar_lea.vmem [#allocation3], %s161
        %p163 = scmp.lt.s32.totalorder %s17, 1
        %s164 = scalar_select %p163, %s17, 1
        %s165 = smul.addr %s164, 2
        %s166 = smul.addr %s165, 8
        %s167 = scalar_lea.vmem %s0, %s166
        %168 = vst [vmem:[#allocation2] sm:$0x1] 0.0
        %v169 = vld [vmem:[%s167] sm:$0xff]
        %v170 = vld [vmem:[%s167 + $0x8] sm:$0x3f]
        %v171 = vld [vmem:[%s1] sm:$0xff]
        %v172 = vld [vmem:[%s1 + $0x8] sm:$0xff]
        %v173 = vld [vmem:[%s1 + $0x10] sm:$0xff]
        %v174 = vld [vmem:[%s1 + $0x18] sm:$0xff]
        %v175 = vld [vmem:[%s1 + $0x20] sm:$0xff]
        %v176 = vld [vmem:[%s1 + $0x28] sm:$0xff]
        %v177 = vld [vmem:[%s1 + $0x30] sm:$0xff]
        %v178 = vld [vmem:[%s1 + $0x38] sm:$0xff]
        %v179 = vld [vmem:[%s1 + $0x40] sm:$0xff]
        %v180 = vld [vmem:[%s1 + $0x48] sm:$0xff]
        %v181 = vld [vmem:[%s1 + $0x50] sm:$0xff]
        %v182 = vld [vmem:[%s1 + $0x58] sm:$0xff]
        %v183 = vld [vmem:[%s1 + $0x60] sm:$0xff]
        %v184 = vld [vmem:[%s1 + $0x68] sm:$0xff]
        %v185 = vld [vmem:[%s1 + $0x70] sm:$0xff]
        %v186 = vld [vmem:[%s1 + $0x78] sm:$0xff]
        %v187 = vld [vmem:[%s167 + $0x1] sm:$0xff]
        %v188 = vld [vmem:[%s167 + $0x9] sm:$0x3f]
        %s189 = scalar_lea.vmem %s1, 128
        %v190 = vld [vmem:[%s189] sm:$0xff]
        %v191 = vld [vmem:[%s189 + $0x8] sm:$0xff]
        %v192 = vld [vmem:[%s189 + $0x10] sm:$0xff]
        %v193 = vld [vmem:[%s189 + $0x18] sm:$0xff]
        %v194 = vld [vmem:[%s189 + $0x20] sm:$0xff]
        %v195 = vld [vmem:[%s189 + $0x28] sm:$0xff]
        %v196 = vld [vmem:[%s189 + $0x30] sm:$0xff]
        %v197 = vld [vmem:[%s189 + $0x38] sm:$0xff]
        %v198 = vld [vmem:[%s189 + $0x40] sm:$0xff]
        %v199 = vld [vmem:[%s189 + $0x48] sm:$0xff]
        %v200 = vld [vmem:[%s189 + $0x50] sm:$0xff]
        %v201 = vld [vmem:[%s189 + $0x58] sm:$0xff]
        %v202 = vld [vmem:[%s189 + $0x60] sm:$0xff]
        %v203 = vld [vmem:[%s189 + $0x68] sm:$0xff]
        %v204 = vld [vmem:[%s189 + $0x70] sm:$0xff]
        %v205 = vld [vmem:[%s189 + $0x78] sm:$0xff]
        %206 = vmatprep.subr.mxu0 0.0
        %207 = vmatpush1.msra.mxu0 %v205
        %208 = vmatprep.subr.mxu0 0.0
        %209 = vmatpush1.msra.mxu0 %v204
        %210 = vmatprep.subr.mxu0 0.0
        %211 = vmatpush1.msra.mxu0 %v203
        %212 = vmatprep.subr.mxu0 0.0
        %213 = vmatpush1.msra.mxu0 %v202
        %214 = vmatprep.subr.mxu0 0.0
        %215 = vmatpush1.msra.mxu0 %v201
        %216 = vmatprep.subr.mxu0 0.0
        %217 = vmatpush1.msra.mxu0 %v200
        %218 = vmatprep.subr.mxu0 0.0
        %219 = vmatpush1.msra.mxu0 %v199
        %220 = vmatprep.subr.mxu0 0.0
        %221 = vmatpush1.msra.mxu0 %v198
        %222 = vmatprep.subr.mxu0 0.0
        %223 = vmatpush1.msra.mxu0 %v197
        %224 = vmatprep.subr.mxu0 0.0
        %225 = vmatpush1.msra.mxu0 %v196
        %226 = vmatprep.subr.mxu0 0.0
        %227 = vmatpush1.msra.mxu0 %v195
        %228 = vmatprep.subr.mxu0 0.0
        %229 = vmatpush1.msra.mxu0 %v194
        %230 = vmatprep.subr.mxu0 0.0
        %231 = vmatpush1.msra.mxu0 %v193
        %232 = vmatprep.subr.mxu0 0.0
        %233 = vmatpush1.msra.mxu0 %v192
        %234 = vmatprep.subr.mxu0 0.0
        %235 = vmatpush1.msra.mxu0 %v191
        %236 = vmatprep.subr.mxu0 0.0
        %237 = vmatpush1.msra.mxu0 %v190
        %238 = vmatprep.subr.mxu0 0.0
        %239 = vmatpush2.msra.mxu0 0.0
        %240 = vmatprep.subr.mxu0 0.0
        %241 = vmatpush2.msra.mxu0 0.0
        %242 = vmatprep.subr.mxu0 0.0
        %243 = vmatpush2.msra.mxu0 0.0
        %244 = vmatprep.subr.mxu0 0.0
        %245 = vmatpush2.msra.mxu0 0.0
        %246 = vmatprep.subr.mxu0 0.0
        %247 = vmatpush2.msra.mxu0 0.0
        %248 = vmatprep.subr.mxu0 0.0
        %249 = vmatpush2.msra.mxu0 0.0
        %250 = vmatprep.subr.mxu0 0.0
        %251 = vmatpush2.msra.mxu0 0.0
        %252 = vmatprep.subr.mxu0 0.0
        %253 = vmatpush2.msra.mxu0 0.0
        %254 = vmatprep.subr.mxu0 0.0
        %255 = vmatpush2.msra.mxu0 0.0
        %256 = vmatprep.subr.mxu0 0.0
        %257 = vmatpush2.msra.mxu0 0.0
        %258 = vmatprep.subr.mxu0 0.0
        %259 = vmatpush2.msra.mxu0 0.0
        %260 = vmatprep.subr.mxu0 0.0
        %261 = vmatpush2.msra.mxu0 0.0
        %262 = vmatprep.subr.mxu0 0.0
        %263 = vmatpush2.msra.mxu0 0.0
        %264 = vmatprep.subr.mxu0 0.0
        %265 = vmatpush2.msra.mxu0 0.0
        %266 = vmatprep.subr.mxu0 0.0
        %267 = vmatpush2.msra.mxu0 0.0
        %268 = vmatprep.subr.mxu0 0.0
        %269 = vmatpush2.msra.mxu0 0.0
        %270 = vmatprep.mubr.f32.mxu0 0.0
        %271 = vmatmul.mubr.f32.gmra.mxu0 %v187
        %v272 = vpop.f32.mrf.mxu0
        %v273 = vadd.f32 0.0, %v272
        %v274 = vpop.f32.mrf.mxu0
        %275 = vmatprep.mubr.f32.mxu0 0.0
        %276 = vmatmul.mubr.f32.gmra.mxu0 %v188
        %v277 = vpop.f32.mrf.mxu0
        %v278 = vadd.f32 0.0, %v277
        %v279 = vpop.f32.mrf.mxu0
        %280 = vdwg.mxu0
        %281 = vmatprep.subr.mxu0 0.0
        %282 = vmatpush1.msra.mxu0 %v186
        %283 = vmatprep.subr.mxu0 0.0
        %284 = vmatpush1.msra.mxu0 %v185
        %285 = vmatprep.subr.mxu0 0.0
        %286 = vmatpush1.msra.mxu0 %v184
        %287 = vmatprep.subr.mxu0 0.0
        %288 = vmatpush1.msra.mxu0 %v183
        %289 = vmatprep.subr.mxu0 0.0
        %290 = vmatpush1.msra.mxu0 %v182
        %291 = vmatprep.subr.mxu0 0.0
        %292 = vmatpush1.msra.mxu0 %v181
        %293 = vmatprep.subr.mxu0 0.0
        %294 = vmatpush1.msra.mxu0 %v180
        %295 = vmatprep.subr.mxu0 0.0
        %296 = vmatpush1.msra.mxu0 %v179
        %297 = vmatprep.subr.mxu0 0.0
        %298 = vmatpush1.msra.mxu0 %v178
        %299 = vmatprep.subr.mxu0 0.0
        %300 = vmatpush1.msra.mxu0 %v177
        %301 = vmatprep.subr.mxu0 0.0
        %302 = vmatpush1.msra.mxu0 %v176
        %303 = vmatprep.subr.mxu0 0.0
        %304 = vmatpush1.msra.mxu0 %v175
        %305 = vmatprep.subr.mxu0 0.0
        %306 = vmatpush1.msra.mxu0 %v174
        %307 = vmatprep.subr.mxu0 0.0
        %308 = vmatpush1.msra.mxu0 %v173
        %309 = vmatprep.subr.mxu0 0.0
        %310 = vmatpush1.msra.mxu0 %v172
        %311 = vmatprep.subr.mxu0 0.0
        %312 = vmatpush1.msra.mxu0 %v171
        %313 = vmatprep.subr.mxu0 0.0
        %314 = vmatpush2.msra.mxu0 0.0
        %315 = vmatprep.subr.mxu0 0.0
        %316 = vmatpush2.msra.mxu0 0.0
        %317 = vmatprep.subr.mxu0 0.0
        %318 = vmatpush2.msra.mxu0 0.0
        %319 = vmatprep.subr.mxu0 0.0
        %320 = vmatpush2.msra.mxu0 0.0
        %321 = vmatprep.subr.mxu0 0.0
        %322 = vmatpush2.msra.mxu0 0.0
        %323 = vmatprep.subr.mxu0 0.0
        %324 = vmatpush2.msra.mxu0 0.0
        %325 = vmatprep.subr.mxu0 0.0
        %326 = vmatpush2.msra.mxu0 0.0
        %327 = vmatprep.subr.mxu0 0.0
        %328 = vmatpush2.msra.mxu0 0.0
        %329 = vmatprep.subr.mxu0 0.0
        %330 = vmatpush2.msra.mxu0 0.0
        %331 = vmatprep.subr.mxu0 0.0
        %332 = vmatpush2.msra.mxu0 0.0
        %333 = vmatprep.subr.mxu0 0.0
        %334 = vmatpush2.msra.mxu0 0.0
        %335 = vmatprep.subr.mxu0 0.0
        %336 = vmatpush2.msra.mxu0 0.0
        %337 = vmatprep.subr.mxu0 0.0
        %338 = vmatpush2.msra.mxu0 0.0
        %339 = vmatprep.subr.mxu0 0.0
        %340 = vmatpush2.msra.mxu0 0.0
        %341 = vmatprep.subr.mxu0 0.0
        %342 = vmatpush2.msra.mxu0 0.0
        %343 = vmatprep.subr.mxu0 0.0
        %344 = vmatpush2.msra.mxu0 0.0
        %345 = vmatprep.mubr.f32.mxu0 0.0
        %346 = vmatmul.mubr.f32.gmra.mxu0 %v169
        %v347 = vpop.f32.mrf.mxu0
        %v348 = vadd.f32 %v273, %v347
        %v349 = vpop.f32.mrf.mxu0
        %350 = vmatprep.mubr.f32.mxu0 0.0
        %351 = vmatmul.mubr.f32.gmra.mxu0 %v170
        %v352 = vpop.f32.mrf.mxu0
        %v353 = vadd.f32 %v278, %v352
        %v354 = vpop.f32.mrf.mxu0
        %355 = vdwg.mxu0
        %v356 = vld [vmem:[%s167 + $0x2] sm:$0xff]
        %v357 = vld [vmem:[%s167 + $0xa] sm:$0x3f]
        %s358 = scalar_lea.vmem %s1, 256
        %v359 = vld [vmem:[%s358] sm:$0xff]
        %v360 = vld [vmem:[%s358 + $0x8] sm:$0xff]
        %v361 = vld [vmem:[%s358 + $0x10] sm:$0xff]
        %v362 = vld [vmem:[%s358 + $0x18] sm:$0xff]
        %v363 = vld [vmem:[%s358 + $0x20] sm:$0xff]
        %v364 = vld [vmem:[%s358 + $0x28] sm:$0xff]
        %v365 = vld [vmem:[%s358 + $0x30] sm:$0xff]
        %v366 = vld [vmem:[%s358 + $0x38] sm:$0xff]
        %v367 = vld [vmem:[%s358 + $0x40] sm:$0xff]
        %v368 = vld [vmem:[%s358 + $0x48] sm:$0xff]
        %v369 = vld [vmem:[%s358 + $0x50] sm:$0xff]
        %v370 = vld [vmem:[%s358 + $0x58] sm:$0xff]
        %v371 = vld [vmem:[%s358 + $0x60] sm:$0xff]
        %v372 = vld [vmem:[%s358 + $0x68] sm:$0xff]
        %v373 = vld [vmem:[%s358 + $0x70] sm:$0xff]
        %v374 = vld [vmem:[%s358 + $0x78] sm:$0xff]
        %375 = vmatprep.subr.mxu0 0.0
        %376 = vmatpush1.msra.mxu0 %v374
        %377 = vmatprep.subr.mxu0 0.0
        %378 = vmatpush1.msra.mxu0 %v373
        %379 = vmatprep.subr.mxu0 0.0
        %380 = vmatpush1.msra.mxu0 %v372
        %381 = vmatprep.subr.mxu0 0.0
        %382 = vmatpush1.msra.mxu0 %v371
        %383 = vmatprep.subr.mxu0 0.0
        %384 = vmatpush1.msra.mxu0 %v370
        %385 = vmatprep.subr.mxu0 0.0
        %386 = vmatpush1.msra.mxu0 %v369
        %387 = vmatprep.subr.mxu0 0.0
        %388 = vmatpush1.msra.mxu0 %v368
        %389 = vmatprep.subr.mxu0 0.0
        %390 = vmatpush1.msra.mxu0 %v367
        %391 = vmatprep.subr.mxu0 0.0
        %392 = vmatpush1.msra.mxu0 %v366
        %393 = vmatprep.subr.mxu0 0.0
        %394 = vmatpush1.msra.mxu0 %v365
        %395 = vmatprep.subr.mxu0 0.0
        %396 = vmatpush1.msra.mxu0 %v364
        %397 = vmatprep.subr.mxu0 0.0
        %398 = vmatpush1.msra.mxu0 %v363
        %399 = vmatprep.subr.mxu0 0.0
        %400 = vmatpush1.msra.mxu0 %v362
        %401 = vmatprep.subr.mxu0 0.0
        %402 = vmatpush1.msra.mxu0 %v361
        %403 = vmatprep.subr.mxu0 0.0
        %404 = vmatpush1.msra.mxu0 %v360
        %405 = vmatprep.subr.mxu0 0.0
        %406 = vmatpush1.msra.mxu0 %v359
        %407 = vmatprep.subr.mxu0 0.0
        %408 = vmatpush2.msra.mxu0 0.0
        %409 = vmatprep.subr.mxu0 0.0
        %410 = vmatpush2.msra.mxu0 0.0
        %411 = vmatprep.subr.mxu0 0.0
        %412 = vmatpush2.msra.mxu0 0.0
        %413 = vmatprep.subr.mxu0 0.0
        %414 = vmatpush2.msra.mxu0 0.0
        %415 = vmatprep.subr.mxu0 0.0
        %416 = vmatpush2.msra.mxu0 0.0
        %417 = vmatprep.subr.mxu0 0.0
        %418 = vmatpush2.msra.mxu0 0.0
        %419 = vmatprep.subr.mxu0 0.0
        %420 = vmatpush2.msra.mxu0 0.0
        %421 = vmatprep.subr.mxu0 0.0
        %422 = vmatpush2.msra.mxu0 0.0
        %423 = vmatprep.subr.mxu0 0.0
        %424 = vmatpush2.msra.mxu0 0.0
        %425 = vmatprep.subr.mxu0 0.0
        %426 = vmatpush2.msra.mxu0 0.0
        %427 = vmatprep.subr.mxu0 0.0
        %428 = vmatpush2.msra.mxu0 0.0
        %429 = vmatprep.subr.mxu0 0.0
        %430 = vmatpush2.msra.mxu0 0.0
        %431 = vmatprep.subr.mxu0 0.0
        %432 = vmatpush2.msra.mxu0 0.0
        %433 = vmatprep.subr.mxu0 0.0
        %434 = vmatpush2.msra.mxu0 0.0
        %435 = vmatprep.subr.mxu0 0.0
        %436 = vmatpush2.msra.mxu0 0.0
        %437 = vmatprep.subr.mxu0 0.0
        %438 = vmatpush2.msra.mxu0 0.0
        %439 = vmatprep.mubr.f32.mxu0 0.0
        %440 = vmatmul.mubr.f32.gmra.mxu0 %v356
        %v441 = vpop.f32.mrf.mxu0
        %v442 = vadd.f32 0.0, %v441
        %v443 = vpop.f32.mrf.mxu0
        %444 = vmatprep.mubr.f32.mxu0 0.0
        %445 = vmatmul.mubr.f32.gmra.mxu0 %v357
        %v446 = vpop.f32.mrf.mxu0
        %v447 = vadd.f32 0.0, %v446
        %v448 = vpop.f32.mrf.mxu0
        %449 = vdwg.mxu0
        %v450 = vadd.f32 %v348, %v442
        %v451 = vadd.f32 %v353, %v447
        %v452 = vld [vmem:[%s2] sm:$0x1]
        %v453 = vlaneseq
        %v454 = vshrl.u32 %v453, 7
        %v455 = vsub.s32 0, %v454
        %v456 = vrot.slane %v452, %v455
        %v457 = vadd.f32 %v450, %v456
        %v458 = vadd.f32 %v451, %v456
        %v459 = vmax.f32 %v457, 0.0
        %v460 = vmax.f32 %v458, 0.0
        %461 = vst [vmem:[#allocation2 + $0xf] sm:$0x1] 0.0
        %v462 = vld [vmem:[%s2 + $0x1] sm:$0x1]
        %v463 = vlaneseq
        %v464 = vshrl.u32 %v463, 7
        %v465 = vsub.s32 0, %v464
        %v466 = vrot.slane %v462, %v465
        %v467 = vmul.f32 %v459, %v466
        %v468 = vmul.f32 %v460, %v466
        %v469 = vld [vmem:[%s2 + $0x2] sm:$0x1]
        %v470 = vlaneseq
        %v471 = vshrl.u32 %v470, 7
        %v472 = vsub.s32 0, %v471
        %v473 = vrot.slane %v469, %v472
        %v474 = vadd.f32 %v467, %v473
        %v475 = vadd.f32 %v468, %v473
        %v476 = vmax.f32 %v474, 0.0
        %v477 = vmax.f32 %v475, 0.0
        %478 = vst [vmem:[#allocation2 + $0x1] sm:$0xff] %v476
        %479 = vst [vmem:[#allocation2 + $0x9] sm:$0x3f] %v477
        %v480 = vld [vmem:[#allocation2] sm:$0xff]
        %v481 = vld [vmem:[#allocation2 + $0x8] sm:$0x3f]
        %s482 = scalar_lea.vmem %s1, 384
        %v483 = vld [vmem:[%s482] sm:$0xff]
        %v484 = vld [vmem:[%s482 + $0x8] sm:$0xff]
        %v485 = vld [vmem:[%s482 + $0x10] sm:$0xff]
        %v486 = vld [vmem:[%s482 + $0x18] sm:$0xff]
        %v487 = vld [vmem:[%s482 + $0x20] sm:$0xff]
        %v488 = vld [vmem:[%s482 + $0x28] sm:$0xff]
        %v489 = vld [vmem:[%s482 + $0x30] sm:$0xff]
        %v490 = vld [vmem:[%s482 + $0x38] sm:$0xff]
        %v491 = vld [vmem:[%s482 + $0x40] sm:$0xff]
        %v492 = vld [vmem:[%s482 + $0x48] sm:$0xff]
        %v493 = vld [vmem:[%s482 + $0x50] sm:$0xff]
        %v494 = vld [vmem:[%s482 + $0x58] sm:$0xff]
        %v495 = vld [vmem:[%s482 + $0x60] sm:$0xff]
        %v496 = vld [vmem:[%s482 + $0x68] sm:$0xff]
        %v497 = vld [vmem:[%s482 + $0x70] sm:$0xff]
        %v498 = vld [vmem:[%s482 + $0x78] sm:$0xff]
        %v499 = vld [vmem:[#allocation2 + $0x1] sm:$0xff]
        %v500 = vld [vmem:[#allocation2 + $0x9] sm:$0x3f]
        %s501 = scalar_lea.vmem %s1, 512
        %v502 = vld [vmem:[%s501] sm:$0xff]
        %v503 = vld [vmem:[%s501 + $0x8] sm:$0xff]
        %v504 = vld [vmem:[%s501 + $0x10] sm:$0xff]
        %v505 = vld [vmem:[%s501 + $0x18] sm:$0xff]
        %v506 = vld [vmem:[%s501 + $0x20] sm:$0xff]
        %v507 = vld [vmem:[%s501 + $0x28] sm:$0xff]
        %v508 = vld [vmem:[%s501 + $0x30] sm:$0xff]
        %v509 = vld [vmem:[%s501 + $0x38] sm:$0xff]
        %v510 = vld [vmem:[%s501 + $0x40] sm:$0xff]
        %v511 = vld [vmem:[%s501 + $0x48] sm:$0xff]
        %v512 = vld [vmem:[%s501 + $0x50] sm:$0xff]
        %v513 = vld [vmem:[%s501 + $0x58] sm:$0xff]
        %v514 = vld [vmem:[%s501 + $0x60] sm:$0xff]
        %v515 = vld [vmem:[%s501 + $0x68] sm:$0xff]
        %v516 = vld [vmem:[%s501 + $0x70] sm:$0xff]
        %v517 = vld [vmem:[%s501 + $0x78] sm:$0xff]
        %518 = vmatprep.subr.mxu0 0.0
        %519 = vmatpush1.msra.mxu0 %v517
        %520 = vmatprep.subr.mxu0 0.0
        %521 = vmatpush1.msra.mxu0 %v516
        %522 = vmatprep.subr.mxu0 0.0
        %523 = vmatpush1.msra.mxu0 %v515
        %524 = vmatprep.subr.mxu0 0.0
        %525 = vmatpush1.msra.mxu0 %v514
        %526 = vmatprep.subr.mxu0 0.0
        %527 = vmatpush1.msra.mxu0 %v513
        %528 = vmatprep.subr.mxu0 0.0
        %529 = vmatpush1.msra.mxu0 %v512
        %530 = vmatprep.subr.mxu0 0.0
        %531 = vmatpush1.msra.mxu0 %v511
        %532 = vmatprep.subr.mxu0 0.0
        %533 = vmatpush1.msra.mxu0 %v510
        %534 = vmatprep.subr.mxu0 0.0
        %535 = vmatpush1.msra.mxu0 %v509
        %536 = vmatprep.subr.mxu0 0.0
        %537 = vmatpush1.msra.mxu0 %v508
        %538 = vmatprep.subr.mxu0 0.0
        %539 = vmatpush1.msra.mxu0 %v507
        %540 = vmatprep.subr.mxu0 0.0
        %541 = vmatpush1.msra.mxu0 %v506
        %542 = vmatprep.subr.mxu0 0.0
        %543 = vmatpush1.msra.mxu0 %v505
        %544 = vmatprep.subr.mxu0 0.0
        %545 = vmatpush1.msra.mxu0 %v504
        %546 = vmatprep.subr.mxu0 0.0
        %547 = vmatpush1.msra.mxu0 %v503
        %548 = vmatprep.subr.mxu0 0.0
        %549 = vmatpush1.msra.mxu0 %v502
        %550 = vmatprep.subr.mxu0 0.0
        %551 = vmatpush2.msra.mxu0 0.0
        %552 = vmatprep.subr.mxu0 0.0
        %553 = vmatpush2.msra.mxu0 0.0
        %554 = vmatprep.subr.mxu0 0.0
        %555 = vmatpush2.msra.mxu0 0.0
        %556 = vmatprep.subr.mxu0 0.0
        %557 = vmatpush2.msra.mxu0 0.0
        %558 = vmatprep.subr.mxu0 0.0
        %559 = vmatpush2.msra.mxu0 0.0
        %560 = vmatprep.subr.mxu0 0.0
        %561 = vmatpush2.msra.mxu0 0.0
        %562 = vmatprep.subr.mxu0 0.0
        %563 = vmatpush2.msra.mxu0 0.0
        %564 = vmatprep.subr.mxu0 0.0
        %565 = vmatpush2.msra.mxu0 0.0
        %566 = vmatprep.subr.mxu0 0.0
        %567 = vmatpush2.msra.mxu0 0.0
        %568 = vmatprep.subr.mxu0 0.0
        %569 = vmatpush2.msra.mxu0 0.0
        %570 = vmatprep.subr.mxu0 0.0
        %571 = vmatpush2.msra.mxu0 0.0
        %572 = vmatprep.subr.mxu0 0.0
        %573 = vmatpush2.msra.mxu0 0.0
        %574 = vmatprep.subr.mxu0 0.0
        %575 = vmatpush2.msra.mxu0 0.0
        %576 = vmatprep.subr.mxu0 0.0
        %577 = vmatpush2.msra.mxu0 0.0
        %578 = vmatprep.subr.mxu0 0.0
        %579 = vmatpush2.msra.mxu0 0.0
        %580 = vmatprep.subr.mxu0 0.0
        %581 = vmatpush2.msra.mxu0 0.0
        %582 = vmatprep.mubr.f32.mxu0 0.0
        %583 = vmatmul.mubr.f32.gmra.mxu0 %v499
        %v584 = vpop.f32.mrf.mxu0
        %v585 = vadd.f32 0.0, %v584
        %v586 = vpop.f32.mrf.mxu0
        %587 = vmatprep.mubr.f32.mxu0 0.0
        %588 = vmatmul.mubr.f32.gmra.mxu0 %v500
        %v589 = vpop.f32.mrf.mxu0
        %v590 = vadd.f32 0.0, %v589
        %v591 = vpop.f32.mrf.mxu0
        %592 = vdwg.mxu0
        %593 = vmatprep.subr.mxu0 0.0
        %594 = vmatpush1.msra.mxu0 %v498
        %595 = vmatprep.subr.mxu0 0.0
        %596 = vmatpush1.msra.mxu0 %v497
        %597 = vmatprep.subr.mxu0 0.0
        %598 = vmatpush1.msra.mxu0 %v496
        %599 = vmatprep.subr.mxu0 0.0
        %600 = vmatpush1.msra.mxu0 %v495
        %601 = vmatprep.subr.mxu0 0.0
        %602 = vmatpush1.msra.mxu0 %v494
        %603 = vmatprep.subr.mxu0 0.0
        %604 = vmatpush1.msra.mxu0 %v493
        %605 = vmatprep.subr.mxu0 0.0
        %606 = vmatpush1.msra.mxu0 %v492
        %607 = vmatprep.subr.mxu0 0.0
        %608 = vmatpush1.msra.mxu0 %v491
        %609 = vmatprep.subr.mxu0 0.0
        %610 = vmatpush1.msra.mxu0 %v490
        %611 = vmatprep.subr.mxu0 0.0
        %612 = vmatpush1.msra.mxu0 %v489
        %613 = vmatprep.subr.mxu0 0.0
        %614 = vmatpush1.msra.mxu0 %v488
        %615 = vmatprep.subr.mxu0 0.0
        %616 = vmatpush1.msra.mxu0 %v487
        %617 = vmatprep.subr.mxu0 0.0
        %618 = vmatpush1.msra.mxu0 %v486
        %619 = vmatprep.subr.mxu0 0.0
        %620 = vmatpush1.msra.mxu0 %v485
        %621 = vmatprep.subr.mxu0 0.0
        %622 = vmatpush1.msra.mxu0 %v484
        %623 = vmatprep.subr.mxu0 0.0
        %624 = vmatpush1.msra.mxu0 %v483
        %625 = vmatprep.subr.mxu0 0.0
        %626 = vmatpush2.msra.mxu0 0.0
        %627 = vmatprep.subr.mxu0 0.0
        %628 = vmatpush2.msra.mxu0 0.0
        %629 = vmatprep.subr.mxu0 0.0
        %630 = vmatpush2.msra.mxu0 0.0
        %631 = vmatprep.subr.mxu0 0.0
        %632 = vmatpush2.msra.mxu0 0.0
        %633 = vmatprep.subr.mxu0 0.0
        %634 = vmatpush2.msra.mxu0 0.0
        %635 = vmatprep.subr.mxu0 0.0
        %636 = vmatpush2.msra.mxu0 0.0
        %637 = vmatprep.subr.mxu0 0.0
        %638 = vmatpush2.msra.mxu0 0.0
        %639 = vmatprep.subr.mxu0 0.0
        %640 = vmatpush2.msra.mxu0 0.0
        %641 = vmatprep.subr.mxu0 0.0
        %642 = vmatpush2.msra.mxu0 0.0
        %643 = vmatprep.subr.mxu0 0.0
        %644 = vmatpush2.msra.mxu0 0.0
        %645 = vmatprep.subr.mxu0 0.0
        %646 = vmatpush2.msra.mxu0 0.0
        %647 = vmatprep.subr.mxu0 0.0
        %648 = vmatpush2.msra.mxu0 0.0
        %649 = vmatprep.subr.mxu0 0.0
        %650 = vmatpush2.msra.mxu0 0.0
        %651 = vmatprep.subr.mxu0 0.0
        %652 = vmatpush2.msra.mxu0 0.0
        %653 = vmatprep.subr.mxu0 0.0
        %654 = vmatpush2.msra.mxu0 0.0
        %655 = vmatprep.subr.mxu0 0.0
        %656 = vmatpush2.msra.mxu0 0.0
        %657 = vmatprep.mubr.f32.mxu0 0.0
        %658 = vmatmul.mubr.f32.gmra.mxu0 %v480
        %v659 = vpop.f32.mrf.mxu0
        %v660 = vadd.f32 %v585, %v659
        %v661 = vpop.f32.mrf.mxu0
        %662 = vmatprep.mubr.f32.mxu0 0.0
        %663 = vmatmul.mubr.f32.gmra.mxu0 %v481
        %v664 = vpop.f32.mrf.mxu0
        %v665 = vadd.f32 %v590, %v664
        %v666 = vpop.f32.mrf.mxu0
        %667 = vdwg.mxu0
        %v668 = vld [vmem:[#allocation2 + $0x2] sm:$0xff]
        %v669 = vld [vmem:[#allocation2 + $0xa] sm:$0x3f]
        %s670 = scalar_lea.vmem %s1, 640
        %v671 = vld [vmem:[%s670] sm:$0xff]
        %v672 = vld [vmem:[%s670 + $0x8] sm:$0xff]
        %v673 = vld [vmem:[%s670 + $0x10] sm:$0xff]
        %v674 = vld [vmem:[%s670 + $0x18] sm:$0xff]
        %v675 = vld [vmem:[%s670 + $0x20] sm:$0xff]
        %v676 = vld [vmem:[%s670 + $0x28] sm:$0xff]
        %v677 = vld [vmem:[%s670 + $0x30] sm:$0xff]
        %v678 = vld [vmem:[%s670 + $0x38] sm:$0xff]
        %v679 = vld [vmem:[%s670 + $0x40] sm:$0xff]
        %v680 = vld [vmem:[%s670 + $0x48] sm:$0xff]
        %v681 = vld [vmem:[%s670 + $0x50] sm:$0xff]
        %v682 = vld [vmem:[%s670 + $0x58] sm:$0xff]
        %v683 = vld [vmem:[%s670 + $0x60] sm:$0xff]
        %v684 = vld [vmem:[%s670 + $0x68] sm:$0xff]
        %v685 = vld [vmem:[%s670 + $0x70] sm:$0xff]
        %v686 = vld [vmem:[%s670 + $0x78] sm:$0xff]
        %687 = vmatprep.subr.mxu0 0.0
        %688 = vmatpush1.msra.mxu0 %v686
        %689 = vmatprep.subr.mxu0 0.0
        %690 = vmatpush1.msra.mxu0 %v685
        %691 = vmatprep.subr.mxu0 0.0
        %692 = vmatpush1.msra.mxu0 %v684
        %693 = vmatprep.subr.mxu0 0.0
        %694 = vmatpush1.msra.mxu0 %v683
        %695 = vmatprep.subr.mxu0 0.0
        %696 = vmatpush1.msra.mxu0 %v682
        %697 = vmatprep.subr.mxu0 0.0
        %698 = vmatpush1.msra.mxu0 %v681
        %699 = vmatprep.subr.mxu0 0.0
        %700 = vmatpush1.msra.mxu0 %v680
        %701 = vmatprep.subr.mxu0 0.0
        %702 = vmatpush1.msra.mxu0 %v679
        %703 = vmatprep.subr.mxu0 0.0
        %704 = vmatpush1.msra.mxu0 %v678
        %705 = vmatprep.subr.mxu0 0.0
        %706 = vmatpush1.msra.mxu0 %v677
        %707 = vmatprep.subr.mxu0 0.0
        %708 = vmatpush1.msra.mxu0 %v676
        %709 = vmatprep.subr.mxu0 0.0
        %710 = vmatpush1.msra.mxu0 %v675
        %711 = vmatprep.subr.mxu0 0.0
        %712 = vmatpush1.msra.mxu0 %v674
        %713 = vmatprep.subr.mxu0 0.0
        %714 = vmatpush1.msra.mxu0 %v673
        %715 = vmatprep.subr.mxu0 0.0
        %716 = vmatpush1.msra.mxu0 %v672
        %717 = vmatprep.subr.mxu0 0.0
        %718 = vmatpush1.msra.mxu0 %v671
        %719 = vmatprep.subr.mxu0 0.0
        %720 = vmatpush2.msra.mxu0 0.0
        %721 = vmatprep.subr.mxu0 0.0
        %722 = vmatpush2.msra.mxu0 0.0
        %723 = vmatprep.subr.mxu0 0.0
        %724 = vmatpush2.msra.mxu0 0.0
        %725 = vmatprep.subr.mxu0 0.0
        %726 = vmatpush2.msra.mxu0 0.0
        %727 = vmatprep.subr.mxu0 0.0
        %728 = vmatpush2.msra.mxu0 0.0
        %729 = vmatprep.subr.mxu0 0.0
        %730 = vmatpush2.msra.mxu0 0.0
        %731 = vmatprep.subr.mxu0 0.0
        %732 = vmatpush2.msra.mxu0 0.0
        %733 = vmatprep.subr.mxu0 0.0
        %734 = vmatpush2.msra.mxu0 0.0
        %735 = vmatprep.subr.mxu0 0.0
        %736 = vmatpush2.msra.mxu0 0.0
        %737 = vmatprep.subr.mxu0 0.0
        %738 = vmatpush2.msra.mxu0 0.0
        %739 = vmatprep.subr.mxu0 0.0
        %740 = vmatpush2.msra.mxu0 0.0
        %741 = vmatprep.subr.mxu0 0.0
        %742 = vmatpush2.msra.mxu0 0.0
        %743 = vmatprep.subr.mxu0 0.0
        %744 = vmatpush2.msra.mxu0 0.0
        %745 = vmatprep.subr.mxu0 0.0
        %746 = vmatpush2.msra.mxu0 0.0
        %747 = vmatprep.subr.mxu0 0.0
        %748 = vmatpush2.msra.mxu0 0.0
        %749 = vmatprep.subr.mxu0 0.0
        %750 = vmatpush2.msra.mxu0 0.0
        %751 = vmatprep.mubr.f32.mxu0 0.0
        %752 = vmatmul.mubr.f32.gmra.mxu0 %v668
        %v753 = vpop.f32.mrf.mxu0
        %v754 = vadd.f32 0.0, %v753
        %v755 = vpop.f32.mrf.mxu0
        %756 = vmatprep.mubr.f32.mxu0 0.0
        %757 = vmatmul.mubr.f32.gmra.mxu0 %v669
        %v758 = vpop.f32.mrf.mxu0
        %v759 = vadd.f32 0.0, %v758
        %v760 = vpop.f32.mrf.mxu0
        %761 = vdwg.mxu0
        %v762 = vadd.f32 %v660, %v754
        %v763 = vadd.f32 %v665, %v759
        %v764 = vld [vmem:[%s2 + $0x3] sm:$0x1]
        %v765 = vlaneseq
        %v766 = vshrl.u32 %v765, 7
        %v767 = vsub.s32 0, %v766
        %v768 = vrot.slane %v764, %v767
        %v769 = vadd.f32 %v762, %v768
        %v770 = vadd.f32 %v763, %v768
        %v771 = vld [vmem:[%s2 + $0x4] sm:$0x1]
        %v772 = vlaneseq
        %v773 = vshrl.u32 %v772, 7
        %v774 = vsub.s32 0, %v773
        %v775 = vrot.slane %v771, %v774
        %v776 = vmul.f32 %v769, %v775
        %v777 = vmul.f32 %v770, %v775
        %v778 = vld [vmem:[%s2 + $0x5] sm:$0x1]
        %v779 = vlaneseq
        %v780 = vshrl.u32 %v779, 7
        %v781 = vsub.s32 0, %v780
        %v782 = vrot.slane %v778, %v781
        %v783 = vadd.f32 %v776, %v782
        %v784 = vadd.f32 %v777, %v782
        %v785 = vmax.f32 %v783, 0.0
        %v786 = vmax.f32 %v784, 0.0
        %787 = vst [vmem:[#allocation2 + $0x1] sm:$0xff] %v785
        %788 = vst [vmem:[#allocation2 + $0x9] sm:$0x3f] %v786
        %v789 = vld [vmem:[#allocation2] sm:$0xff]
        %v790 = vld [vmem:[#allocation2 + $0x8] sm:$0x3f]
        %s791 = scalar_lea.vmem %s1, 768
        %v792 = vld [vmem:[%s791] sm:$0xff]
        %v793 = vld [vmem:[%s791 + $0x8] sm:$0xff]
        %v794 = vld [vmem:[%s791 + $0x10] sm:$0xff]
        %v795 = vld [vmem:[%s791 + $0x18] sm:$0xff]
        %v796 = vld [vmem:[%s791 + $0x20] sm:$0xff]
        %v797 = vld [vmem:[%s791 + $0x28] sm:$0xff]
        %v798 = vld [vmem:[%s791 + $0x30] sm:$0xff]
        %v799 = vld [vmem:[%s791 + $0x38] sm:$0xff]
        %v800 = vld [vmem:[%s791 + $0x40] sm:$0xff]
        %v801 = vld [vmem:[%s791 + $0x48] sm:$0xff]
        %v802 = vld [vmem:[%s791 + $0x50] sm:$0xff]
        %v803 = vld [vmem:[%s791 + $0x58] sm:$0xff]
        %v804 = vld [vmem:[%s791 + $0x60] sm:$0xff]
        %v805 = vld [vmem:[%s791 + $0x68] sm:$0xff]
        %v806 = vld [vmem:[%s791 + $0x70] sm:$0xff]
        %v807 = vld [vmem:[%s791 + $0x78] sm:$0xff]
        %v808 = vld [vmem:[#allocation2 + $0x1] sm:$0xff]
        %v809 = vld [vmem:[#allocation2 + $0x9] sm:$0x3f]
        %s810 = scalar_lea.vmem %s1, 896
        %v811 = vld [vmem:[%s810] sm:$0xff]
        %v812 = vld [vmem:[%s810 + $0x8] sm:$0xff]
        %v813 = vld [vmem:[%s810 + $0x10] sm:$0xff]
        %v814 = vld [vmem:[%s810 + $0x18] sm:$0xff]
        %v815 = vld [vmem:[%s810 + $0x20] sm:$0xff]
        %v816 = vld [vmem:[%s810 + $0x28] sm:$0xff]
        %v817 = vld [vmem:[%s810 + $0x30] sm:$0xff]
        %v818 = vld [vmem:[%s810 + $0x38] sm:$0xff]
        %v819 = vld [vmem:[%s810 + $0x40] sm:$0xff]
        %v820 = vld [vmem:[%s810 + $0x48] sm:$0xff]
        %v821 = vld [vmem:[%s810 + $0x50] sm:$0xff]
        %v822 = vld [vmem:[%s810 + $0x58] sm:$0xff]
        %v823 = vld [vmem:[%s810 + $0x60] sm:$0xff]
        %v824 = vld [vmem:[%s810 + $0x68] sm:$0xff]
        %v825 = vld [vmem:[%s810 + $0x70] sm:$0xff]
        %v826 = vld [vmem:[%s810 + $0x78] sm:$0xff]
        %827 = vmatprep.subr.mxu0 0.0
        %828 = vmatpush1.msra.mxu0 %v826
        %829 = vmatprep.subr.mxu0 0.0
        %830 = vmatpush1.msra.mxu0 %v825
        %831 = vmatprep.subr.mxu0 0.0
        %832 = vmatpush1.msra.mxu0 %v824
        %833 = vmatprep.subr.mxu0 0.0
        %834 = vmatpush1.msra.mxu0 %v823
        %835 = vmatprep.subr.mxu0 0.0
        %836 = vmatpush1.msra.mxu0 %v822
        %837 = vmatprep.subr.mxu0 0.0
        %838 = vmatpush1.msra.mxu0 %v821
        %839 = vmatprep.subr.mxu0 0.0
        %840 = vmatpush1.msra.mxu0 %v820
        %841 = vmatprep.subr.mxu0 0.0
        %842 = vmatpush1.msra.mxu0 %v819
        %843 = vmatprep.subr.mxu0 0.0
        %844 = vmatpush1.msra.mxu0 %v818
        %845 = vmatprep.subr.mxu0 0.0
        %846 = vmatpush1.msra.mxu0 %v817
        %847 = vmatprep.subr.mxu0 0.0
        %848 = vmatpush1.msra.mxu0 %v816
        %849 = vmatprep.subr.mxu0 0.0
        %850 = vmatpush1.msra.mxu0 %v815
        %851 = vmatprep.subr.mxu0 0.0
        %852 = vmatpush1.msra.mxu0 %v814
        %853 = vmatprep.subr.mxu0 0.0
        %854 = vmatpush1.msra.mxu0 %v813
        %855 = vmatprep.subr.mxu0 0.0
        %856 = vmatpush1.msra.mxu0 %v812
        %857 = vmatprep.subr.mxu0 0.0
        %858 = vmatpush1.msra.mxu0 %v811
        %859 = vmatprep.subr.mxu0 0.0
        %860 = vmatpush2.msra.mxu0 0.0
        %861 = vmatprep.subr.mxu0 0.0
        %862 = vmatpush2.msra.mxu0 0.0
        %863 = vmatprep.subr.mxu0 0.0
        %864 = vmatpush2.msra.mxu0 0.0
        %865 = vmatprep.subr.mxu0 0.0
        %866 = vmatpush2.msra.mxu0 0.0
        %867 = vmatprep.subr.mxu0 0.0
        %868 = vmatpush2.msra.mxu0 0.0
        %869 = vmatprep.subr.mxu0 0.0
        %870 = vmatpush2.msra.mxu0 0.0
        %871 = vmatprep.subr.mxu0 0.0
        %872 = vmatpush2.msra.mxu0 0.0
        %873 = vmatprep.subr.mxu0 0.0
        %874 = vmatpush2.msra.mxu0 0.0
        %875 = vmatprep.subr.mxu0 0.0
        %876 = vmatpush2.msra.mxu0 0.0
        %877 = vmatprep.subr.mxu0 0.0
        %878 = vmatpush2.msra.mxu0 0.0
        %879 = vmatprep.subr.mxu0 0.0
        %880 = vmatpush2.msra.mxu0 0.0
        %881 = vmatprep.subr.mxu0 0.0
        %882 = vmatpush2.msra.mxu0 0.0
        %883 = vmatprep.subr.mxu0 0.0
        %884 = vmatpush2.msra.mxu0 0.0
        %885 = vmatprep.subr.mxu0 0.0
        %886 = vmatpush2.msra.mxu0 0.0
        %887 = vmatprep.subr.mxu0 0.0
        %888 = vmatpush2.msra.mxu0 0.0
        %889 = vmatprep.subr.mxu0 0.0
        %890 = vmatpush2.msra.mxu0 0.0
        %891 = vmatprep.mubr.f32.mxu0 0.0
        %892 = vmatmul.mubr.f32.gmra.mxu0 %v808
        %v893 = vpop.f32.mrf.mxu0
        %v894 = vadd.f32 0.0, %v893
        %v895 = vpop.f32.mrf.mxu0
        %896 = vmatprep.mubr.f32.mxu0 0.0
        %897 = vmatmul.mubr.f32.gmra.mxu0 %v809
        %v898 = vpop.f32.mrf.mxu0
        %v899 = vadd.f32 0.0, %v898
        %v900 = vpop.f32.mrf.mxu0
        %901 = vdwg.mxu0
        %902 = vmatprep.subr.mxu0 0.0
        %903 = vmatpush1.msra.mxu0 %v807
        %904 = vmatprep.subr.mxu0 0.0
        %905 = vmatpush1.msra.mxu0 %v806
        %906 = vmatprep.subr.mxu0 0.0
        %907 = vmatpush1.msra.mxu0 %v805
        %908 = vmatprep.subr.mxu0 0.0
        %909 = vmatpush1.msra.mxu0 %v804
        %910 = vmatprep.subr.mxu0 0.0
        %911 = vmatpush1.msra.mxu0 %v803
        %912 = vmatprep.subr.mxu0 0.0
        %913 = vmatpush1.msra.mxu0 %v802
        %914 = vmatprep.subr.mxu0 0.0
        %915 = vmatpush1.msra.mxu0 %v801
        %916 = vmatprep.subr.mxu0 0.0
        %917 = vmatpush1.msra.mxu0 %v800
        %918 = vmatprep.subr.mxu0 0.0
        %919 = vmatpush1.msra.mxu0 %v799
        %920 = vmatprep.subr.mxu0 0.0
        %921 = vmatpush1.msra.mxu0 %v798
        %922 = vmatprep.subr.mxu0 0.0
        %923 = vmatpush1.msra.mxu0 %v797
        %924 = vmatprep.subr.mxu0 0.0
        %925 = vmatpush1.msra.mxu0 %v796
        %926 = vmatprep.subr.mxu0 0.0
        %927 = vmatpush1.msra.mxu0 %v795
        %928 = vmatprep.subr.mxu0 0.0
        %929 = vmatpush1.msra.mxu0 %v794
        %930 = vmatprep.subr.mxu0 0.0
        %931 = vmatpush1.msra.mxu0 %v793
        %932 = vmatprep.subr.mxu0 0.0
        %933 = vmatpush1.msra.mxu0 %v792
        %934 = vmatprep.subr.mxu0 0.0
        %935 = vmatpush2.msra.mxu0 0.0
        %936 = vmatprep.subr.mxu0 0.0
        %937 = vmatpush2.msra.mxu0 0.0
        %938 = vmatprep.subr.mxu0 0.0
        %939 = vmatpush2.msra.mxu0 0.0
        %940 = vmatprep.subr.mxu0 0.0
        %941 = vmatpush2.msra.mxu0 0.0
        %942 = vmatprep.subr.mxu0 0.0
        %943 = vmatpush2.msra.mxu0 0.0
        %944 = vmatprep.subr.mxu0 0.0
        %945 = vmatpush2.msra.mxu0 0.0
        %946 = vmatprep.subr.mxu0 0.0
        %947 = vmatpush2.msra.mxu0 0.0
        %948 = vmatprep.subr.mxu0 0.0
        %949 = vmatpush2.msra.mxu0 0.0
        %950 = vmatprep.subr.mxu0 0.0
        %951 = vmatpush2.msra.mxu0 0.0
        %952 = vmatprep.subr.mxu0 0.0
        %953 = vmatpush2.msra.mxu0 0.0
        %954 = vmatprep.subr.mxu0 0.0
        %955 = vmatpush2.msra.mxu0 0.0
        %956 = vmatprep.subr.mxu0 0.0
        %957 = vmatpush2.msra.mxu0 0.0
        %958 = vmatprep.subr.mxu0 0.0
        %959 = vmatpush2.msra.mxu0 0.0
        %960 = vmatprep.subr.mxu0 0.0
        %961 = vmatpush2.msra.mxu0 0.0
        %962 = vmatprep.subr.mxu0 0.0
        %963 = vmatpush2.msra.mxu0 0.0
        %964 = vmatprep.subr.mxu0 0.0
        %965 = vmatpush2.msra.mxu0 0.0
        %966 = vmatprep.mubr.f32.mxu0 0.0
        %967 = vmatmul.mubr.f32.gmra.mxu0 %v789
        %v968 = vpop.f32.mrf.mxu0
        %v969 = vadd.f32 %v894, %v968
        %v970 = vpop.f32.mrf.mxu0
        %971 = vmatprep.mubr.f32.mxu0 0.0
        %972 = vmatmul.mubr.f32.gmra.mxu0 %v790
        %v973 = vpop.f32.mrf.mxu0
        %v974 = vadd.f32 %v899, %v973
        %v975 = vpop.f32.mrf.mxu0
        %976 = vdwg.mxu0
        %v977 = vld [vmem:[#allocation2 + $0x2] sm:$0xff]
        %v978 = vld [vmem:[#allocation2 + $0xa] sm:$0x3f]
        %s979 = scalar_lea.vmem %s1, 1024
        %v980 = vld [vmem:[%s979] sm:$0xff]
        %v981 = vld [vmem:[%s979 + $0x8] sm:$0xff]
        %v982 = vld [vmem:[%s979 + $0x10] sm:$0xff]
        %v983 = vld [vmem:[%s979 + $0x18] sm:$0xff]
        %v984 = vld [vmem:[%s979 + $0x20] sm:$0xff]
        %v985 = vld [vmem:[%s979 + $0x28] sm:$0xff]
        %v986 = vld [vmem:[%s979 + $0x30] sm:$0xff]
        %v987 = vld [vmem:[%s979 + $0x38] sm:$0xff]
        %v988 = vld [vmem:[%s979 + $0x40] sm:$0xff]
        %v989 = vld [vmem:[%s979 + $0x48] sm:$0xff]
        %v990 = vld [vmem:[%s979 + $0x50] sm:$0xff]
        %v991 = vld [vmem:[%s979 + $0x58] sm:$0xff]
        %v992 = vld [vmem:[%s979 + $0x60] sm:$0xff]
        %v993 = vld [vmem:[%s979 + $0x68] sm:$0xff]
        %v994 = vld [vmem:[%s979 + $0x70] sm:$0xff]
        %v995 = vld [vmem:[%s979 + $0x78] sm:$0xff]
        %996 = vmatprep.subr.mxu0 0.0
        %997 = vmatpush1.msra.mxu0 %v995
        %998 = vmatprep.subr.mxu0 0.0
        %999 = vmatpush1.msra.mxu0 %v994
        %1000 = vmatprep.subr.mxu0 0.0
        %1001 = vmatpush1.msra.mxu0 %v993
        %1002 = vmatprep.subr.mxu0 0.0
        %1003 = vmatpush1.msra.mxu0 %v992
        %1004 = vmatprep.subr.mxu0 0.0
        %1005 = vmatpush1.msra.mxu0 %v991
        %1006 = vmatprep.subr.mxu0 0.0
        %1007 = vmatpush1.msra.mxu0 %v990
        %1008 = vmatprep.subr.mxu0 0.0
        %1009 = vmatpush1.msra.mxu0 %v989
        %1010 = vmatprep.subr.mxu0 0.0
        %1011 = vmatpush1.msra.mxu0 %v988
        %1012 = vmatprep.subr.mxu0 0.0
        %1013 = vmatpush1.msra.mxu0 %v987
        %1014 = vmatprep.subr.mxu0 0.0
        %1015 = vmatpush1.msra.mxu0 %v986
        %1016 = vmatprep.subr.mxu0 0.0
        %1017 = vmatpush1.msra.mxu0 %v985
        %1018 = vmatprep.subr.mxu0 0.0
        %1019 = vmatpush1.msra.mxu0 %v984
        %1020 = vmatprep.subr.mxu0 0.0
        %1021 = vmatpush1.msra.mxu0 %v983
        %1022 = vmatprep.subr.mxu0 0.0
        %1023 = vmatpush1.msra.mxu0 %v982
        %1024 = vmatprep.subr.mxu0 0.0
        %1025 = vmatpush1.msra.mxu0 %v981
        %1026 = vmatprep.subr.mxu0 0.0
        %1027 = vmatpush1.msra.mxu0 %v980
        %1028 = vmatprep.subr.mxu0 0.0
        %1029 = vmatpush2.msra.mxu0 0.0
        %1030 = vmatprep.subr.mxu0 0.0
        %1031 = vmatpush2.msra.mxu0 0.0
        %1032 = vmatprep.subr.mxu0 0.0
        %1033 = vmatpush2.msra.mxu0 0.0
        %1034 = vmatprep.subr.mxu0 0.0
        %1035 = vmatpush2.msra.mxu0 0.0
        %1036 = vmatprep.subr.mxu0 0.0
        %1037 = vmatpush2.msra.mxu0 0.0
        %1038 = vmatprep.subr.mxu0 0.0
        %1039 = vmatpush2.msra.mxu0 0.0
        %1040 = vmatprep.subr.mxu0 0.0
        %1041 = vmatpush2.msra.mxu0 0.0
        %1042 = vmatprep.subr.mxu0 0.0
        %1043 = vmatpush2.msra.mxu0 0.0
        %1044 = vmatprep.subr.mxu0 0.0
        %1045 = vmatpush2.msra.mxu0 0.0
        %1046 = vmatprep.subr.mxu0 0.0
        %1047 = vmatpush2.msra.mxu0 0.0
        %1048 = vmatprep.subr.mxu0 0.0
        %1049 = vmatpush2.msra.mxu0 0.0
        %1050 = vmatprep.subr.mxu0 0.0
        %1051 = vmatpush2.msra.mxu0 0.0
        %1052 = vmatprep.subr.mxu0 0.0
        %1053 = vmatpush2.msra.mxu0 0.0
        %1054 = vmatprep.subr.mxu0 0.0
        %1055 = vmatpush2.msra.mxu0 0.0
        %1056 = vmatprep.subr.mxu0 0.0
        %1057 = vmatpush2.msra.mxu0 0.0
        %1058 = vmatprep.subr.mxu0 0.0
        %1059 = vmatpush2.msra.mxu0 0.0
        %1060 = vmatprep.mubr.f32.mxu0 0.0
        %1061 = vmatmul.mubr.f32.gmra.mxu0 %v977
        %v1062 = vpop.f32.mrf.mxu0
        %v1063 = vadd.f32 0.0, %v1062
        %v1064 = vpop.f32.mrf.mxu0
        %1065 = vmatprep.mubr.f32.mxu0 0.0
        %1066 = vmatmul.mubr.f32.gmra.mxu0 %v978
        %v1067 = vpop.f32.mrf.mxu0
        %v1068 = vadd.f32 0.0, %v1067
        %v1069 = vpop.f32.mrf.mxu0
        %1070 = vdwg.mxu0
        %v1071 = vadd.f32 %v969, %v1063
        %v1072 = vadd.f32 %v974, %v1068
        %v1073 = vld [vmem:[%s2 + $0x6] sm:$0x1]
        %v1074 = vlaneseq
        %v1075 = vshrl.u32 %v1074, 7
        %v1076 = vsub.s32 0, %v1075
        %v1077 = vrot.slane %v1073, %v1076
        %v1078 = vadd.f32 %v1071, %v1077
        %v1079 = vadd.f32 %v1072, %v1077
        %1080 = vst [vmem:[#allocation2 + $0x1] sm:$0xff] %v1078
        %1081 = vst [vmem:[#allocation2 + $0x9] sm:$0x3f] %v1079
        %1082 = vst [vmem:[#allocation2 + $0xf] sm:$0x1] 0.0
        %s1083 = scalar_lea.vmem [#allocation2], 1
        %v1084 = vld [vmem:[%s1083] ss:$2 sm:$0x7f]
        %s1085 = scalar_lea.vmem [#allocation2], 2
        %v1086 = vld [vmem:[%s1085] ss:$2 sm:$0x7f]
        %v1087 = vmax.f32 %v1084, %v1086
        %s1088 = scalar_lea.vmem [#allocation2], 3
        %v1089 = vld [vmem:[%s1088] ss:$2 sm:$0x7f]
        %v1090 = vmax.f32 %v1087, %v1089
        %1091 = vst [vmem:[#allocation2 + $0x8] sm:$0x1] 0.0
        %v1092 = vld [vmem:[%s2 + $0x7] sm:$0x1]
        %v1093 = vlaneseq
        %v1094 = vshrl.u32 %v1093, 7
        %v1095 = vsub.s32 0, %v1094
        %v1096 = vrot.slane %v1092, %v1095
        %v1097 = vmul.f32 %v1090, %v1096
        %v1098 = vld [vmem:[%s2 + $0x8] sm:$0x1]
        %v1099 = vlaneseq
        %v1100 = vshrl.u32 %v1099, 7
        %v1101 = vsub.s32 0, %v1100
        %v1102 = vrot.slane %v1098, %v1101
        %v1103 = vadd.f32 %v1097, %v1102
        %v1104 = vmax.f32 %v1103, 0.0
        %1105 = vst [vmem:[#allocation2 + $0x1] sm:$0x7f] %v1104
        %v1106 = vld [vmem:[#allocation2] sm:$0x7f]
        %s1107 = scalar_lea.vmem %s1, 1152
        %v1108 = vld [vmem:[%s1107] sm:$0xff]
        %v1109 = vld [vmem:[%s1107 + $0x8] sm:$0xff]
        %v1110 = vld [vmem:[%s1107 + $0x10] sm:$0xff]
        %v1111 = vld [vmem:[%s1107 + $0x18] sm:$0xff]
        %v1112 = vld [vmem:[%s1107 + $0x20] sm:$0xff]
        %v1113 = vld [vmem:[%s1107 + $0x28] sm:$0xff]
        %v1114 = vld [vmem:[%s1107 + $0x30] sm:$0xff]
        %v1115 = vld [vmem:[%s1107 + $0x38] sm:$0xff]
        %v1116 = vld [vmem:[%s1107 + $0x40] sm:$0xff]
        %v1117 = vld [vmem:[%s1107 + $0x48] sm:$0xff]
        %v1118 = vld [vmem:[%s1107 + $0x50] sm:$0xff]
        %v1119 = vld [vmem:[%s1107 + $0x58] sm:$0xff]
        %v1120 = vld [vmem:[%s1107 + $0x60] sm:$0xff]
        %v1121 = vld [vmem:[%s1107 + $0x68] sm:$0xff]
        %v1122 = vld [vmem:[%s1107 + $0x70] sm:$0xff]
        %v1123 = vld [vmem:[%s1107 + $0x78] sm:$0xff]
        %v1124 = vld [vmem:[#allocation2 + $0x1] sm:$0x7f]
        %s1125 = scalar_lea.vmem %s1, 1280
        %v1126 = vld [vmem:[%s1125] sm:$0xff]
        %v1127 = vld [vmem:[%s1125 + $0x8] sm:$0xff]
        %v1128 = vld [vmem:[%s1125 + $0x10] sm:$0xff]
        %v1129 = vld [vmem:[%s1125 + $0x18] sm:$0xff]
        %v1130 = vld [vmem:[%s1125 + $0x20] sm:$0xff]
        %v1131 = vld [vmem:[%s1125 + $0x28] sm:$0xff]
        %v1132 = vld [vmem:[%s1125 + $0x30] sm:$0xff]
        %v1133 = vld [vmem:[%s1125 + $0x38] sm:$0xff]
        %v1134 = vld [vmem:[%s1125 + $0x40] sm:$0xff]
        %v1135 = vld [vmem:[%s1125 + $0x48] sm:$0xff]
        %v1136 = vld [vmem:[%s1125 + $0x50] sm:$0xff]
        %v1137 = vld [vmem:[%s1125 + $0x58] sm:$0xff]
        %v1138 = vld [vmem:[%s1125 + $0x60] sm:$0xff]
        %v1139 = vld [vmem:[%s1125 + $0x68] sm:$0xff]
        %v1140 = vld [vmem:[%s1125 + $0x70] sm:$0xff]
        %v1141 = vld [vmem:[%s1125 + $0x78] sm:$0xff]
        %1142 = vmatprep.subr.mxu0 0.0
        %1143 = vmatpush1.msra.mxu0 %v1141
        %1144 = vmatprep.subr.mxu0 0.0
        %1145 = vmatpush1.msra.mxu0 %v1140
        %1146 = vmatprep.subr.mxu0 0.0
        %1147 = vmatpush1.msra.mxu0 %v1139
        %1148 = vmatprep.subr.mxu0 0.0
        %1149 = vmatpush1.msra.mxu0 %v1138
        %1150 = vmatprep.subr.mxu0 0.0
        %1151 = vmatpush1.msra.mxu0 %v1137
        %1152 = vmatprep.subr.mxu0 0.0
        %1153 = vmatpush1.msra.mxu0 %v1136
        %1154 = vmatprep.subr.mxu0 0.0
        %1155 = vmatpush1.msra.mxu0 %v1135
        %1156 = vmatprep.subr.mxu0 0.0
        %1157 = vmatpush1.msra.mxu0 %v1134
        %1158 = vmatprep.subr.mxu0 0.0
        %1159 = vmatpush1.msra.mxu0 %v1133
        %1160 = vmatprep.subr.mxu0 0.0
        %1161 = vmatpush1.msra.mxu0 %v1132
        %1162 = vmatprep.subr.mxu0 0.0
        %1163 = vmatpush1.msra.mxu0 %v1131
        %1164 = vmatprep.subr.mxu0 0.0
        %1165 = vmatpush1.msra.mxu0 %v1130
        %1166 = vmatprep.subr.mxu0 0.0
        %1167 = vmatpush1.msra.mxu0 %v1129
        %1168 = vmatprep.subr.mxu0 0.0
        %1169 = vmatpush1.msra.mxu0 %v1128
        %1170 = vmatprep.subr.mxu0 0.0
        %1171 = vmatpush1.msra.mxu0 %v1127
        %1172 = vmatprep.subr.mxu0 0.0
        %1173 = vmatpush1.msra.mxu0 %v1126
        %1174 = vmatprep.subr.mxu0 0.0
        %1175 = vmatpush2.msra.mxu0 0.0
        %1176 = vmatprep.subr.mxu0 0.0
        %1177 = vmatpush2.msra.mxu0 0.0
        %1178 = vmatprep.subr.mxu0 0.0
        %1179 = vmatpush2.msra.mxu0 0.0
        %1180 = vmatprep.subr.mxu0 0.0
        %1181 = vmatpush2.msra.mxu0 0.0
        %1182 = vmatprep.subr.mxu0 0.0
        %1183 = vmatpush2.msra.mxu0 0.0
        %1184 = vmatprep.subr.mxu0 0.0
        %1185 = vmatpush2.msra.mxu0 0.0
        %1186 = vmatprep.subr.mxu0 0.0
        %1187 = vmatpush2.msra.mxu0 0.0
        %1188 = vmatprep.subr.mxu0 0.0
        %1189 = vmatpush2.msra.mxu0 0.0
        %1190 = vmatprep.subr.mxu0 0.0
        %1191 = vmatpush2.msra.mxu0 0.0
        %1192 = vmatprep.subr.mxu0 0.0
        %1193 = vmatpush2.msra.mxu0 0.0
        %1194 = vmatprep.subr.mxu0 0.0
        %1195 = vmatpush2.msra.mxu0 0.0
        %1196 = vmatprep.subr.mxu0 0.0
        %1197 = vmatpush2.msra.mxu0 0.0
        %1198 = vmatprep.subr.mxu0 0.0
        %1199 = vmatpush2.msra.mxu0 0.0
        %1200 = vmatprep.subr.mxu0 0.0
        %1201 = vmatpush2.msra.mxu0 0.0
        %1202 = vmatprep.subr.mxu0 0.0
        %1203 = vmatpush2.msra.mxu0 0.0
        %1204 = vmatprep.subr.mxu0 0.0
        %1205 = vmatpush2.msra.mxu0 0.0
        %1206 = vmatprep.mubr.f32.mxu0 0.0
        %1207 = vmatmul.mubr.f32.gmra.mxu0 %v1124
        %v1208 = vpop.f32.mrf.mxu0
        %v1209 = vadd.f32 0.0, %v1208
        %v1210 = vpop.f32.mrf.mxu0
        %1211 = vdwg.mxu0
        %1212 = vmatprep.subr.mxu0 0.0
        %1213 = vmatpush1.msra.mxu0 %v1123
        %1214 = vmatprep.subr.mxu0 0.0
        %1215 = vmatpush1.msra.mxu0 %v1122
        %1216 = vmatprep.subr.mxu0 0.0
        %1217 = vmatpush1.msra.mxu0 %v1121
        %1218 = vmatprep.subr.mxu0 0.0
        %1219 = vmatpush1.msra.mxu0 %v1120
        %1220 = vmatprep.subr.mxu0 0.0
        %1221 = vmatpush1.msra.mxu0 %v1119
        %1222 = vmatprep.subr.mxu0 0.0
        %1223 = vmatpush1.msra.mxu0 %v1118
        %1224 = vmatprep.subr.mxu0 0.0
        %1225 = vmatpush1.msra.mxu0 %v1117
        %1226 = vmatprep.subr.mxu0 0.0
        %1227 = vmatpush1.msra.mxu0 %v1116
        %1228 = vmatprep.subr.mxu0 0.0
        %1229 = vmatpush1.msra.mxu0 %v1115
        %1230 = vmatprep.subr.mxu0 0.0
        %1231 = vmatpush1.msra.mxu0 %v1114
        %1232 = vmatprep.subr.mxu0 0.0
        %1233 = vmatpush1.msra.mxu0 %v1113
        %1234 = vmatprep.subr.mxu0 0.0
        %1235 = vmatpush1.msra.mxu0 %v1112
        %1236 = vmatprep.subr.mxu0 0.0
        %1237 = vmatpush1.msra.mxu0 %v1111
        %1238 = vmatprep.subr.mxu0 0.0
        %1239 = vmatpush1.msra.mxu0 %v1110
        %1240 = vmatprep.subr.mxu0 0.0
        %1241 = vmatpush1.msra.mxu0 %v1109
        %1242 = vmatprep.subr.mxu0 0.0
        %1243 = vmatpush1.msra.mxu0 %v1108
        %1244 = vmatprep.subr.mxu0 0.0
        %1245 = vmatpush2.msra.mxu0 0.0
        %1246 = vmatprep.subr.mxu0 0.0
        %1247 = vmatpush2.msra.mxu0 0.0
        %1248 = vmatprep.subr.mxu0 0.0
        %1249 = vmatpush2.msra.mxu0 0.0
        %1250 = vmatprep.subr.mxu0 0.0
        %1251 = vmatpush2.msra.mxu0 0.0
        %1252 = vmatprep.subr.mxu0 0.0
        %1253 = vmatpush2.msra.mxu0 0.0
        %1254 = vmatprep.subr.mxu0 0.0
        %1255 = vmatpush2.msra.mxu0 0.0
        %1256 = vmatprep.subr.mxu0 0.0
        %1257 = vmatpush2.msra.mxu0 0.0
        %1258 = vmatprep.subr.mxu0 0.0
        %1259 = vmatpush2.msra.mxu0 0.0
        %1260 = vmatprep.subr.mxu0 0.0
        %1261 = vmatpush2.msra.mxu0 0.0
        %1262 = vmatprep.subr.mxu0 0.0
        %1263 = vmatpush2.msra.mxu0 0.0
        %1264 = vmatprep.subr.mxu0 0.0
        %1265 = vmatpush2.msra.mxu0 0.0
        %1266 = vmatprep.subr.mxu0 0.0
        %1267 = vmatpush2.msra.mxu0 0.0
        %1268 = vmatprep.subr.mxu0 0.0
        %1269 = vmatpush2.msra.mxu0 0.0
        %1270 = vmatprep.subr.mxu0 0.0
        %1271 = vmatpush2.msra.mxu0 0.0
        %1272 = vmatprep.subr.mxu0 0.0
        %1273 = vmatpush2.msra.mxu0 0.0
        %1274 = vmatprep.subr.mxu0 0.0
        %1275 = vmatpush2.msra.mxu0 0.0
        %1276 = vmatprep.mubr.f32.mxu0 0.0
        %1277 = vmatmul.mubr.f32.gmra.mxu0 %v1106
        %v1278 = vpop.f32.mrf.mxu0
        %v1279 = vadd.f32 %v1209, %v1278
        %v1280 = vpop.f32.mrf.mxu0
        %1281 = vdwg.mxu0
        %v1282 = vld [vmem:[#allocation2 + $0x2] sm:$0x7f]
        %s1283 = scalar_lea.vmem %s1, 1408
        %v1284 = vld [vmem:[%s1283] sm:$0xff]
        %v1285 = vld [vmem:[%s1283 + $0x8] sm:$0xff]
        %v1286 = vld [vmem:[%s1283 + $0x10] sm:$0xff]
        %v1287 = vld [vmem:[%s1283 + $0x18] sm:$0xff]
        %v1288 = vld [vmem:[%s1283 + $0x20] sm:$0xff]
        %v1289 = vld [vmem:[%s1283 + $0x28] sm:$0xff]
        %v1290 = vld [vmem:[%s1283 + $0x30] sm:$0xff]
        %v1291 = vld [vmem:[%s1283 + $0x38] sm:$0xff]
        %v1292 = vld [vmem:[%s1283 + $0x40] sm:$0xff]
        %v1293 = vld [vmem:[%s1283 + $0x48] sm:$0xff]
        %v1294 = vld [vmem:[%s1283 + $0x50] sm:$0xff]
        %v1295 = vld [vmem:[%s1283 + $0x58] sm:$0xff]
        %v1296 = vld [vmem:[%s1283 + $0x60] sm:$0xff]
        %v1297 = vld [vmem:[%s1283 + $0x68] sm:$0xff]
        %v1298 = vld [vmem:[%s1283 + $0x70] sm:$0xff]
        %v1299 = vld [vmem:[%s1283 + $0x78] sm:$0xff]
        %1300 = vmatprep.subr.mxu0 0.0
        %1301 = vmatpush1.msra.mxu0 %v1299
        %1302 = vmatprep.subr.mxu0 0.0
        %1303 = vmatpush1.msra.mxu0 %v1298
        %1304 = vmatprep.subr.mxu0 0.0
        %1305 = vmatpush1.msra.mxu0 %v1297
        %1306 = vmatprep.subr.mxu0 0.0
        %1307 = vmatpush1.msra.mxu0 %v1296
        %1308 = vmatprep.subr.mxu0 0.0
        %1309 = vmatpush1.msra.mxu0 %v1295
        %1310 = vmatprep.subr.mxu0 0.0
        %1311 = vmatpush1.msra.mxu0 %v1294
        %1312 = vmatprep.subr.mxu0 0.0
        %1313 = vmatpush1.msra.mxu0 %v1293
        %1314 = vmatprep.subr.mxu0 0.0
        %1315 = vmatpush1.msra.mxu0 %v1292
        %1316 = vmatprep.subr.mxu0 0.0
        %1317 = vmatpush1.msra.mxu0 %v1291
        %1318 = vmatprep.subr.mxu0 0.0
        %1319 = vmatpush1.msra.mxu0 %v1290
        %1320 = vmatprep.subr.mxu0 0.0
        %1321 = vmatpush1.msra.mxu0 %v1289
        %1322 = vmatprep.subr.mxu0 0.0
        %1323 = vmatpush1.msra.mxu0 %v1288
        %1324 = vmatprep.subr.mxu0 0.0
        %1325 = vmatpush1.msra.mxu0 %v1287
        %1326 = vmatprep.subr.mxu0 0.0
        %1327 = vmatpush1.msra.mxu0 %v1286
        %1328 = vmatprep.subr.mxu0 0.0
        %1329 = vmatpush1.msra.mxu0 %v1285
        %1330 = vmatprep.subr.mxu0 0.0
        %1331 = vmatpush1.msra.mxu0 %v1284
        %1332 = vmatprep.subr.mxu0 0.0
        %1333 = vmatpush2.msra.mxu0 0.0
        %1334 = vmatprep.subr.mxu0 0.0
        %1335 = vmatpush2.msra.mxu0 0.0
        %1336 = vmatprep.subr.mxu0 0.0
        %1337 = vmatpush2.msra.mxu0 0.0
        %1338 = vmatprep.subr.mxu0 0.0
        %1339 = vmatpush2.msra.mxu0 0.0
        %1340 = vmatprep.subr.mxu0 0.0
        %1341 = vmatpush2.msra.mxu0 0.0
        %1342 = vmatprep.subr.mxu0 0.0
        %1343 = vmatpush2.msra.mxu0 0.0
        %1344 = vmatprep.subr.mxu0 0.0
        %1345 = vmatpush2.msra.mxu0 0.0
        %1346 = vmatprep.subr.mxu0 0.0
        %1347 = vmatpush2.msra.mxu0 0.0
        %1348 = vmatprep.subr.mxu0 0.0
        %1349 = vmatpush2.msra.mxu0 0.0
        %1350 = vmatprep.subr.mxu0 0.0
        %1351 = vmatpush2.msra.mxu0 0.0
        %1352 = vmatprep.subr.mxu0 0.0
        %1353 = vmatpush2.msra.mxu0 0.0
        %1354 = vmatprep.subr.mxu0 0.0
        %1355 = vmatpush2.msra.mxu0 0.0
        %1356 = vmatprep.subr.mxu0 0.0
        %1357 = vmatpush2.msra.mxu0 0.0
        %1358 = vmatprep.subr.mxu0 0.0
        %1359 = vmatpush2.msra.mxu0 0.0
        %1360 = vmatprep.subr.mxu0 0.0
        %1361 = vmatpush2.msra.mxu0 0.0
        %1362 = vmatprep.subr.mxu0 0.0
        %1363 = vmatpush2.msra.mxu0 0.0
        %1364 = vmatprep.mubr.f32.mxu0 0.0
        %1365 = vmatmul.mubr.f32.gmra.mxu0 %v1282
        %v1366 = vpop.f32.mrf.mxu0
        %v1367 = vadd.f32 0.0, %v1366
        %v1368 = vpop.f32.mrf.mxu0
        %1369 = vdwg.mxu0
        %v1370 = vadd.f32 %v1279, %v1367
        %v1371 = vld [vmem:[%s2 + $0x9] sm:$0x1]
        %v1372 = vlaneseq
        %v1373 = vshrl.u32 %v1372, 7
        %v1374 = vsub.s32 0, %v1373
        %v1375 = vrot.slane %v1371, %v1374
        %v1376 = vadd.f32 %v1370, %v1375
        %v1377 = vld [vmem:[%s2 + $0xa] sm:$0x1]
        %v1378 = vlaneseq
        %v1379 = vshrl.u32 %v1378, 7
        %v1380 = vsub.s32 0, %v1379
        %v1381 = vrot.slane %v1377, %v1380
        %v1382 = vmul.f32 %v1376, %v1381
        %v1383 = vld [vmem:[%s2 + $0xb] sm:$0x1]
        %v1384 = vlaneseq
        %v1385 = vshrl.u32 %v1384, 7
        %v1386 = vsub.s32 0, %v1385
        %v1387 = vrot.slane %v1383, %v1386
        %v1388 = vadd.f32 %v1382, %v1387
        %v1389 = vmax.f32 %v1388, 0.0
        %1390 = vst [vmem:[#allocation2 + $0x1] sm:$0x7f] %v1389
        %v1391 = vld [vmem:[#allocation2] sm:$0x7f]
        %s1392 = scalar_lea.vmem %s1, 1536
        %v1393 = vld [vmem:[%s1392] sm:$0xff]
        %v1394 = vld [vmem:[%s1392 + $0x8] sm:$0xff]
        %v1395 = vld [vmem:[%s1392 + $0x10] sm:$0xff]
        %v1396 = vld [vmem:[%s1392 + $0x18] sm:$0xff]
        %v1397 = vld [vmem:[%s1392 + $0x20] sm:$0xff]
        %v1398 = vld [vmem:[%s1392 + $0x28] sm:$0xff]
        %v1399 = vld [vmem:[%s1392 + $0x30] sm:$0xff]
        %v1400 = vld [vmem:[%s1392 + $0x38] sm:$0xff]
        %v1401 = vld [vmem:[%s1392 + $0x40] sm:$0xff]
        %v1402 = vld [vmem:[%s1392 + $0x48] sm:$0xff]
        %v1403 = vld [vmem:[%s1392 + $0x50] sm:$0xff]
        %v1404 = vld [vmem:[%s1392 + $0x58] sm:$0xff]
        %v1405 = vld [vmem:[%s1392 + $0x60] sm:$0xff]
        %v1406 = vld [vmem:[%s1392 + $0x68] sm:$0xff]
        %v1407 = vld [vmem:[%s1392 + $0x70] sm:$0xff]
        %v1408 = vld [vmem:[%s1392 + $0x78] sm:$0xff]
        %v1409 = vld [vmem:[#allocation2 + $0x1] sm:$0x7f]
        %s1410 = scalar_lea.vmem %s1, 1664
        %v1411 = vld [vmem:[%s1410] sm:$0xff]
        %v1412 = vld [vmem:[%s1410 + $0x8] sm:$0xff]
        %v1413 = vld [vmem:[%s1410 + $0x10] sm:$0xff]
        %v1414 = vld [vmem:[%s1410 + $0x18] sm:$0xff]
        %v1415 = vld [vmem:[%s1410 + $0x20] sm:$0xff]
        %v1416 = vld [vmem:[%s1410 + $0x28] sm:$0xff]
        %v1417 = vld [vmem:[%s1410 + $0x30] sm:$0xff]
        %v1418 = vld [vmem:[%s1410 + $0x38] sm:$0xff]
        %v1419 = vld [vmem:[%s1410 + $0x40] sm:$0xff]
        %v1420 = vld [vmem:[%s1410 + $0x48] sm:$0xff]
        %v1421 = vld [vmem:[%s1410 + $0x50] sm:$0xff]
        %v1422 = vld [vmem:[%s1410 + $0x58] sm:$0xff]
        %v1423 = vld [vmem:[%s1410 + $0x60] sm:$0xff]
        %v1424 = vld [vmem:[%s1410 + $0x68] sm:$0xff]
        %v1425 = vld [vmem:[%s1410 + $0x70] sm:$0xff]
        %v1426 = vld [vmem:[%s1410 + $0x78] sm:$0xff]
        %1427 = vmatprep.subr.mxu0 0.0
        %1428 = vmatpush1.msra.mxu0 %v1426
        %1429 = vmatprep.subr.mxu0 0.0
        %1430 = vmatpush1.msra.mxu0 %v1425
        %1431 = vmatprep.subr.mxu0 0.0
        %1432 = vmatpush1.msra.mxu0 %v1424
        %1433 = vmatprep.subr.mxu0 0.0
        %1434 = vmatpush1.msra.mxu0 %v1423
        %1435 = vmatprep.subr.mxu0 0.0
        %1436 = vmatpush1.msra.mxu0 %v1422
        %1437 = vmatprep.subr.mxu0 0.0
        %1438 = vmatpush1.msra.mxu0 %v1421
        %1439 = vmatprep.subr.mxu0 0.0
        %1440 = vmatpush1.msra.mxu0 %v1420
        %1441 = vmatprep.subr.mxu0 0.0
        %1442 = vmatpush1.msra.mxu0 %v1419
        %1443 = vmatprep.subr.mxu0 0.0
        %1444 = vmatpush1.msra.mxu0 %v1418
        %1445 = vmatprep.subr.mxu0 0.0
        %1446 = vmatpush1.msra.mxu0 %v1417
        %1447 = vmatprep.subr.mxu0 0.0
        %1448 = vmatpush1.msra.mxu0 %v1416
        %1449 = vmatprep.subr.mxu0 0.0
        %1450 = vmatpush1.msra.mxu0 %v1415
        %1451 = vmatprep.subr.mxu0 0.0
        %1452 = vmatpush1.msra.mxu0 %v1414
        %1453 = vmatprep.subr.mxu0 0.0
        %1454 = vmatpush1.msra.mxu0 %v1413
        %1455 = vmatprep.subr.mxu0 0.0
        %1456 = vmatpush1.msra.mxu0 %v1412
        %1457 = vmatprep.subr.mxu0 0.0
        %1458 = vmatpush1.msra.mxu0 %v1411
        %1459 = vmatprep.subr.mxu0 0.0
        %1460 = vmatpush2.msra.mxu0 0.0
        %1461 = vmatprep.subr.mxu0 0.0
        %1462 = vmatpush2.msra.mxu0 0.0
        %1463 = vmatprep.subr.mxu0 0.0
        %1464 = vmatpush2.msra.mxu0 0.0
        %1465 = vmatprep.subr.mxu0 0.0
        %1466 = vmatpush2.msra.mxu0 0.0
        %1467 = vmatprep.subr.mxu0 0.0
        %1468 = vmatpush2.msra.mxu0 0.0
        %1469 = vmatprep.subr.mxu0 0.0
        %1470 = vmatpush2.msra.mxu0 0.0
        %1471 = vmatprep.subr.mxu0 0.0
        %1472 = vmatpush2.msra.mxu0 0.0
        %1473 = vmatprep.subr.mxu0 0.0
        %1474 = vmatpush2.msra.mxu0 0.0
        %1475 = vmatprep.subr.mxu0 0.0
        %1476 = vmatpush2.msra.mxu0 0.0
        %1477 = vmatprep.subr.mxu0 0.0
        %1478 = vmatpush2.msra.mxu0 0.0
        %1479 = vmatprep.subr.mxu0 0.0
        %1480 = vmatpush2.msra.mxu0 0.0
        %1481 = vmatprep.subr.mxu0 0.0
        %1482 = vmatpush2.msra.mxu0 0.0
        %1483 = vmatprep.subr.mxu0 0.0
        %1484 = vmatpush2.msra.mxu0 0.0
        %1485 = vmatprep.subr.mxu0 0.0
        %1486 = vmatpush2.msra.mxu0 0.0
        %1487 = vmatprep.subr.mxu0 0.0
        %1488 = vmatpush2.msra.mxu0 0.0
        %1489 = vmatprep.subr.mxu0 0.0
        %1490 = vmatpush2.msra.mxu0 0.0
        %1491 = vmatprep.mubr.f32.mxu0 0.0
        %1492 = vmatmul.mubr.f32.gmra.mxu0 %v1409
        %v1493 = vpop.f32.mrf.mxu0
        %v1494 = vadd.f32 0.0, %v1493
        %v1495 = vpop.f32.mrf.mxu0
        %1496 = vdwg.mxu0
        %1497 = vmatprep.subr.mxu0 0.0
        %1498 = vmatpush1.msra.mxu0 %v1408
        %1499 = vmatprep.subr.mxu0 0.0
        %1500 = vmatpush1.msra.mxu0 %v1407
        %1501 = vmatprep.subr.mxu0 0.0
        %1502 = vmatpush1.msra.mxu0 %v1406
        %1503 = vmatprep.subr.mxu0 0.0
        %1504 = vmatpush1.msra.mxu0 %v1405
        %1505 = vmatprep.subr.mxu0 0.0
        %1506 = vmatpush1.msra.mxu0 %v1404
        %1507 = vmatprep.subr.mxu0 0.0
        %1508 = vmatpush1.msra.mxu0 %v1403
        %1509 = vmatprep.subr.mxu0 0.0
        %1510 = vmatpush1.msra.mxu0 %v1402
        %1511 = vmatprep.subr.mxu0 0.0
        %1512 = vmatpush1.msra.mxu0 %v1401
        %1513 = vmatprep.subr.mxu0 0.0
        %1514 = vmatpush1.msra.mxu0 %v1400
        %1515 = vmatprep.subr.mxu0 0.0
        %1516 = vmatpush1.msra.mxu0 %v1399
        %1517 = vmatprep.subr.mxu0 0.0
        %1518 = vmatpush1.msra.mxu0 %v1398
        %1519 = vmatprep.subr.mxu0 0.0
        %1520 = vmatpush1.msra.mxu0 %v1397
        %1521 = vmatprep.subr.mxu0 0.0
        %1522 = vmatpush1.msra.mxu0 %v1396
        %1523 = vmatprep.subr.mxu0 0.0
        %1524 = vmatpush1.msra.mxu0 %v1395
        %1525 = vmatprep.subr.mxu0 0.0
        %1526 = vmatpush1.msra.mxu0 %v1394
        %1527 = vmatprep.subr.mxu0 0.0
        %1528 = vmatpush1.msra.mxu0 %v1393
        %1529 = vmatprep.subr.mxu0 0.0
        %1530 = vmatpush2.msra.mxu0 0.0
        %1531 = vmatprep.subr.mxu0 0.0
        %1532 = vmatpush2.msra.mxu0 0.0
        %1533 = vmatprep.subr.mxu0 0.0
        %1534 = vmatpush2.msra.mxu0 0.0
        %1535 = vmatprep.subr.mxu0 0.0
        %1536 = vmatpush2.msra.mxu0 0.0
        %1537 = vmatprep.subr.mxu0 0.0
        %1538 = vmatpush2.msra.mxu0 0.0
        %1539 = vmatprep.subr.mxu0 0.0
        %1540 = vmatpush2.msra.mxu0 0.0
        %1541 = vmatprep.subr.mxu0 0.0
        %1542 = vmatpush2.msra.mxu0 0.0
        %1543 = vmatprep.subr.mxu0 0.0
        %1544 = vmatpush2.msra.mxu0 0.0
        %1545 = vmatprep.subr.mxu0 0.0
        %1546 = vmatpush2.msra.mxu0 0.0
        %1547 = vmatprep.subr.mxu0 0.0
        %1548 = vmatpush2.msra.mxu0 0.0
        %1549 = vmatprep.subr.mxu0 0.0
        %1550 = vmatpush2.msra.mxu0 0.0
        %1551 = vmatprep.subr.mxu0 0.0
        %1552 = vmatpush2.msra.mxu0 0.0
        %1553 = vmatprep.subr.mxu0 0.0
        %1554 = vmatpush2.msra.mxu0 0.0
        %1555 = vmatprep.subr.mxu0 0.0
        %1556 = vmatpush2.msra.mxu0 0.0
        %1557 = vmatprep.subr.mxu0 0.0
        %1558 = vmatpush2.msra.mxu0 0.0
        %1559 = vmatprep.subr.mxu0 0.0
        %1560 = vmatpush2.msra.mxu0 0.0
        %1561 = vmatprep.mubr.f32.mxu0 0.0
        %1562 = vmatmul.mubr.f32.gmra.mxu0 %v1391
        %v1563 = vpop.f32.mrf.mxu0
        %v1564 = vadd.f32 %v1494, %v1563
        %v1565 = vpop.f32.mrf.mxu0
        %1566 = vdwg.mxu0
        %v1567 = vld [vmem:[#allocation2 + $0x2] sm:$0x7f]
        %s1568 = scalar_lea.vmem %s1, 1792
        %v1569 = vld [vmem:[%s1568] sm:$0xff]
        %v1570 = vld [vmem:[%s1568 + $0x8] sm:$0xff]
        %v1571 = vld [vmem:[%s1568 + $0x10] sm:$0xff]
        %v1572 = vld [vmem:[%s1568 + $0x18] sm:$0xff]
        %v1573 = vld [vmem:[%s1568 + $0x20] sm:$0xff]
        %v1574 = vld [vmem:[%s1568 + $0x28] sm:$0xff]
        %v1575 = vld [vmem:[%s1568 + $0x30] sm:$0xff]
        %v1576 = vld [vmem:[%s1568 + $0x38] sm:$0xff]
        %v1577 = vld [vmem:[%s1568 + $0x40] sm:$0xff]
        %v1578 = vld [vmem:[%s1568 + $0x48] sm:$0xff]
        %v1579 = vld [vmem:[%s1568 + $0x50] sm:$0xff]
        %v1580 = vld [vmem:[%s1568 + $0x58] sm:$0xff]
        %v1581 = vld [vmem:[%s1568 + $0x60] sm:$0xff]
        %v1582 = vld [vmem:[%s1568 + $0x68] sm:$0xff]
        %v1583 = vld [vmem:[%s1568 + $0x70] sm:$0xff]
        %v1584 = vld [vmem:[%s1568 + $0x78] sm:$0xff]
        %1585 = vmatprep.subr.mxu0 0.0
        %1586 = vmatpush1.msra.mxu0 %v1584
        %1587 = vmatprep.subr.mxu0 0.0
        %1588 = vmatpush1.msra.mxu0 %v1583
        %1589 = vmatprep.subr.mxu0 0.0
        %1590 = vmatpush1.msra.mxu0 %v1582
        %1591 = vmatprep.subr.mxu0 0.0
        %1592 = vmatpush1.msra.mxu0 %v1581
        %1593 = vmatprep.subr.mxu0 0.0
        %1594 = vmatpush1.msra.mxu0 %v1580
        %1595 = vmatprep.subr.mxu0 0.0
        %1596 = vmatpush1.msra.mxu0 %v1579
        %1597 = vmatprep.subr.mxu0 0.0
        %1598 = vmatpush1.msra.mxu0 %v1578
        %1599 = vmatprep.subr.mxu0 0.0
        %1600 = vmatpush1.msra.mxu0 %v1577
        %1601 = vmatprep.subr.mxu0 0.0
        %1602 = vmatpush1.msra.mxu0 %v1576
        %1603 = vmatprep.subr.mxu0 0.0
        %1604 = vmatpush1.msra.mxu0 %v1575
        %1605 = vmatprep.subr.mxu0 0.0
        %1606 = vmatpush1.msra.mxu0 %v1574
        %1607 = vmatprep.subr.mxu0 0.0
        %1608 = vmatpush1.msra.mxu0 %v1573
        %1609 = vmatprep.subr.mxu0 0.0
        %1610 = vmatpush1.msra.mxu0 %v1572
        %1611 = vmatprep.subr.mxu0 0.0
        %1612 = vmatpush1.msra.mxu0 %v1571
        %1613 = vmatprep.subr.mxu0 0.0
        %1614 = vmatpush1.msra.mxu0 %v1570
        %1615 = vmatprep.subr.mxu0 0.0
        %1616 = vmatpush1.msra.mxu0 %v1569
        %1617 = vmatprep.subr.mxu0 0.0
        %1618 = vmatpush2.msra.mxu0 0.0
        %1619 = vmatprep.subr.mxu0 0.0
        %1620 = vmatpush2.msra.mxu0 0.0
        %1621 = vmatprep.subr.mxu0 0.0
        %1622 = vmatpush2.msra.mxu0 0.0
        %1623 = vmatprep.subr.mxu0 0.0
        %1624 = vmatpush2.msra.mxu0 0.0
        %1625 = vmatprep.subr.mxu0 0.0
        %1626 = vmatpush2.msra.mxu0 0.0
        %1627 = vmatprep.subr.mxu0 0.0
        %1628 = vmatpush2.msra.mxu0 0.0
        %1629 = vmatprep.subr.mxu0 0.0
        %1630 = vmatpush2.msra.mxu0 0.0
        %1631 = vmatprep.subr.mxu0 0.0
        %1632 = vmatpush2.msra.mxu0 0.0
        %1633 = vmatprep.subr.mxu0 0.0
        %1634 = vmatpush2.msra.mxu0 0.0
        %1635 = vmatprep.subr.mxu0 0.0
        %1636 = vmatpush2.msra.mxu0 0.0
        %1637 = vmatprep.subr.mxu0 0.0
        %1638 = vmatpush2.msra.mxu0 0.0
        %1639 = vmatprep.subr.mxu0 0.0
        %1640 = vmatpush2.msra.mxu0 0.0
        %1641 = vmatprep.subr.mxu0 0.0
        %1642 = vmatpush2.msra.mxu0 0.0
        %1643 = vmatprep.subr.mxu0 0.0
        %1644 = vmatpush2.msra.mxu0 0.0
        %1645 = vmatprep.subr.mxu0 0.0
        %1646 = vmatpush2.msra.mxu0 0.0
        %1647 = vmatprep.subr.mxu0 0.0
        %1648 = vmatpush2.msra.mxu0 0.0
        %1649 = vmatprep.mubr.f32.mxu0 0.0
        %1650 = vmatmul.mubr.f32.gmra.mxu0 %v1567
        %v1651 = vpop.f32.mrf.mxu0
        %v1652 = vadd.f32 0.0, %v1651
        %v1653 = vpop.f32.mrf.mxu0
        %1654 = vdwg.mxu0
        %v1655 = vadd.f32 %v1564, %v1652
        %v1656 = vld [vmem:[%s2 + $0xc] sm:$0x1]
        %v1657 = vlaneseq
        %v1658 = vshrl.u32 %v1657, 7
        %v1659 = vsub.s32 0, %v1658
        %v1660 = vrot.slane %v1656, %v1659
        %v1661 = vadd.f32 %v1655, %v1660
        %v1662 = vadd.f32 %v1090, %v1661
        %1663 = vst [vmem:[#allocation2 + $0x1] sm:$0x7f] %v1662
        %1664 = vst [vmem:[#allocation2 + $0x8] sm:$0x1] 0.0
        %v1665 = vld [vmem:[%s1083] ss:$2 sm:$0x7]
        %s1666 = scalar_lea.vmem [#allocation2], 2
        %v1667 = vld [vmem:[%s1666] ss:$2 sm:$0x7]
        %v1668 = vmax.f32 %v1665, %v1667
        %v1669 = vld [vmem:[%s1088] ss:$2 sm:$0x7]
        %v1670 = vmax.f32 %v1668, %v1669
        %1671 = vst [vmem:[#allocation2 + $0x4] sm:$0x1] 0.0
        %v1672 = vld [vmem:[%s2 + $0x7] sm:$0x1]
        %v1673 = vlaneseq
        %v1674 = vshrl.u32 %v1673, 7
        %v1675 = vsub.s32 0, %v1674
        %v1676 = vrot.slane %v1672, %v1675
        %v1677 = vmul.f32 %v1670, %v1676
        %v1678 = vld [vmem:[%s2 + $0x8] sm:$0x1]
        %v1679 = vlaneseq
        %v1680 = vshrl.u32 %v1679, 7
        %v1681 = vsub.s32 0, %v1680
        %v1682 = vrot.slane %v1678, %v1681
        %v1683 = vadd.f32 %v1677, %v1682
        %v1684 = vmax.f32 %v1683, 0.0
        %1685 = vst [vmem:[#allocation2 + $0x1] sm:$0x7] %v1684
        %v1686 = vld [vmem:[#allocation2] sm:$0x7]
        %v1687 = vld [vmem:[%s1107] sm:$0xff]
        %v1688 = vld [vmem:[%s1107 + $0x8] sm:$0xff]
        %v1689 = vld [vmem:[%s1107 + $0x10] sm:$0xff]
        %v1690 = vld [vmem:[%s1107 + $0x18] sm:$0xff]
        %v1691 = vld [vmem:[%s1107 + $0x20] sm:$0xff]
        %v1692 = vld [vmem:[%s1107 + $0x28] sm:$0xff]
        %v1693 = vld [vmem:[%s1107 + $0x30] sm:$0xff]
        %v1694 = vld [vmem:[%s1107 + $0x38] sm:$0xff]
        %v1695 = vld [vmem:[%s1107 + $0x40] sm:$0xff]
        %v1696 = vld [vmem:[%s1107 + $0x48] sm:$0xff]
        %v1697 = vld [vmem:[%s1107 + $0x50] sm:$0xff]
        %v1698 = vld [vmem:[%s1107 + $0x58] sm:$0xff]
        %v1699 = vld [vmem:[%s1107 + $0x60] sm:$0xff]
        %v1700 = vld [vmem:[%s1107 + $0x68] sm:$0xff]
        %v1701 = vld [vmem:[%s1107 + $0x70] sm:$0xff]
        %v1702 = vld [vmem:[%s1107 + $0x78] sm:$0xff]
        %v1703 = vld [vmem:[#allocation2 + $0x1] sm:$0x7]
        %v1704 = vld [vmem:[%s1125] sm:$0xff]
        %v1705 = vld [vmem:[%s1125 + $0x8] sm:$0xff]
        %v1706 = vld [vmem:[%s1125 + $0x10] sm:$0xff]
        %v1707 = vld [vmem:[%s1125 + $0x18] sm:$0xff]
        %v1708 = vld [vmem:[%s1125 + $0x20] sm:$0xff]
        %v1709 = vld [vmem:[%s1125 + $0x28] sm:$0xff]
        %v1710 = vld [vmem:[%s1125 + $0x30] sm:$0xff]
        %v1711 = vld [vmem:[%s1125 + $0x38] sm:$0xff]
        %v1712 = vld [vmem:[%s1125 + $0x40] sm:$0xff]
        %v1713 = vld [vmem:[%s1125 + $0x48] sm:$0xff]
        %v1714 = vld [vmem:[%s1125 + $0x50] sm:$0xff]
        %v1715 = vld [vmem:[%s1125 + $0x58] sm:$0xff]
        %v1716 = vld [vmem:[%s1125 + $0x60] sm:$0xff]
        %v1717 = vld [vmem:[%s1125 + $0x68] sm:$0xff]
        %v1718 = vld [vmem:[%s1125 + $0x70] sm:$0xff]
        %v1719 = vld [vmem:[%s1125 + $0x78] sm:$0xff]
        %1720 = vmatprep.subr.mxu0 0.0
        %1721 = vmatpush1.msra.mxu0 %v1719
        %1722 = vmatprep.subr.mxu0 0.0
        %1723 = vmatpush1.msra.mxu0 %v1718
        %1724 = vmatprep.subr.mxu0 0.0
        %1725 = vmatpush1.msra.mxu0 %v1717
        %1726 = vmatprep.subr.mxu0 0.0
        %1727 = vmatpush1.msra.mxu0 %v1716
        %1728 = vmatprep.subr.mxu0 0.0
        %1729 = vmatpush1.msra.mxu0 %v1715
        %1730 = vmatprep.subr.mxu0 0.0
        %1731 = vmatpush1.msra.mxu0 %v1714
        %1732 = vmatprep.subr.mxu0 0.0
        %1733 = vmatpush1.msra.mxu0 %v1713
        %1734 = vmatprep.subr.mxu0 0.0
        %1735 = vmatpush1.msra.mxu0 %v1712
        %1736 = vmatprep.subr.mxu0 0.0
        %1737 = vmatpush1.msra.mxu0 %v1711
        %1738 = vmatprep.subr.mxu0 0.0
        %1739 = vmatpush1.msra.mxu0 %v1710
        %1740 = vmatprep.subr.mxu0 0.0
        %1741 = vmatpush1.msra.mxu0 %v1709
        %1742 = vmatprep.subr.mxu0 0.0
        %1743 = vmatpush1.msra.mxu0 %v1708
        %1744 = vmatprep.subr.mxu0 0.0
        %1745 = vmatpush1.msra.mxu0 %v1707
        %1746 = vmatprep.subr.mxu0 0.0
        %1747 = vmatpush1.msra.mxu0 %v1706
        %1748 = vmatprep.subr.mxu0 0.0
        %1749 = vmatpush1.msra.mxu0 %v1705
        %1750 = vmatprep.subr.mxu0 0.0
        %1751 = vmatpush1.msra.mxu0 %v1704
        %1752 = vmatprep.subr.mxu0 0.0
        %1753 = vmatpush2.msra.mxu0 0.0
        %1754 = vmatprep.subr.mxu0 0.0
        %1755 = vmatpush2.msra.mxu0 0.0
        %1756 = vmatprep.subr.mxu0 0.0
        %1757 = vmatpush2.msra.mxu0 0.0
        %1758 = vmatprep.subr.mxu0 0.0
        %1759 = vmatpush2.msra.mxu0 0.0
        %1760 = vmatprep.subr.mxu0 0.0
        %1761 = vmatpush2.msra.mxu0 0.0
        %1762 = vmatprep.subr.mxu0 0.0
        %1763 = vmatpush2.msra.mxu0 0.0
        %1764 = vmatprep.subr.mxu0 0.0
        %1765 = vmatpush2.msra.mxu0 0.0
        %1766 = vmatprep.subr.mxu0 0.0
        %1767 = vmatpush2.msra.mxu0 0.0
        %1768 = vmatprep.subr.mxu0 0.0
        %1769 = vmatpush2.msra.mxu0 0.0
        %1770 = vmatprep.subr.mxu0 0.0
        %1771 = vmatpush2.msra.mxu0 0.0
        %1772 = vmatprep.subr.mxu0 0.0
        %1773 = vmatpush2.msra.mxu0 0.0
        %1774 = vmatprep.subr.mxu0 0.0
        %1775 = vmatpush2.msra.mxu0 0.0
        %1776 = vmatprep.subr.mxu0 0.0
        %1777 = vmatpush2.msra.mxu0 0.0
        %1778 = vmatprep.subr.mxu0 0.0
        %1779 = vmatpush2.msra.mxu0 0.0
        %1780 = vmatprep.subr.mxu0 0.0
        %1781 = vmatpush2.msra.mxu0 0.0
        %1782 = vmatprep.subr.mxu0 0.0
        %1783 = vmatpush2.msra.mxu0 0.0
        %1784 = vmatprep.mubr.f32.mxu0 0.0
        %1785 = vmatmul.mubr.f32.gmra.mxu0 %v1703
        %v1786 = vpop.f32.mrf.mxu0
        %v1787 = vadd.f32 0.0, %v1786
        %v1788 = vpop.f32.mrf.mxu0
        %1789 = vdwg.mxu0
        %1790 = vmatprep.subr.mxu0 0.0
        %1791 = vmatpush1.msra.mxu0 %v1702
        %1792 = vmatprep.subr.mxu0 0.0
        %1793 = vmatpush1.msra.mxu0 %v1701
        %1794 = vmatprep.subr.mxu0 0.0
        %1795 = vmatpush1.msra.mxu0 %v1700
        %1796 = vmatprep.subr.mxu0 0.0
        %1797 = vmatpush1.msra.mxu0 %v1699
        %1798 = vmatprep.subr.mxu0 0.0
        %1799 = vmatpush1.msra.mxu0 %v1698
        %1800 = vmatprep.subr.mxu0 0.0
        %1801 = vmatpush1.msra.mxu0 %v1697
        %1802 = vmatprep.subr.mxu0 0.0
        %1803 = vmatpush1.msra.mxu0 %v1696
        %1804 = vmatprep.subr.mxu0 0.0
        %1805 = vmatpush1.msra.mxu0 %v1695
        %1806 = vmatprep.subr.mxu0 0.0
        %1807 = vmatpush1.msra.mxu0 %v1694
        %1808 = vmatprep.subr.mxu0 0.0
        %1809 = vmatpush1.msra.mxu0 %v1693
        %1810 = vmatprep.subr.mxu0 0.0
        %1811 = vmatpush1.msra.mxu0 %v1692
        %1812 = vmatprep.subr.mxu0 0.0
        %1813 = vmatpush1.msra.mxu0 %v1691
        %1814 = vmatprep.subr.mxu0 0.0
        %1815 = vmatpush1.msra.mxu0 %v1690
        %1816 = vmatprep.subr.mxu0 0.0
        %1817 = vmatpush1.msra.mxu0 %v1689
        %1818 = vmatprep.subr.mxu0 0.0
        %1819 = vmatpush1.msra.mxu0 %v1688
        %1820 = vmatprep.subr.mxu0 0.0
        %1821 = vmatpush1.msra.mxu0 %v1687
        %1822 = vmatprep.subr.mxu0 0.0
        %1823 = vmatpush2.msra.mxu0 0.0
        %1824 = vmatprep.subr.mxu0 0.0
        %1825 = vmatpush2.msra.mxu0 0.0
        %1826 = vmatprep.subr.mxu0 0.0
        %1827 = vmatpush2.msra.mxu0 0.0
        %1828 = vmatprep.subr.mxu0 0.0
        %1829 = vmatpush2.msra.mxu0 0.0
        %1830 = vmatprep.subr.mxu0 0.0
        %1831 = vmatpush2.msra.mxu0 0.0
        %1832 = vmatprep.subr.mxu0 0.0
        %1833 = vmatpush2.msra.mxu0 0.0
        %1834 = vmatprep.subr.mxu0 0.0
        %1835 = vmatpush2.msra.mxu0 0.0
        %1836 = vmatprep.subr.mxu0 0.0
        %1837 = vmatpush2.msra.mxu0 0.0
        %1838 = vmatprep.subr.mxu0 0.0
        %1839 = vmatpush2.msra.mxu0 0.0
        %1840 = vmatprep.subr.mxu0 0.0
        %1841 = vmatpush2.msra.mxu0 0.0
        %1842 = vmatprep.subr.mxu0 0.0
        %1843 = vmatpush2.msra.mxu0 0.0
        %1844 = vmatprep.subr.mxu0 0.0
        %1845 = vmatpush2.msra.mxu0 0.0
        %1846 = vmatprep.subr.mxu0 0.0
        %1847 = vmatpush2.msra.mxu0 0.0
        %1848 = vmatprep.subr.mxu0 0.0
        %1849 = vmatpush2.msra.mxu0 0.0
        %1850 = vmatprep.subr.mxu0 0.0
        %1851 = vmatpush2.msra.mxu0 0.0
        %1852 = vmatprep.subr.mxu0 0.0
        %1853 = vmatpush2.msra.mxu0 0.0
        %1854 = vmatprep.mubr.f32.mxu0 0.0
        %1855 = vmatmul.mubr.f32.gmra.mxu0 %v1686
        %v1856 = vpop.f32.mrf.mxu0
        %v1857 = vadd.f32 %v1787, %v1856
        %v1858 = vpop.f32.mrf.mxu0
        %1859 = vdwg.mxu0
        %v1860 = vld [vmem:[#allocation2 + $0x2] sm:$0x7]
        %v1861 = vld [vmem:[%s1283] sm:$0xff]
        %v1862 = vld [vmem:[%s1283 + $0x8] sm:$0xff]
        %v1863 = vld [vmem:[%s1283 + $0x10] sm:$0xff]
        %v1864 = vld [vmem:[%s1283 + $0x18] sm:$0xff]
        %v1865 = vld [vmem:[%s1283 + $0x20] sm:$0xff]
        %v1866 = vld [vmem:[%s1283 + $0x28] sm:$0xff]
        %v1867 = vld [vmem:[%s1283 + $0x30] sm:$0xff]
        %v1868 = vld [vmem:[%s1283 + $0x38] sm:$0xff]
        %v1869 = vld [vmem:[%s1283 + $0x40] sm:$0xff]
        %v1870 = vld [vmem:[%s1283 + $0x48] sm:$0xff]
        %v1871 = vld [vmem:[%s1283 + $0x50] sm:$0xff]
        %v1872 = vld [vmem:[%s1283 + $0x58] sm:$0xff]
        %v1873 = vld [vmem:[%s1283 + $0x60] sm:$0xff]
        %v1874 = vld [vmem:[%s1283 + $0x68] sm:$0xff]
        %v1875 = vld [vmem:[%s1283 + $0x70] sm:$0xff]
        %v1876 = vld [vmem:[%s1283 + $0x78] sm:$0xff]
        %1877 = vmatprep.subr.mxu0 0.0
        %1878 = vmatpush1.msra.mxu0 %v1876
        %1879 = vmatprep.subr.mxu0 0.0
        %1880 = vmatpush1.msra.mxu0 %v1875
        %1881 = vmatprep.subr.mxu0 0.0
        %1882 = vmatpush1.msra.mxu0 %v1874
        %1883 = vmatprep.subr.mxu0 0.0
        %1884 = vmatpush1.msra.mxu0 %v1873
        %1885 = vmatprep.subr.mxu0 0.0
        %1886 = vmatpush1.msra.mxu0 %v1872
        %1887 = vmatprep.subr.mxu0 0.0
        %1888 = vmatpush1.msra.mxu0 %v1871
        %1889 = vmatprep.subr.mxu0 0.0
        %1890 = vmatpush1.msra.mxu0 %v1870
        %1891 = vmatprep.subr.mxu0 0.0
        %1892 = vmatpush1.msra.mxu0 %v1869
        %1893 = vmatprep.subr.mxu0 0.0
        %1894 = vmatpush1.msra.mxu0 %v1868
        %1895 = vmatprep.subr.mxu0 0.0
        %1896 = vmatpush1.msra.mxu0 %v1867
        %1897 = vmatprep.subr.mxu0 0.0
        %1898 = vmatpush1.msra.mxu0 %v1866
        %1899 = vmatprep.subr.mxu0 0.0
        %1900 = vmatpush1.msra.mxu0 %v1865
        %1901 = vmatprep.subr.mxu0 0.0
        %1902 = vmatpush1.msra.mxu0 %v1864
        %1903 = vmatprep.subr.mxu0 0.0
        %1904 = vmatpush1.msra.mxu0 %v1863
        %1905 = vmatprep.subr.mxu0 0.0
        %1906 = vmatpush1.msra.mxu0 %v1862
        %1907 = vmatprep.subr.mxu0 0.0
        %1908 = vmatpush1.msra.mxu0 %v1861
        %1909 = vmatprep.subr.mxu0 0.0
        %1910 = vmatpush2.msra.mxu0 0.0
        %1911 = vmatprep.subr.mxu0 0.0
        %1912 = vmatpush2.msra.mxu0 0.0
        %1913 = vmatprep.subr.mxu0 0.0
        %1914 = vmatpush2.msra.mxu0 0.0
        %1915 = vmatprep.subr.mxu0 0.0
        %1916 = vmatpush2.msra.mxu0 0.0
        %1917 = vmatprep.subr.mxu0 0.0
        %1918 = vmatpush2.msra.mxu0 0.0
        %1919 = vmatprep.subr.mxu0 0.0
        %1920 = vmatpush2.msra.mxu0 0.0
        %1921 = vmatprep.subr.mxu0 0.0
        %1922 = vmatpush2.msra.mxu0 0.0
        %1923 = vmatprep.subr.mxu0 0.0
        %1924 = vmatpush2.msra.mxu0 0.0
        %1925 = vmatprep.subr.mxu0 0.0
        %1926 = vmatpush2.msra.mxu0 0.0
        %1927 = vmatprep.subr.mxu0 0.0
        %1928 = vmatpush2.msra.mxu0 0.0
        %1929 = vmatprep.subr.mxu0 0.0
        %1930 = vmatpush2.msra.mxu0 0.0
        %1931 = vmatprep.subr.mxu0 0.0
        %1932 = vmatpush2.msra.mxu0 0.0
        %1933 = vmatprep.subr.mxu0 0.0
        %1934 = vmatpush2.msra.mxu0 0.0
        %1935 = vmatprep.subr.mxu0 0.0
        %1936 = vmatpush2.msra.mxu0 0.0
        %1937 = vmatprep.subr.mxu0 0.0
        %1938 = vmatpush2.msra.mxu0 0.0
        %1939 = vmatprep.subr.mxu0 0.0
        %1940 = vmatpush2.msra.mxu0 0.0
        %1941 = vmatprep.mubr.f32.mxu0 0.0
        %1942 = vmatmul.mubr.f32.gmra.mxu0 %v1860
        %v1943 = vpop.f32.mrf.mxu0
        %v1944 = vadd.f32 0.0, %v1943
        %v1945 = vpop.f32.mrf.mxu0
        %1946 = vdwg.mxu0
        %v1947 = vadd.f32 %v1857, %v1944
        %v1948 = vld [vmem:[%s2 + $0x9] sm:$0x1]
        %v1949 = vlaneseq
        %v1950 = vshrl.u32 %v1949, 7
        %v1951 = vsub.s32 0, %v1950
        %v1952 = vrot.slane %v1948, %v1951
        %v1953 = vadd.f32 %v1947, %v1952
        %v1954 = vld [vmem:[%s2 + $0xa] sm:$0x1]
        %v1955 = vlaneseq
        %v1956 = vshrl.u32 %v1955, 7
        %v1957 = vsub.s32 0, %v1956
        %v1958 = vrot.slane %v1954, %v1957
        %v1959 = vmul.f32 %v1953, %v1958
        %v1960 = vld [vmem:[%s2 + $0xb] sm:$0x1]
        %v1961 = vlaneseq
        %v1962 = vshrl.u32 %v1961, 7
        %v1963 = vsub.s32 0, %v1962
        %v1964 = vrot.slane %v1960, %v1963
        %v1965 = vadd.f32 %v1959, %v1964
        %v1966 = vmax.f32 %v1965, 0.0
        %1967 = vst [vmem:[#allocation2 + $0x1] sm:$0x7] %v1966
        %v1968 = vld [vmem:[#allocation2] sm:$0x7]
        %v1969 = vld [vmem:[%s1392] sm:$0xff]
        %v1970 = vld [vmem:[%s1392 + $0x8] sm:$0xff]
        %v1971 = vld [vmem:[%s1392 + $0x10] sm:$0xff]
        %v1972 = vld [vmem:[%s1392 + $0x18] sm:$0xff]
        %v1973 = vld [vmem:[%s1392 + $0x20] sm:$0xff]
        %v1974 = vld [vmem:[%s1392 + $0x28] sm:$0xff]
        %v1975 = vld [vmem:[%s1392 + $0x30] sm:$0xff]
        %v1976 = vld [vmem:[%s1392 + $0x38] sm:$0xff]
        %v1977 = vld [vmem:[%s1392 + $0x40] sm:$0xff]
        %v1978 = vld [vmem:[%s1392 + $0x48] sm:$0xff]
        %v1979 = vld [vmem:[%s1392 + $0x50] sm:$0xff]
        %v1980 = vld [vmem:[%s1392 + $0x58] sm:$0xff]
        %v1981 = vld [vmem:[%s1392 + $0x60] sm:$0xff]
        %v1982 = vld [vmem:[%s1392 + $0x68] sm:$0xff]
        %v1983 = vld [vmem:[%s1392 + $0x70] sm:$0xff]
        %v1984 = vld [vmem:[%s1392 + $0x78] sm:$0xff]
        %v1985 = vld [vmem:[#allocation2 + $0x1] sm:$0x7]
        %v1986 = vld [vmem:[%s1410] sm:$0xff]
        %v1987 = vld [vmem:[%s1410 + $0x8] sm:$0xff]
        %v1988 = vld [vmem:[%s1410 + $0x10] sm:$0xff]
        %v1989 = vld [vmem:[%s1410 + $0x18] sm:$0xff]
        %v1990 = vld [vmem:[%s1410 + $0x20] sm:$0xff]
        %v1991 = vld [vmem:[%s1410 + $0x28] sm:$0xff]
        %v1992 = vld [vmem:[%s1410 + $0x30] sm:$0xff]
        %v1993 = vld [vmem:[%s1410 + $0x38] sm:$0xff]
        %v1994 = vld [vmem:[%s1410 + $0x40] sm:$0xff]
        %v1995 = vld [vmem:[%s1410 + $0x48] sm:$0xff]
        %v1996 = vld [vmem:[%s1410 + $0x50] sm:$0xff]
        %v1997 = vld [vmem:[%s1410 + $0x58] sm:$0xff]
        %v1998 = vld [vmem:[%s1410 + $0x60] sm:$0xff]
        %v1999 = vld [vmem:[%s1410 + $0x68] sm:$0xff]
        %v2000 = vld [vmem:[%s1410 + $0x70] sm:$0xff]
        %v2001 = vld [vmem:[%s1410 + $0x78] sm:$0xff]
        %2002 = vmatprep.subr.mxu0 0.0
        %2003 = vmatpush1.msra.mxu0 %v2001
        %2004 = vmatprep.subr.mxu0 0.0
        %2005 = vmatpush1.msra.mxu0 %v2000
        %2006 = vmatprep.subr.mxu0 0.0
        %2007 = vmatpush1.msra.mxu0 %v1999
        %2008 = vmatprep.subr.mxu0 0.0
        %2009 = vmatpush1.msra.mxu0 %v1998
        %2010 = vmatprep.subr.mxu0 0.0
        %2011 = vmatpush1.msra.mxu0 %v1997
        %2012 = vmatprep.subr.mxu0 0.0
        %2013 = vmatpush1.msra.mxu0 %v1996
        %2014 = vmatprep.subr.mxu0 0.0
        %2015 = vmatpush1.msra.mxu0 %v1995
        %2016 = vmatprep.subr.mxu0 0.0
        %2017 = vmatpush1.msra.mxu0 %v1994
        %2018 = vmatprep.subr.mxu0 0.0
        %2019 = vmatpush1.msra.mxu0 %v1993
        %2020 = vmatprep.subr.mxu0 0.0
        %2021 = vmatpush1.msra.mxu0 %v1992
        %2022 = vmatprep.subr.mxu0 0.0
        %2023 = vmatpush1.msra.mxu0 %v1991
        %2024 = vmatprep.subr.mxu0 0.0
        %2025 = vmatpush1.msra.mxu0 %v1990
        %2026 = vmatprep.subr.mxu0 0.0
        %2027 = vmatpush1.msra.mxu0 %v1989
        %2028 = vmatprep.subr.mxu0 0.0
        %2029 = vmatpush1.msra.mxu0 %v1988
        %2030 = vmatprep.subr.mxu0 0.0
        %2031 = vmatpush1.msra.mxu0 %v1987
        %2032 = vmatprep.subr.mxu0 0.0
        %2033 = vmatpush1.msra.mxu0 %v1986
        %2034 = vmatprep.subr.mxu0 0.0
        %2035 = vmatpush2.msra.mxu0 0.0
        %2036 = vmatprep.subr.mxu0 0.0
        %2037 = vmatpush2.msra.mxu0 0.0
        %2038 = vmatprep.subr.mxu0 0.0
        %2039 = vmatpush2.msra.mxu0 0.0
        %2040 = vmatprep.subr.mxu0 0.0
        %2041 = vmatpush2.msra.mxu0 0.0
        %2042 = vmatprep.subr.mxu0 0.0
        %2043 = vmatpush2.msra.mxu0 0.0
        %2044 = vmatprep.subr.mxu0 0.0
        %2045 = vmatpush2.msra.mxu0 0.0
        %2046 = vmatprep.subr.mxu0 0.0
        %2047 = vmatpush2.msra.mxu0 0.0
        %2048 = vmatprep.subr.mxu0 0.0
        %2049 = vmatpush2.msra.mxu0 0.0
        %2050 = vmatprep.subr.mxu0 0.0
        %2051 = vmatpush2.msra.mxu0 0.0
        %2052 = vmatprep.subr.mxu0 0.0
        %2053 = vmatpush2.msra.mxu0 0.0
        %2054 = vmatprep.subr.mxu0 0.0
        %2055 = vmatpush2.msra.mxu0 0.0
        %2056 = vmatprep.subr.mxu0 0.0
        %2057 = vmatpush2.msra.mxu0 0.0
        %2058 = vmatprep.subr.mxu0 0.0
        %2059 = vmatpush2.msra.mxu0 0.0
        %2060 = vmatprep.subr.mxu0 0.0
        %2061 = vmatpush2.msra.mxu0 0.0
        %2062 = vmatprep.subr.mxu0 0.0
        %2063 = vmatpush2.msra.mxu0 0.0
        %2064 = vmatprep.subr.mxu0 0.0
        %2065 = vmatpush2.msra.mxu0 0.0
        %2066 = vmatprep.mubr.f32.mxu0 0.0
        %2067 = vmatmul.mubr.f32.gmra.mxu0 %v1985
        %v2068 = vpop.f32.mrf.mxu0
        %v2069 = vadd.f32 0.0, %v2068
        %v2070 = vpop.f32.mrf.mxu0
        %2071 = vdwg.mxu0
        %2072 = vmatprep.subr.mxu0 0.0
        %2073 = vmatpush1.msra.mxu0 %v1984
        %2074 = vmatprep.subr.mxu0 0.0
        %2075 = vmatpush1.msra.mxu0 %v1983
        %2076 = vmatprep.subr.mxu0 0.0
        %2077 = vmatpush1.msra.mxu0 %v1982
        %2078 = vmatprep.subr.mxu0 0.0
        %2079 = vmatpush1.msra.mxu0 %v1981
        %2080 = vmatprep.subr.mxu0 0.0
        %2081 = vmatpush1.msra.mxu0 %v1980
        %2082 = vmatprep.subr.mxu0 0.0
        %2083 = vmatpush1.msra.mxu0 %v1979
        %2084 = vmatprep.subr.mxu0 0.0
        %2085 = vmatpush1.msra.mxu0 %v1978
        %2086 = vmatprep.subr.mxu0 0.0
        %2087 = vmatpush1.msra.mxu0 %v1977
        %2088 = vmatprep.subr.mxu0 0.0
        %2089 = vmatpush1.msra.mxu0 %v1976
        %2090 = vmatprep.subr.mxu0 0.0
        %2091 = vmatpush1.msra.mxu0 %v1975
        %2092 = vmatprep.subr.mxu0 0.0
        %2093 = vmatpush1.msra.mxu0 %v1974
        %2094 = vmatprep.subr.mxu0 0.0
        %2095 = vmatpush1.msra.mxu0 %v1973
        %2096 = vmatprep.subr.mxu0 0.0
        %2097 = vmatpush1.msra.mxu0 %v1972
        %2098 = vmatprep.subr.mxu0 0.0
        %2099 = vmatpush1.msra.mxu0 %v1971
        %2100 = vmatprep.subr.mxu0 0.0
        %2101 = vmatpush1.msra.mxu0 %v1970
        %2102 = vmatprep.subr.mxu0 0.0
        %2103 = vmatpush1.msra.mxu0 %v1969
        %2104 = vmatprep.subr.mxu0 0.0
        %2105 = vmatpush2.msra.mxu0 0.0
        %2106 = vmatprep.subr.mxu0 0.0
        %2107 = vmatpush2.msra.mxu0 0.0
        %2108 = vmatprep.subr.mxu0 0.0
        %2109 = vmatpush2.msra.mxu0 0.0
        %2110 = vmatprep.subr.mxu0 0.0
        %2111 = vmatpush2.msra.mxu0 0.0
        %2112 = vmatprep.subr.mxu0 0.0
        %2113 = vmatpush2.msra.mxu0 0.0
        %2114 = vmatprep.subr.mxu0 0.0
        %2115 = vmatpush2.msra.mxu0 0.0
        %2116 = vmatprep.subr.mxu0 0.0
        %2117 = vmatpush2.msra.mxu0 0.0
        %2118 = vmatprep.subr.mxu0 0.0
        %2119 = vmatpush2.msra.mxu0 0.0
        %2120 = vmatprep.subr.mxu0 0.0
        %2121 = vmatpush2.msra.mxu0 0.0
        %2122 = vmatprep.subr.mxu0 0.0
        %2123 = vmatpush2.msra.mxu0 0.0
        %2124 = vmatprep.subr.mxu0 0.0
        %2125 = vmatpush2.msra.mxu0 0.0
        %2126 = vmatprep.subr.mxu0 0.0
        %2127 = vmatpush2.msra.mxu0 0.0
        %2128 = vmatprep.subr.mxu0 0.0
        %2129 = vmatpush2.msra.mxu0 0.0
        %2130 = vmatprep.subr.mxu0 0.0
        %2131 = vmatpush2.msra.mxu0 0.0
        %2132 = vmatprep.subr.mxu0 0.0
        %2133 = vmatpush2.msra.mxu0 0.0
        %2134 = vmatprep.subr.mxu0 0.0
        %2135 = vmatpush2.msra.mxu0 0.0
        %2136 = vmatprep.mubr.f32.mxu0 0.0
        %2137 = vmatmul.mubr.f32.gmra.mxu0 %v1968
        %v2138 = vpop.f32.mrf.mxu0
        %v2139 = vadd.f32 %v2069, %v2138
        %v2140 = vpop.f32.mrf.mxu0
        %2141 = vdwg.mxu0
        %v2142 = vld [vmem:[#allocation2 + $0x2] sm:$0x7]
        %v2143 = vld [vmem:[%s1568] sm:$0xff]
        %v2144 = vld [vmem:[%s1568 + $0x8] sm:$0xff]
        %v2145 = vld [vmem:[%s1568 + $0x10] sm:$0xff]
        %v2146 = vld [vmem:[%s1568 + $0x18] sm:$0xff]
        %v2147 = vld [vmem:[%s1568 + $0x20] sm:$0xff]
        %v2148 = vld [vmem:[%s1568 + $0x28] sm:$0xff]
        %v2149 = vld [vmem:[%s1568 + $0x30] sm:$0xff]
        %v2150 = vld [vmem:[%s1568 + $0x38] sm:$0xff]
        %v2151 = vld [vmem:[%s1568 + $0x40] sm:$0xff]
        %v2152 = vld [vmem:[%s1568 + $0x48] sm:$0xff]
        %v2153 = vld [vmem:[%s1568 + $0x50] sm:$0xff]
        %v2154 = vld [vmem:[%s1568 + $0x58] sm:$0xff]
        %v2155 = vld [vmem:[%s1568 + $0x60] sm:$0xff]
        %v2156 = vld [vmem:[%s1568 + $0x68] sm:$0xff]
        %v2157 = vld [vmem:[%s1568 + $0x70] sm:$0xff]
        %v2158 = vld [vmem:[%s1568 + $0x78] sm:$0xff]
        %2159 = vmatprep.subr.mxu0 0.0
        %2160 = vmatpush1.msra.mxu0 %v2158
        %2161 = vmatprep.subr.mxu0 0.0
        %2162 = vmatpush1.msra.mxu0 %v2157
        %2163 = vmatprep.subr.mxu0 0.0
        %2164 = vmatpush1.msra.mxu0 %v2156
        %2165 = vmatprep.subr.mxu0 0.0
        %2166 = vmatpush1.msra.mxu0 %v2155
        %2167 = vmatprep.subr.mxu0 0.0
        %2168 = vmatpush1.msra.mxu0 %v2154
        %2169 = vmatprep.subr.mxu0 0.0
        %2170 = vmatpush1.msra.mxu0 %v2153
        %2171 = vmatprep.subr.mxu0 0.0
        %2172 = vmatpush1.msra.mxu0 %v2152
        %2173 = vmatprep.subr.mxu0 0.0
        %2174 = vmatpush1.msra.mxu0 %v2151
        %2175 = vmatprep.subr.mxu0 0.0
        %2176 = vmatpush1.msra.mxu0 %v2150
        %2177 = vmatprep.subr.mxu0 0.0
        %2178 = vmatpush1.msra.mxu0 %v2149
        %2179 = vmatprep.subr.mxu0 0.0
        %2180 = vmatpush1.msra.mxu0 %v2148
        %2181 = vmatprep.subr.mxu0 0.0
        %2182 = vmatpush1.msra.mxu0 %v2147
        %2183 = vmatprep.subr.mxu0 0.0
        %2184 = vmatpush1.msra.mxu0 %v2146
        %2185 = vmatprep.subr.mxu0 0.0
        %2186 = vmatpush1.msra.mxu0 %v2145
        %2187 = vmatprep.subr.mxu0 0.0
        %2188 = vmatpush1.msra.mxu0 %v2144
        %2189 = vmatprep.subr.mxu0 0.0
        %2190 = vmatpush1.msra.mxu0 %v2143
        %2191 = vmatprep.subr.mxu0 0.0
        %2192 = vmatpush2.msra.mxu0 0.0
        %2193 = vmatprep.subr.mxu0 0.0
        %2194 = vmatpush2.msra.mxu0 0.0
        %2195 = vmatprep.subr.mxu0 0.0
        %2196 = vmatpush2.msra.mxu0 0.0
        %2197 = vmatprep.subr.mxu0 0.0
        %2198 = vmatpush2.msra.mxu0 0.0
        %2199 = vmatprep.subr.mxu0 0.0
        %2200 = vmatpush2.msra.mxu0 0.0
        %2201 = vmatprep.subr.mxu0 0.0
        %2202 = vmatpush2.msra.mxu0 0.0
        %2203 = vmatprep.subr.mxu0 0.0
        %2204 = vmatpush2.msra.mxu0 0.0
        %2205 = vmatprep.subr.mxu0 0.0
        %2206 = vmatpush2.msra.mxu0 0.0
        %2207 = vmatprep.subr.mxu0 0.0
        %2208 = vmatpush2.msra.mxu0 0.0
        %2209 = vmatprep.subr.mxu0 0.0
        %2210 = vmatpush2.msra.mxu0 0.0
        %2211 = vmatprep.subr.mxu0 0.0
        %2212 = vmatpush2.msra.mxu0 0.0
        %2213 = vmatprep.subr.mxu0 0.0
        %2214 = vmatpush2.msra.mxu0 0.0
        %2215 = vmatprep.subr.mxu0 0.0
        %2216 = vmatpush2.msra.mxu0 0.0
        %2217 = vmatprep.subr.mxu0 0.0
        %2218 = vmatpush2.msra.mxu0 0.0
        %2219 = vmatprep.subr.mxu0 0.0
        %2220 = vmatpush2.msra.mxu0 0.0
        %2221 = vmatprep.subr.mxu0 0.0
        %2222 = vmatpush2.msra.mxu0 0.0
        %2223 = vmatprep.mubr.f32.mxu0 0.0
        %2224 = vmatmul.mubr.f32.gmra.mxu0 %v2142
        %v2225 = vpop.f32.mrf.mxu0
        %v2226 = vadd.f32 0.0, %v2225
        %v2227 = vpop.f32.mrf.mxu0
        %2228 = vdwg.mxu0
        %v2229 = vadd.f32 %v2139, %v2226
        %v2230 = vld [vmem:[%s2 + $0xc] sm:$0x1]
        %v2231 = vlaneseq
        %v2232 = vshrl.u32 %v2231, 7
        %v2233 = vsub.s32 0, %v2232
        %v2234 = vrot.slane %v2230, %v2233
        %v2235 = vadd.f32 %v2229, %v2234
        %v2236 = vadd.f32 %v1670, %v2235
        %2237 = vst [vmem:[#allocation2 + $0x1] sm:$0x7] %v2236
        %2238 = vst [vmem:[#allocation2 + $0x4] sm:$0x1] 0.0
        %v2239 = vld [vmem:[%s1083] ss:$2 sm:$0x1]
        %v2240 = vld [vmem:[%s1666] ss:$2 sm:$0x1]
        %v2241 = vmax.f32 %v2239, %v2240
        %v2242 = vld [vmem:[%s1088] ss:$2 sm:$0x1]
        %v2243 = vmax.f32 %v2241, %v2242
        %2244 = vst [vmem:[#allocation2 + $0x2] sm:$0x1] 0.0
        %v2245 = vld [vmem:[%s2 + $0x7] sm:$0x1]
        %v2246 = vmul.f32 %v2243, %v2245
        %v2247 = vld [vmem:[%s2 + $0x8] sm:$0x1]
        %v2248 = vadd.f32 %v2246, %v2247
        %v2249 = vmax.f32 %v2248, 0.0
        %2250 = vst [vmem:[#allocation2 + $0x1] sm:$0x1] %v2249
        %v2251 = vld [vmem:[#allocation2] sm:$0x1]
        %v2252 = vld [vmem:[%s1107] sm:$0xff]
        %v2253 = vld [vmem:[%s1107 + $0x8] sm:$0xff]
        %v2254 = vld [vmem:[%s1107 + $0x10] sm:$0xff]
        %v2255 = vld [vmem:[%s1107 + $0x18] sm:$0xff]
        %v2256 = vld [vmem:[%s1107 + $0x20] sm:$0xff]
        %v2257 = vld [vmem:[%s1107 + $0x28] sm:$0xff]
        %v2258 = vld [vmem:[%s1107 + $0x30] sm:$0xff]
        %v2259 = vld [vmem:[%s1107 + $0x38] sm:$0xff]
        %v2260 = vld [vmem:[%s1107 + $0x40] sm:$0xff]
        %v2261 = vld [vmem:[%s1107 + $0x48] sm:$0xff]
        %v2262 = vld [vmem:[%s1107 + $0x50] sm:$0xff]
        %v2263 = vld [vmem:[%s1107 + $0x58] sm:$0xff]
        %v2264 = vld [vmem:[%s1107 + $0x60] sm:$0xff]
        %v2265 = vld [vmem:[%s1107 + $0x68] sm:$0xff]
        %v2266 = vld [vmem:[%s1107 + $0x70] sm:$0xff]
        %v2267 = vld [vmem:[%s1107 + $0x78] sm:$0xff]
        %v2268 = vld [vmem:[#allocation2 + $0x1] sm:$0x1]
        %v2269 = vld [vmem:[%s1125] sm:$0xff]
        %v2270 = vld [vmem:[%s1125 + $0x8] sm:$0xff]
        %v2271 = vld [vmem:[%s1125 + $0x10] sm:$0xff]
        %v2272 = vld [vmem:[%s1125 + $0x18] sm:$0xff]
        %v2273 = vld [vmem:[%s1125 + $0x20] sm:$0xff]
        %v2274 = vld [vmem:[%s1125 + $0x28] sm:$0xff]
        %v2275 = vld [vmem:[%s1125 + $0x30] sm:$0xff]
        %v2276 = vld [vmem:[%s1125 + $0x38] sm:$0xff]
        %v2277 = vld [vmem:[%s1125 + $0x40] sm:$0xff]
        %v2278 = vld [vmem:[%s1125 + $0x48] sm:$0xff]
        %v2279 = vld [vmem:[%s1125 + $0x50] sm:$0xff]
        %v2280 = vld [vmem:[%s1125 + $0x58] sm:$0xff]
        %v2281 = vld [vmem:[%s1125 + $0x60] sm:$0xff]
        %v2282 = vld [vmem:[%s1125 + $0x68] sm:$0xff]
        %v2283 = vld [vmem:[%s1125 + $0x70] sm:$0xff]
        %v2284 = vld [vmem:[%s1125 + $0x78] sm:$0xff]
        %2285 = vmatprep.subr.mxu0 0.0
        %2286 = vmatpush1.msra.mxu0 %v2284
        %2287 = vmatprep.subr.mxu0 0.0
        %2288 = vmatpush1.msra.mxu0 %v2283
        %2289 = vmatprep.subr.mxu0 0.0
        %2290 = vmatpush1.msra.mxu0 %v2282
        %2291 = vmatprep.subr.mxu0 0.0
        %2292 = vmatpush1.msra.mxu0 %v2281
        %2293 = vmatprep.subr.mxu0 0.0
        %2294 = vmatpush1.msra.mxu0 %v2280
        %2295 = vmatprep.subr.mxu0 0.0
        %2296 = vmatpush1.msra.mxu0 %v2279
        %2297 = vmatprep.subr.mxu0 0.0
        %2298 = vmatpush1.msra.mxu0 %v2278
        %2299 = vmatprep.subr.mxu0 0.0
        %2300 = vmatpush1.msra.mxu0 %v2277
        %2301 = vmatprep.subr.mxu0 0.0
        %2302 = vmatpush1.msra.mxu0 %v2276
        %2303 = vmatprep.subr.mxu0 0.0
        %2304 = vmatpush1.msra.mxu0 %v2275
        %2305 = vmatprep.subr.mxu0 0.0
        %2306 = vmatpush1.msra.mxu0 %v2274
        %2307 = vmatprep.subr.mxu0 0.0
        %2308 = vmatpush1.msra.mxu0 %v2273
        %2309 = vmatprep.subr.mxu0 0.0
        %2310 = vmatpush1.msra.mxu0 %v2272
        %2311 = vmatprep.subr.mxu0 0.0
        %2312 = vmatpush1.msra.mxu0 %v2271
        %2313 = vmatprep.subr.mxu0 0.0
        %2314 = vmatpush1.msra.mxu0 %v2270
        %2315 = vmatprep.subr.mxu0 0.0
        %2316 = vmatpush1.msra.mxu0 %v2269
        %2317 = vmatprep.subr.mxu0 0.0
        %2318 = vmatpush2.msra.mxu0 0.0
        %2319 = vmatprep.subr.mxu0 0.0
        %2320 = vmatpush2.msra.mxu0 0.0
        %2321 = vmatprep.subr.mxu0 0.0
        %2322 = vmatpush2.msra.mxu0 0.0
        %2323 = vmatprep.subr.mxu0 0.0
        %2324 = vmatpush2.msra.mxu0 0.0
        %2325 = vmatprep.subr.mxu0 0.0
        %2326 = vmatpush2.msra.mxu0 0.0
        %2327 = vmatprep.subr.mxu0 0.0
        %2328 = vmatpush2.msra.mxu0 0.0
        %2329 = vmatprep.subr.mxu0 0.0
        %2330 = vmatpush2.msra.mxu0 0.0
        %2331 = vmatprep.subr.mxu0 0.0
        %2332 = vmatpush2.msra.mxu0 0.0
        %2333 = vmatprep.subr.mxu0 0.0
        %2334 = vmatpush2.msra.mxu0 0.0
        %2335 = vmatprep.subr.mxu0 0.0
        %2336 = vmatpush2.msra.mxu0 0.0
        %2337 = vmatprep.subr.mxu0 0.0
        %2338 = vmatpush2.msra.mxu0 0.0
        %2339 = vmatprep.subr.mxu0 0.0
        %2340 = vmatpush2.msra.mxu0 0.0
        %2341 = vmatprep.subr.mxu0 0.0
        %2342 = vmatpush2.msra.mxu0 0.0
        %2343 = vmatprep.subr.mxu0 0.0
        %2344 = vmatpush2.msra.mxu0 0.0
        %2345 = vmatprep.subr.mxu0 0.0
        %2346 = vmatpush2.msra.mxu0 0.0
        %2347 = vmatprep.subr.mxu0 0.0
        %2348 = vmatpush2.msra.mxu0 0.0
        %2349 = vmatprep.mubr.f32.mxu0 0.0
        %2350 = vmatmul.mubr.f32.gmra.mxu0 %v2268
        %v2351 = vpop.f32.mrf.mxu0
        %v2352 = vadd.f32 0.0, %v2351
        %v2353 = vpop.f32.mrf.mxu0
        %2354 = vdwg.mxu0
        %2355 = vmatprep.subr.mxu0 0.0
        %2356 = vmatpush1.msra.mxu0 %v2267
        %2357 = vmatprep.subr.mxu0 0.0
        %2358 = vmatpush1.msra.mxu0 %v2266
        %2359 = vmatprep.subr.mxu0 0.0
        %2360 = vmatpush1.msra.mxu0 %v2265
        %2361 = vmatprep.subr.mxu0 0.0
        %2362 = vmatpush1.msra.mxu0 %v2264
        %2363 = vmatprep.subr.mxu0 0.0
        %2364 = vmatpush1.msra.mxu0 %v2263
        %2365 = vmatprep.subr.mxu0 0.0
        %2366 = vmatpush1.msra.mxu0 %v2262
        %2367 = vmatprep.subr.mxu0 0.0
        %2368 = vmatpush1.msra.mxu0 %v2261
        %2369 = vmatprep.subr.mxu0 0.0
        %2370 = vmatpush1.msra.mxu0 %v2260
        %2371 = vmatprep.subr.mxu0 0.0
        %2372 = vmatpush1.msra.mxu0 %v2259
        %2373 = vmatprep.subr.mxu0 0.0
        %2374 = vmatpush1.msra.mxu0 %v2258
        %2375 = vmatprep.subr.mxu0 0.0
        %2376 = vmatpush1.msra.mxu0 %v2257
        %2377 = vmatprep.subr.mxu0 0.0
        %2378 = vmatpush1.msra.mxu0 %v2256
        %2379 = vmatprep.subr.mxu0 0.0
        %2380 = vmatpush1.msra.mxu0 %v2255
        %2381 = vmatprep.subr.mxu0 0.0
        %2382 = vmatpush1.msra.mxu0 %v2254
        %2383 = vmatprep.subr.mxu0 0.0
        %2384 = vmatpush1.msra.mxu0 %v2253
        %2385 = vmatprep.subr.mxu0 0.0
        %2386 = vmatpush1.msra.mxu0 %v2252
        %2387 = vmatprep.subr.mxu0 0.0
        %2388 = vmatpush2.msra.mxu0 0.0
        %2389 = vmatprep.subr.mxu0 0.0
        %2390 = vmatpush2.msra.mxu0 0.0
        %2391 = vmatprep.subr.mxu0 0.0
        %2392 = vmatpush2.msra.mxu0 0.0
        %2393 = vmatprep.subr.mxu0 0.0
        %2394 = vmatpush2.msra.mxu0 0.0
        %2395 = vmatprep.subr.mxu0 0.0
        %2396 = vmatpush2.msra.mxu0 0.0
        %2397 = vmatprep.subr.mxu0 0.0
        %2398 = vmatpush2.msra.mxu0 0.0
        %2399 = vmatprep.subr.mxu0 0.0
        %2400 = vmatpush2.msra.mxu0 0.0
        %2401 = vmatprep.subr.mxu0 0.0
        %2402 = vmatpush2.msra.mxu0 0.0
        %2403 = vmatprep.subr.mxu0 0.0
        %2404 = vmatpush2.msra.mxu0 0.0
        %2405 = vmatprep.subr.mxu0 0.0
        %2406 = vmatpush2.msra.mxu0 0.0
        %2407 = vmatprep.subr.mxu0 0.0
        %2408 = vmatpush2.msra.mxu0 0.0
        %2409 = vmatprep.subr.mxu0 0.0
        %2410 = vmatpush2.msra.mxu0 0.0
        %2411 = vmatprep.subr.mxu0 0.0
        %2412 = vmatpush2.msra.mxu0 0.0
        %2413 = vmatprep.subr.mxu0 0.0
        %2414 = vmatpush2.msra.mxu0 0.0
        %2415 = vmatprep.subr.mxu0 0.0
        %2416 = vmatpush2.msra.mxu0 0.0
        %2417 = vmatprep.subr.mxu0 0.0
        %2418 = vmatpush2.msra.mxu0 0.0
        %2419 = vmatprep.mubr.f32.mxu0 0.0
        %2420 = vmatmul.mubr.f32.gmra.mxu0 %v2251
        %v2421 = vpop.f32.mrf.mxu0
        %v2422 = vadd.f32 %v2352, %v2421
        %v2423 = vpop.f32.mrf.mxu0
        %2424 = vdwg.mxu0
        %v2425 = vld [vmem:[#allocation2 + $0x2] sm:$0x1]
        %v2426 = vld [vmem:[%s1283] sm:$0xff]
        %v2427 = vld [vmem:[%s1283 + $0x8] sm:$0xff]
        %v2428 = vld [vmem:[%s1283 + $0x10] sm:$0xff]
        %v2429 = vld [vmem:[%s1283 + $0x18] sm:$0xff]
        %v2430 = vld [vmem:[%s1283 + $0x20] sm:$0xff]
        %v2431 = vld [vmem:[%s1283 + $0x28] sm:$0xff]
        %v2432 = vld [vmem:[%s1283 + $0x30] sm:$0xff]
        %v2433 = vld [vmem:[%s1283 + $0x38] sm:$0xff]
        %v2434 = vld [vmem:[%s1283 + $0x40] sm:$0xff]
        %v2435 = vld [vmem:[%s1283 + $0x48] sm:$0xff]
        %v2436 = vld [vmem:[%s1283 + $0x50] sm:$0xff]
        %v2437 = vld [vmem:[%s1283 + $0x58] sm:$0xff]
        %v2438 = vld [vmem:[%s1283 + $0x60] sm:$0xff]
        %v2439 = vld [vmem:[%s1283 + $0x68] sm:$0xff]
        %v2440 = vld [vmem:[%s1283 + $0x70] sm:$0xff]
        %v2441 = vld [vmem:[%s1283 + $0x78] sm:$0xff]
        %2442 = vmatprep.subr.mxu0 0.0
        %2443 = vmatpush1.msra.mxu0 %v2441
        %2444 = vmatprep.subr.mxu0 0.0
        %2445 = vmatpush1.msra.mxu0 %v2440
        %2446 = vmatprep.subr.mxu0 0.0
        %2447 = vmatpush1.msra.mxu0 %v2439
        %2448 = vmatprep.subr.mxu0 0.0
        %2449 = vmatpush1.msra.mxu0 %v2438
        %2450 = vmatprep.subr.mxu0 0.0
        %2451 = vmatpush1.msra.mxu0 %v2437
        %2452 = vmatprep.subr.mxu0 0.0
        %2453 = vmatpush1.msra.mxu0 %v2436
        %2454 = vmatprep.subr.mxu0 0.0
        %2455 = vmatpush1.msra.mxu0 %v2435
        %2456 = vmatprep.subr.mxu0 0.0
        %2457 = vmatpush1.msra.mxu0 %v2434
        %2458 = vmatprep.subr.mxu0 0.0
        %2459 = vmatpush1.msra.mxu0 %v2433
        %2460 = vmatprep.subr.mxu0 0.0
        %2461 = vmatpush1.msra.mxu0 %v2432
        %2462 = vmatprep.subr.mxu0 0.0
        %2463 = vmatpush1.msra.mxu0 %v2431
        %2464 = vmatprep.subr.mxu0 0.0
        %2465 = vmatpush1.msra.mxu0 %v2430
        %2466 = vmatprep.subr.mxu0 0.0
        %2467 = vmatpush1.msra.mxu0 %v2429
        %2468 = vmatprep.subr.mxu0 0.0
        %2469 = vmatpush1.msra.mxu0 %v2428
        %2470 = vmatprep.subr.mxu0 0.0
        %2471 = vmatpush1.msra.mxu0 %v2427
        %2472 = vmatprep.subr.mxu0 0.0
        %2473 = vmatpush1.msra.mxu0 %v2426
        %2474 = vmatprep.subr.mxu0 0.0
        %2475 = vmatpush2.msra.mxu0 0.0
        %2476 = vmatprep.subr.mxu0 0.0
        %2477 = vmatpush2.msra.mxu0 0.0
        %2478 = vmatprep.subr.mxu0 0.0
        %2479 = vmatpush2.msra.mxu0 0.0
        %2480 = vmatprep.subr.mxu0 0.0
        %2481 = vmatpush2.msra.mxu0 0.0
        %2482 = vmatprep.subr.mxu0 0.0
        %2483 = vmatpush2.msra.mxu0 0.0
        %2484 = vmatprep.subr.mxu0 0.0
        %2485 = vmatpush2.msra.mxu0 0.0
        %2486 = vmatprep.subr.mxu0 0.0
        %2487 = vmatpush2.msra.mxu0 0.0
        %2488 = vmatprep.subr.mxu0 0.0
        %2489 = vmatpush2.msra.mxu0 0.0
        %2490 = vmatprep.subr.mxu0 0.0
        %2491 = vmatpush2.msra.mxu0 0.0
        %2492 = vmatprep.subr.mxu0 0.0
        %2493 = vmatpush2.msra.mxu0 0.0
        %2494 = vmatprep.subr.mxu0 0.0
        %2495 = vmatpush2.msra.mxu0 0.0
        %2496 = vmatprep.subr.mxu0 0.0
        %2497 = vmatpush2.msra.mxu0 0.0
        %2498 = vmatprep.subr.mxu0 0.0
        %2499 = vmatpush2.msra.mxu0 0.0
        %2500 = vmatprep.subr.mxu0 0.0
        %2501 = vmatpush2.msra.mxu0 0.0
        %2502 = vmatprep.subr.mxu0 0.0
        %2503 = vmatpush2.msra.mxu0 0.0
        %2504 = vmatprep.subr.mxu0 0.0
        %2505 = vmatpush2.msra.mxu0 0.0
        %2506 = vmatprep.mubr.f32.mxu0 0.0
        %2507 = vmatmul.mubr.f32.gmra.mxu0 %v2425
        %v2508 = vpop.f32.mrf.mxu0
        %v2509 = vadd.f32 0.0, %v2508
        %v2510 = vpop.f32.mrf.mxu0
        %2511 = vdwg.mxu0
        %v2512 = vadd.f32 %v2422, %v2509
        %v2513 = vld [vmem:[%s2 + $0x9] sm:$0x1]
        %v2514 = vadd.f32 %v2512, %v2513
        %v2515 = vld [vmem:[%s2 + $0xa] sm:$0x1]
        %v2516 = vmul.f32 %v2514, %v2515
        %v2517 = vld [vmem:[%s2 + $0xb] sm:$0x1]
        %v2518 = vadd.f32 %v2516, %v2517
        %v2519 = vmax.f32 %v2518, 0.0
        %2520 = vst [vmem:[#allocation2 + $0x1] sm:$0x1] %v2519
        %v2521 = vld [vmem:[#allocation2] sm:$0x1]
        %v2522 = vld [vmem:[%s1392] sm:$0xff]
        %v2523 = vld [vmem:[%s1392 + $0x8] sm:$0xff]
        %v2524 = vld [vmem:[%s1392 + $0x10] sm:$0xff]
        %v2525 = vld [vmem:[%s1392 + $0x18] sm:$0xff]
        %v2526 = vld [vmem:[%s1392 + $0x20] sm:$0xff]
        %v2527 = vld [vmem:[%s1392 + $0x28] sm:$0xff]
        %v2528 = vld [vmem:[%s1392 + $0x30] sm:$0xff]
        %v2529 = vld [vmem:[%s1392 + $0x38] sm:$0xff]
        %v2530 = vld [vmem:[%s1392 + $0x40] sm:$0xff]
        %v2531 = vld [vmem:[%s1392 + $0x48] sm:$0xff]
        %v2532 = vld [vmem:[%s1392 + $0x50] sm:$0xff]
        %v2533 = vld [vmem:[%s1392 + $0x58] sm:$0xff]
        %v2534 = vld [vmem:[%s1392 + $0x60] sm:$0xff]
        %v2535 = vld [vmem:[%s1392 + $0x68] sm:$0xff]
        %v2536 = vld [vmem:[%s1392 + $0x70] sm:$0xff]
        %v2537 = vld [vmem:[%s1392 + $0x78] sm:$0xff]
        %v2538 = vld [vmem:[#allocation2 + $0x1] sm:$0x1]
        %v2539 = vld [vmem:[%s1410] sm:$0xff]
        %v2540 = vld [vmem:[%s1410 + $0x8] sm:$0xff]
        %v2541 = vld [vmem:[%s1410 + $0x10] sm:$0xff]
        %v2542 = vld [vmem:[%s1410 + $0x18] sm:$0xff]
        %v2543 = vld [vmem:[%s1410 + $0x20] sm:$0xff]
        %v2544 = vld [vmem:[%s1410 + $0x28] sm:$0xff]
        %v2545 = vld [vmem:[%s1410 + $0x30] sm:$0xff]
        %v2546 = vld [vmem:[%s1410 + $0x38] sm:$0xff]
        %v2547 = vld [vmem:[%s1410 + $0x40] sm:$0xff]
        %v2548 = vld [vmem:[%s1410 + $0x48] sm:$0xff]
        %v2549 = vld [vmem:[%s1410 + $0x50] sm:$0xff]
        %v2550 = vld [vmem:[%s1410 + $0x58] sm:$0xff]
        %v2551 = vld [vmem:[%s1410 + $0x60] sm:$0xff]
        %v2552 = vld [vmem:[%s1410 + $0x68] sm:$0xff]
        %v2553 = vld [vmem:[%s1410 + $0x70] sm:$0xff]
        %v2554 = vld [vmem:[%s1410 + $0x78] sm:$0xff]
        %2555 = vmatprep.subr.mxu0 0.0
        %2556 = vmatpush1.msra.mxu0 %v2554
        %2557 = vmatprep.subr.mxu0 0.0
        %2558 = vmatpush1.msra.mxu0 %v2553
        %2559 = vmatprep.subr.mxu0 0.0
        %2560 = vmatpush1.msra.mxu0 %v2552
        %2561 = vmatprep.subr.mxu0 0.0
        %2562 = vmatpush1.msra.mxu0 %v2551
        %2563 = vmatprep.subr.mxu0 0.0
        %2564 = vmatpush1.msra.mxu0 %v2550
        %2565 = vmatprep.subr.mxu0 0.0
        %2566 = vmatpush1.msra.mxu0 %v2549
        %2567 = vmatprep.subr.mxu0 0.0
        %2568 = vmatpush1.msra.mxu0 %v2548
        %2569 = vmatprep.subr.mxu0 0.0
        %2570 = vmatpush1.msra.mxu0 %v2547
        %2571 = vmatprep.subr.mxu0 0.0
        %2572 = vmatpush1.msra.mxu0 %v2546
        %2573 = vmatprep.subr.mxu0 0.0
        %2574 = vmatpush1.msra.mxu0 %v2545
        %2575 = vmatprep.subr.mxu0 0.0
        %2576 = vmatpush1.msra.mxu0 %v2544
        %2577 = vmatprep.subr.mxu0 0.0
        %2578 = vmatpush1.msra.mxu0 %v2543
        %2579 = vmatprep.subr.mxu0 0.0
        %2580 = vmatpush1.msra.mxu0 %v2542
        %2581 = vmatprep.subr.mxu0 0.0
        %2582 = vmatpush1.msra.mxu0 %v2541
        %2583 = vmatprep.subr.mxu0 0.0
        %2584 = vmatpush1.msra.mxu0 %v2540
        %2585 = vmatprep.subr.mxu0 0.0
        %2586 = vmatpush1.msra.mxu0 %v2539
        %2587 = vmatprep.subr.mxu0 0.0
        %2588 = vmatpush2.msra.mxu0 0.0
        %2589 = vmatprep.subr.mxu0 0.0
        %2590 = vmatpush2.msra.mxu0 0.0
        %2591 = vmatprep.subr.mxu0 0.0
        %2592 = vmatpush2.msra.mxu0 0.0
        %2593 = vmatprep.subr.mxu0 0.0
        %2594 = vmatpush2.msra.mxu0 0.0
        %2595 = vmatprep.subr.mxu0 0.0
        %2596 = vmatpush2.msra.mxu0 0.0
        %2597 = vmatprep.subr.mxu0 0.0
        %2598 = vmatpush2.msra.mxu0 0.0
        %2599 = vmatprep.subr.mxu0 0.0
        %2600 = vmatpush2.msra.mxu0 0.0
        %2601 = vmatprep.subr.mxu0 0.0
        %2602 = vmatpush2.msra.mxu0 0.0
        %2603 = vmatprep.subr.mxu0 0.0
        %2604 = vmatpush2.msra.mxu0 0.0
        %2605 = vmatprep.subr.mxu0 0.0
        %2606 = vmatpush2.msra.mxu0 0.0
        %2607 = vmatprep.subr.mxu0 0.0
        %2608 = vmatpush2.msra.mxu0 0.0
        %2609 = vmatprep.subr.mxu0 0.0
        %2610 = vmatpush2.msra.mxu0 0.0
        %2611 = vmatprep.subr.mxu0 0.0
        %2612 = vmatpush2.msra.mxu0 0.0
        %2613 = vmatprep.subr.mxu0 0.0
        %2614 = vmatpush2.msra.mxu0 0.0
        %2615 = vmatprep.subr.mxu0 0.0
        %2616 = vmatpush2.msra.mxu0 0.0
        %2617 = vmatprep.subr.mxu0 0.0
        %2618 = vmatpush2.msra.mxu0 0.0
        %2619 = vmatprep.mubr.f32.mxu0 0.0
        %2620 = vmatmul.mubr.f32.gmra.mxu0 %v2538
        %v2621 = vpop.f32.mrf.mxu0
        %v2622 = vadd.f32 0.0, %v2621
        %v2623 = vpop.f32.mrf.mxu0
        %2624 = vdwg.mxu0
        %2625 = vmatprep.subr.mxu0 0.0
        %2626 = vmatpush1.msra.mxu0 %v2537
        %2627 = vmatprep.subr.mxu0 0.0
        %2628 = vmatpush1.msra.mxu0 %v2536
        %2629 = vmatprep.subr.mxu0 0.0
        %2630 = vmatpush1.msra.mxu0 %v2535
        %2631 = vmatprep.subr.mxu0 0.0
        %2632 = vmatpush1.msra.mxu0 %v2534
        %2633 = vmatprep.subr.mxu0 0.0
        %2634 = vmatpush1.msra.mxu0 %v2533
        %2635 = vmatprep.subr.mxu0 0.0
        %2636 = vmatpush1.msra.mxu0 %v2532
        %2637 = vmatprep.subr.mxu0 0.0
        %2638 = vmatpush1.msra.mxu0 %v2531
        %2639 = vmatprep.subr.mxu0 0.0
        %2640 = vmatpush1.msra.mxu0 %v2530
        %2641 = vmatprep.subr.mxu0 0.0
        %2642 = vmatpush1.msra.mxu0 %v2529
        %2643 = vmatprep.subr.mxu0 0.0
        %2644 = vmatpush1.msra.mxu0 %v2528
        %2645 = vmatprep.subr.mxu0 0.0
        %2646 = vmatpush1.msra.mxu0 %v2527
        %2647 = vmatprep.subr.mxu0 0.0
        %2648 = vmatpush1.msra.mxu0 %v2526
        %2649 = vmatprep.subr.mxu0 0.0
        %2650 = vmatpush1.msra.mxu0 %v2525
        %2651 = vmatprep.subr.mxu0 0.0
        %2652 = vmatpush1.msra.mxu0 %v2524
        %2653 = vmatprep.subr.mxu0 0.0
        %2654 = vmatpush1.msra.mxu0 %v2523
        %2655 = vmatprep.subr.mxu0 0.0
        %2656 = vmatpush1.msra.mxu0 %v2522
        %2657 = vmatprep.subr.mxu0 0.0
        %2658 = vmatpush2.msra.mxu0 0.0
        %2659 = vmatprep.subr.mxu0 0.0
        %2660 = vmatpush2.msra.mxu0 0.0
        %2661 = vmatprep.subr.mxu0 0.0
        %2662 = vmatpush2.msra.mxu0 0.0
        %2663 = vmatprep.subr.mxu0 0.0
        %2664 = vmatpush2.msra.mxu0 0.0
        %2665 = vmatprep.subr.mxu0 0.0
        %2666 = vmatpush2.msra.mxu0 0.0
        %2667 = vmatprep.subr.mxu0 0.0
        %2668 = vmatpush2.msra.mxu0 0.0
        %2669 = vmatprep.subr.mxu0 0.0
        %2670 = vmatpush2.msra.mxu0 0.0
        %2671 = vmatprep.subr.mxu0 0.0
        %2672 = vmatpush2.msra.mxu0 0.0
        %2673 = vmatprep.subr.mxu0 0.0
        %2674 = vmatpush2.msra.mxu0 0.0
        %2675 = vmatprep.subr.mxu0 0.0
        %2676 = vmatpush2.msra.mxu0 0.0
        %2677 = vmatprep.subr.mxu0 0.0
        %2678 = vmatpush2.msra.mxu0 0.0
        %2679 = vmatprep.subr.mxu0 0.0
        %2680 = vmatpush2.msra.mxu0 0.0
        %2681 = vmatprep.subr.mxu0 0.0
        %2682 = vmatpush2.msra.mxu0 0.0
        %2683 = vmatprep.subr.mxu0 0.0
        %2684 = vmatpush2.msra.mxu0 0.0
        %2685 = vmatprep.subr.mxu0 0.0
        %2686 = vmatpush2.msra.mxu0 0.0
        %2687 = vmatprep.subr.mxu0 0.0
        %2688 = vmatpush2.msra.mxu0 0.0
        %2689 = vmatprep.mubr.f32.mxu0 0.0
        %2690 = vmatmul.mubr.f32.gmra.mxu0 %v2521
        %v2691 = vpop.f32.mrf.mxu0
        %v2692 = vadd.f32 %v2622, %v2691
        %v2693 = vpop.f32.mrf.mxu0
        %2694 = vdwg.mxu0
        %v2695 = vld [vmem:[#allocation2 + $0x2] sm:$0x1]
        %v2696 = vld [vmem:[%s1568] sm:$0xff]
        %v2697 = vld [vmem:[%s1568 + $0x8] sm:$0xff]
        %v2698 = vld [vmem:[%s1568 + $0x10] sm:$0xff]
        %v2699 = vld [vmem:[%s1568 + $0x18] sm:$0xff]
        %v2700 = vld [vmem:[%s1568 + $0x20] sm:$0xff]
        %v2701 = vld [vmem:[%s1568 + $0x28] sm:$0xff]
        %v2702 = vld [vmem:[%s1568 + $0x30] sm:$0xff]
        %v2703 = vld [vmem:[%s1568 + $0x38] sm:$0xff]
        %v2704 = vld [vmem:[%s1568 + $0x40] sm:$0xff]
        %v2705 = vld [vmem:[%s1568 + $0x48] sm:$0xff]
        %v2706 = vld [vmem:[%s1568 + $0x50] sm:$0xff]
        %v2707 = vld [vmem:[%s1568 + $0x58] sm:$0xff]
        %v2708 = vld [vmem:[%s1568 + $0x60] sm:$0xff]
        %v2709 = vld [vmem:[%s1568 + $0x68] sm:$0xff]
        %v2710 = vld [vmem:[%s1568 + $0x70] sm:$0xff]
        %v2711 = vld [vmem:[%s1568 + $0x78] sm:$0xff]
        %2712 = vmatprep.subr.mxu0 0.0
        %2713 = vmatpush1.msra.mxu0 %v2711
        %2714 = vmatprep.subr.mxu0 0.0
        %2715 = vmatpush1.msra.mxu0 %v2710
        %2716 = vmatprep.subr.mxu0 0.0
        %2717 = vmatpush1.msra.mxu0 %v2709
        %2718 = vmatprep.subr.mxu0 0.0
        %2719 = vmatpush1.msra.mxu0 %v2708
        %2720 = vmatprep.subr.mxu0 0.0
        %2721 = vmatpush1.msra.mxu0 %v2707
        %2722 = vmatprep.subr.mxu0 0.0
        %2723 = vmatpush1.msra.mxu0 %v2706
        %2724 = vmatprep.subr.mxu0 0.0
        %2725 = vmatpush1.msra.mxu0 %v2705
        %2726 = vmatprep.subr.mxu0 0.0
        %2727 = vmatpush1.msra.mxu0 %v2704
        %2728 = vmatprep.subr.mxu0 0.0
        %2729 = vmatpush1.msra.mxu0 %v2703
        %2730 = vmatprep.subr.mxu0 0.0
        %2731 = vmatpush1.msra.mxu0 %v2702
        %2732 = vmatprep.subr.mxu0 0.0
        %2733 = vmatpush1.msra.mxu0 %v2701
        %2734 = vmatprep.subr.mxu0 0.0
        %2735 = vmatpush1.msra.mxu0 %v2700
        %2736 = vmatprep.subr.mxu0 0.0
        %2737 = vmatpush1.msra.mxu0 %v2699
        %2738 = vmatprep.subr.mxu0 0.0
        %2739 = vmatpush1.msra.mxu0 %v2698
        %2740 = vmatprep.subr.mxu0 0.0
        %2741 = vmatpush1.msra.mxu0 %v2697
        %2742 = vmatprep.subr.mxu0 0.0
        %2743 = vmatpush1.msra.mxu0 %v2696
        %2744 = vmatprep.subr.mxu0 0.0
        %2745 = vmatpush2.msra.mxu0 0.0
        %2746 = vmatprep.subr.mxu0 0.0
        %2747 = vmatpush2.msra.mxu0 0.0
        %2748 = vmatprep.subr.mxu0 0.0
        %2749 = vmatpush2.msra.mxu0 0.0
        %2750 = vmatprep.subr.mxu0 0.0
        %2751 = vmatpush2.msra.mxu0 0.0
        %2752 = vmatprep.subr.mxu0 0.0
        %2753 = vmatpush2.msra.mxu0 0.0
        %2754 = vmatprep.subr.mxu0 0.0
        %2755 = vmatpush2.msra.mxu0 0.0
        %2756 = vmatprep.subr.mxu0 0.0
        %2757 = vmatpush2.msra.mxu0 0.0
        %2758 = vmatprep.subr.mxu0 0.0
        %2759 = vmatpush2.msra.mxu0 0.0
        %2760 = vmatprep.subr.mxu0 0.0
        %2761 = vmatpush2.msra.mxu0 0.0
        %2762 = vmatprep.subr.mxu0 0.0
        %2763 = vmatpush2.msra.mxu0 0.0
        %2764 = vmatprep.subr.mxu0 0.0
        %2765 = vmatpush2.msra.mxu0 0.0
        %2766 = vmatprep.subr.mxu0 0.0
        %2767 = vmatpush2.msra.mxu0 0.0
        %2768 = vmatprep.subr.mxu0 0.0
        %2769 = vmatpush2.msra.mxu0 0.0
        %2770 = vmatprep.subr.mxu0 0.0
        %2771 = vmatpush2.msra.mxu0 0.0
        %2772 = vmatprep.subr.mxu0 0.0
        %2773 = vmatpush2.msra.mxu0 0.0
        %2774 = vmatprep.subr.mxu0 0.0
        %2775 = vmatpush2.msra.mxu0 0.0
        %2776 = vmatprep.mubr.f32.mxu0 0.0
        %2777 = vmatmul.mubr.f32.gmra.mxu0 %v2695
        %v2778 = vpop.f32.mrf.mxu0
        %v2779 = vadd.f32 0.0, %v2778
        %v2780 = vpop.f32.mrf.mxu0
        %2781 = vdwg.mxu0
        %v2782 = vadd.f32 %v2692, %v2779
        %v2783 = vld [vmem:[%s2 + $0xc] sm:$0x1]
        %v2784 = vadd.f32 %v2782, %v2783
        %v2785 = vadd.f32 %v2243, %v2784
        %2786 = vst [vmem:[%s162] sm:$0x1] %v2785
        %s2787 = sand.u32 %s93, 1
        %s2788 = scalar_lea.sflag [#allocation4], %s2787
        %s2789 = sand.u32 %s93, 1
        %s2790 = scalar_lea.vmem [#allocation3], %s2789
        // Predicated region
        $region33: #{dpcnn_forward.1} parent=31 // pred_check
          %p2791 = pneg %p103
        $region34: #{dpcnn_forward.1} parent=31 // pred_check_branch
          %2793 = sbr.rel (%p2791) target = $region36
        $region35: #{dpcnn_forward.1} parent=31 // pred_region
          %s2795 = ssub.s32 16, 16
          %2796 = vsyncadd %s2788, %s2795
          %s2797 = smul.addr %s17, 16
          %s2798 = scalar_lea.hbm %s3, %s2797
          %s2800 = sshll.u32 %s2790, 4
          %s2801 = int_to_ptr.vmem [resolvable:$true] %s2800
          %2803 = dma.vmem_to_hbm [thread:$0]  %s2801, 16, %s2798, %s2788
        $region36: #{dpcnn_forward.1} parent=31 // pred_fallthru
          _
      $region32: #{dpcnn_forward.1} parent=5 // pred_fallthru
        _
      %p2804 = scmp.le.s32.totalorder 2, %s12
      // Predicated region
      $region37: #{dpcnn_forward.1} parent=5 // pred_check
        %p2805 = pneg %p2804
      $region38: #{dpcnn_forward.1} parent=5 // pred_check_branch
        %2807 = sbr.rel (%p2805) target = $region40
      $region39: #{dpcnn_forward.1} parent=5 // pred_region
        %s2808 = ssub.s32 %s12, 2
        // Predicated region
        $region41: #{dpcnn_forward.1} parent=39 // pred_check
          %p2809 = pneg %p109
        $region42: #{dpcnn_forward.1} parent=39 // pred_check_branch
          %2811 = sbr.rel (%p2809) target = $region44
        $region43: #{dpcnn_forward.1} parent=39 // pred_region
          %s2812 = sand.u32 %s94, 1
          %s2813 = scalar_lea.sflag [#allocation4], %s2812
          %s2814 = sand.u32 %s94, 1
          %s2815 = scalar_lea.vmem [#allocation3], %s2814
          %2816 = dma.done %s2813, 16
        $region44: #{dpcnn_forward.1} parent=39 // pred_fallthru
          _
      $region40: #{dpcnn_forward.1} parent=5 // pred_fallthru
        _
    $region6: #{dpcnn_forward.1} parent=1 // loop_footer
      %s16 = sadd.s32 1, %s12
    $region7: #{dpcnn_forward.1} parent=1 // loop_footer_branch
      %11 = sbr.rel target = $region3
    $region8: #{dpcnn_forward.1} parent=1 // loop_exit
      _
    %2817 = vsyncpa [#allocation4], 1
    %s2818 = scalar_lea.sflag [#allocation4], 1
    %2819 = vsyncpa %s2818, 1

</llo_original>
